<compile_context>
chip_gen: v7x
topology: tpu7x:2x2x1
jax: 0.10.0
libtpu: 0.0.40
codegen_flags: <defaults>
</compile_context>

<pallas_src>
import functools

import numpy as np
import jax
import jax.numpy as jnp
from jax.experimental import pallas as pl
from jax.experimental.pallas import tpu as pltpu

NEG_SLOPE = 0.01                 # nn.LeakyReLU default negative_slope
BN_EPS = 1e-5

# ---------------- model config (small but consistent with the module) -------
BATCH = 2
N_FRAMES, HEIGHT, WIDTH, N_CHANNEL = 16, 16, 16, 3       # input_shape (T,H,W,C)
HS = (4, 8, 16, 32)                                       # hidden_shape
HIDDEN_DIM = 32
LATENT_DIM = 16
FLAT_DIM = HS[3] * N_FRAMES * HEIGHT * WIDTH // (16 ** 3)  # = 32

LANE_TILE = 512                  # >=2 grid steps on the big layers (v7x)
VMEM_LIMIT = 32 * 1024 * 1024


# ================== fused matmul + bias + activation Pallas kernel ==========
def _conv_mm_kernel(w_ref, x_ref, b_ref, o_ref, *, act):
    """out[rows, ts] = act(W[rows, K] @ col[K, ts] + b[rows, 1])."""
    acc = jnp.dot(w_ref[...], x_ref[...], preferred_element_type=jnp.float32)
    acc = acc + b_ref[...]
    if act == "leaky_relu":
        acc = jnp.maximum(acc, NEG_SLOPE * acc)
    elif act == "sigmoid":
        # numerically stable, exact (final model output)
        e = jnp.exp(-jnp.abs(acc))
        acc = jnp.where(acc >= 0.0, 1.0 / (1.0 + e), e / (1.0 + e))
    o_ref[...] = acc.astype(o_ref.dtype)


def conv_matmul(w_mat, col, b2, *, act, out_dtype):
    """w_mat: [R, K] bf16, col: [K, S] bf16 (S = N*spatial on lanes),
       b2: [R, 1] f32  ->  act(w_mat @ col + b2): [R, S]."""
    R, K = w_mat.shape
    K2, S = col.shape
    assert K == K2
    ts = S if S <= LANE_TILE else LANE_TILE
    assert S % ts == 0
    return pl.pallas_call(
        functools.partial(_conv_mm_kernel, act=act),
        out_shape=jax.ShapeDtypeStruct((R, S), out_dtype),
        grid_spec=pltpu.PrefetchScalarGridSpec(
            num_scalar_prefetch=0,
            grid=(S // ts,),
            in_specs=[
                pl.BlockSpec((R, K), lambda j: (0, 0)),     # resident weight
                pl.BlockSpec((K, ts), lambda j: (0, j)),
                pl.BlockSpec((R, 1), lambda j: (0, 0)),
            ],
            out_specs=pl.BlockSpec((R, ts), lambda j: (0, j)),
        ),
        compiler_params=pltpu.CompilerParams(
            dimension_semantics=("parallel",),
            vmem_limit_bytes=VMEM_LIMIT),
    )(w_mat, col, b2)


# ================== encoder conv (stride-2, k=4, p=1) ========================
def encoder_conv(x, w_mat, b2, *, act="leaky_relu"):
    """x: [Cin, N, T, H, W] bf16 -> [Cout, N, T/2, H/2, W/2] bf16."""
    Cin, N, T, H, W = x.shape
    To, Ho, Wo = T // 2, H // 2, W // 2
    xp = jnp.pad(x, ((0, 0), (0, 0), (1, 1), (1, 1), (1, 1)))
    taps = []
    for kt in range(4):
        for kh in range(4):
            for kw in range(4):
                taps.append(xp[:, :,
                               kt:kt + 2 * To - 1:2,
                               kh:kh + 2 * Ho - 1:2,
                               kw:kw + 2 * Wo - 1:2])
    col = jnp.concatenate(taps, axis=0).reshape(64 * Cin, N * To * Ho * Wo)
    out = conv_matmul(w_mat, col, b2, act=act, out_dtype=jnp.bfloat16)
    Cout = w_mat.shape[0]
    return out.reshape(Cout, N, To, Ho, Wo)


# ================== decoder conv-transpose (phase-folded) ====================
def decoder_convt(x, w_all, b_all, *, act, out_dtype, batch_major=False):
    """x: [Cin, N, I, I, I]; w_all: [8*Cout, 27*Cin] (phase-folded);
       -> [Cout, N, 2I, 2I, 2I] (or [N, Cout, ...] if batch_major)."""
    Cin, N, I = x.shape[0], x.shape[1], x.shape[2]
    Cout = w_all.shape[0] // 8
    xp = jnp.pad(x, ((0, 0), (0, 0), (1, 1), (1, 1), (1, 1)))
    taps = []
    for ot in range(3):
        for oh in range(3):
            for ow in range(3):
                taps.append(xp[:, :, ot:ot + I, oh:oh + I, ow:ow + I])
    col = jnp.concatenate(taps, axis=0).reshape(27 * Cin, N * I * I * I)
    out = conv_matmul(w_all, col, b_all, act=act, out_dtype=out_dtype)
    out = out.reshape(2, 2, 2, Cout, N, I, I, I)
    if batch_major:
        out = out.transpose(4, 3, 5, 0, 6, 1, 7, 2)
        return out.reshape(N, Cout, 2 * I, 2 * I, 2 * I)
    out = out.transpose(3, 4, 5, 0, 6, 1, 7, 2)
    return out.reshape(Cout, N, 2 * I, 2 * I, 2 * I)


# ================== fused core kernel (enc2, enc3, 4 Linears, dec0, dec1) ====
def _core_kernel(x_ref,
                 we2_ref, be2_ref, we3_ref, be3_ref,
                 wel_ref, bel_ref, wfc_ref, bfc_ref,
                 wd1_ref, bd1_ref, wd2_ref, bd2_ref,
                 wc0_ref, bc0_ref, wc1_ref, bc1_ref,
                 lat_ref, y_ref):
    def leaky(v):
        return jnp.maximum(v, NEG_SLOPE * v)

    def lin(h, w_ref, b_ref):
        return jnp.dot(h.astype(jnp.bfloat16), w_ref[...],
                       preferred_element_type=jnp.float32) + b_ref[...]

    h = leaky(lin(x_ref[...], we2_ref, be2_ref))   # enc_conv2 (dense) + LeakyReLU
    h = leaky(lin(h, we3_ref, be3_ref))            # enc_conv3 (dense) + LeakyReLU
    h = leaky(lin(h, wel_ref, bel_ref))            # enc Linear + LeakyReLU
    lat = lin(h, wfc_ref, bfc_ref)                 # enc fc -> latent
    lat_ref[...] = lat
    g = leaky(lin(lat, wd1_ref, bd1_ref))          # dec Linear1 (+BN folded) + LeakyReLU
    g = leaky(lin(g, wd2_ref, bd2_ref))            # dec Linear2 + LeakyReLU
    g = leaky(lin(g, wc0_ref, bc0_ref))            # dec ConvT0 (dense) + LeakyReLU
    g = leaky(lin(g, wc1_ref, bc1_ref))            # dec ConvT1 (dense) + LeakyReLU
    y_ref[...] = g.astype(y_ref.dtype)


def core_mlp(x, core_params):
    """x: [N, 512] bf16 -> (latent [N, 16] f32, y [N, 512] bf16)."""
    N = x.shape[0]
    return pl.pallas_call(
        _core_kernel,
        out_shape=(jax.ShapeDtypeStruct((N, LATENT_DIM), jnp.float32),
                   jax.ShapeDtypeStruct((N, HS[1] * 64), jnp.bfloat16)),
    )(x, *core_params)


# ================== parameter preparation (host-side, outside jit) ===========
def _conv3d_dense(w, b, *, in_sp, stride, pad):
    """PyTorch Conv3d (w [Cout,Cin,k,k,k]) on a tiny input, as a dense matrix
    over (c,t,h,w)-flattened vectors.  Returns (M [out_dim,in_dim], b[out_dim])."""
    w = np.asarray(w, np.float32)
    b = np.asarray(b, np.float32)
    Cout, Cin, k = w.shape[0], w.shape[1], w.shape[2]
    osp = (in_sp + 2 * pad - k) // stride + 1
    M = np.zeros((Cout * osp ** 3, Cin * in_sp ** 3), np.float32)
    co = np.arange(Cout)[:, None] * osp ** 3
    ci = np.arange(Cin)[None, :] * in_sp ** 3
    for ot in range(osp):
        for oh in range(osp):
            for ow in range(osp):
                oidx = (ot * osp + oh) * osp + ow
                for kt in range(k):
                    it = ot * stride - pad + kt
                    if it < 0 or it >= in_sp:
                        continue
                    for kh in range(k):
                        ih = oh * stride - pad + kh
                        if ih < 0 or ih >= in_sp:
                            continue
                        for kw in range(k):
                            iw = ow * stride - pad + kw
                            if iw < 0 or iw >= in_sp:
                                continue
                            iidx = (it * in_sp + ih) * in_sp + iw
                            M[co + oidx, ci + iidx] += w[:, :, kt, kh, kw]
    return M, np.repeat(b, osp ** 3)


def _convtrans3d_dense(w, b, *, in_sp, stride, pad):
    """PyTorch ConvTranspose3d (w [Cin,Cout,k,k,k]) on a tiny input, as a
    dense matrix over (c,t,h,w)-flattened vectors."""
    w = np.asarray(w, np.float32)
    b = np.asarray(b, np.float32)
    Cin, Cout, k = w.shape[0], w.shape[1], w.shape[2]
    osp = (in_sp - 1) * stride - 2 * pad + k
    M = np.zeros((Cout * osp ** 3, Cin * in_sp ** 3), np.float32)
    co = np.arange(Cout)[:, None] * osp ** 3
    ci = np.arange(Cin)[None, :] * in_sp ** 3
    for it in range(in_sp):
        for ih in range(in_sp):
            for iw in range(in_sp):
                iidx = (it * in_sp + ih) * in_sp + iw
                for kt in range(k):
                    ot = it * stride - pad + kt
                    if ot < 0 or ot >= osp:
                        continue
                    for kh in range(k):
                        oh = ih * stride - pad + kh
                        if oh < 0 or oh >= osp:
                            continue
                        for kw in range(k):
                            ow = iw * stride - pad + kw
                            if ow < 0 or ow >= osp:
                                continue
                            oidx = (ot * osp + oh) * osp + ow
                            M[co + oidx, ci + iidx] += w[:, :, kt, kh, kw].T
    return M, np.repeat(b, osp ** 3)


def _convtrans_phase_folded(w, b):
    """ConvTranspose3d(k=4, s=2, p=1) as a single matmul over a shared
    27-offset col.  out row = phase*Cout + cout; col = offset*Cin + cin.
    Per dim: out[2q+p] = sum_{d in {0,1}} xpad[q+p+d] * w[3-p-2d]."""
    w = np.asarray(w, np.float32)
    b = np.asarray(b, np.float32)
    Cin, Cout = w.shape[0], w.shape[1]
    W = np.zeros((2, 2, 2, Cout, 3, 3, 3, Cin), np.float32)
    for pt in range(2):
        for ph in range(2):
            for pw in range(2):
                for dt in range(2):
                    for dh in range(2):
                        for dw in range(2):
                            kt, kh, kw = 3 - pt - 2 * dt, 3 - ph - 2 * dh, 3 - pw - 2 * dw
                            W[pt, ph, pw, :, pt + dt, ph + dh, pw + dw, :] = \
                                w[:, :, kt, kh, kw].T
    return W.reshape(8 * Cout, 27 * Cin), np.tile(b, 8)


def prepare_params(p):
    """All weight preprocessing hoisted out of the jitted forward."""
    prep = {}

    # encoder convs 0, 1 -> matmul weights [Cout, 64*Cin] (tap major, cin minor)
    for i, name in ((0, "e0"), (1, "e1")):
        w = np.asarray(p[f"enc_conv{i}_w"], np.float32)
        b = np.asarray(p[f"enc_conv{i}_b"], np.float32)
        Cout = w.shape[0]
        wm = w.transpose(0, 2, 3, 4, 1).reshape(Cout, -1)
        prep[f"{name}_w"] = jnp.asarray(wm, jnp.bfloat16)
        prep[f"{name}_b"] = jnp.asarray(b.reshape(Cout, 1), jnp.float32)

    # decoder conv-transposes 2, 3 -> phase-folded [8*Cout, 27*Cin]
    for i, name in ((2, "d2"), (3, "d3")):
        Wall, ball = _convtrans_phase_folded(p[f"dec_conv{i}_w"],
                                             p[f"dec_conv{i}_b"])
        prep[f"{name}_w"] = jnp.asarray(Wall, jnp.bfloat16)
        prep[f"{name}_b"] = jnp.asarray(ball.reshape(-1, 1), jnp.float32)

    # tiny layers -> dense linear maps fused into the core kernel
    e2_M, e2_b = _conv3d_dense(p["enc_conv2_w"], p["enc_conv2_b"],
                               in_sp=4, stride=2, pad=1)          # [128, 512]
    e3_M, e3_b = _conv3d_dense(p["enc_conv3_w"], p["enc_conv3_b"],
                               in_sp=2, stride=2, pad=1)          # [32, 128]
    c0_M, c0_b = _convtrans3d_dense(p["dec_conv0_w"], p["dec_conv0_b"],
                                    in_sp=1, stride=2, pad=1)     # [128, 32]
    c1_M, c1_b = _convtrans3d_dense(p["dec_conv1_w"], p["dec_conv1_b"],
                                    in_sp=2, stride=2, pad=1)     # [512, 128]

    # BatchNorm1d (eval) folded into dec Linear1
    s = np.asarray(p["bn_gamma"], np.float32) / np.sqrt(
        np.asarray(p["bn_var"], np.float32) + BN_EPS)
    wd1 = np.asarray(p["dec_lin1_w"], np.float32) * s[None, :]
    bd1 = (np.asarray(p["dec_lin1_b"], np.float32)
           - np.asarray(p["bn_mean"], np.float32)) * s \
        + np.asarray(p["bn_beta"], np.float32)

    def wb(w_in_out, bvec):
        return [jnp.asarray(np.asarray(w_in_out, np.float32), jnp.bfloat16),
                jnp.asarray(np.asarray(bvec, np.float32).reshape(1, -1),
                            jnp.float32)]

    core = []
    core += wb(e2_M.T, e2_b)                                   # enc_conv2
    core += wb(e3_M.T, e3_b)                                   # enc_conv3
    core += wb(p["enc_lin_w"], p["enc_lin_b"])                 # enc Linear
    core += wb(p["enc_fc_w"], p["enc_fc_b"])                   # enc fc
    core += wb(wd1, bd1)                                       # dec Linear1 + BN
    core += wb(p["dec_lin2_w"], p["dec_lin2_b"])               # dec Linear2
    core += wb(c0_M.T, c0_b)                                   # dec ConvT0
    core += wb(c1_M.T, c1_b)                                   # dec ConvT1
    prep["core"] = tuple(core)
    return prep


# ================== parameters (deterministic synthetic init) ================
def _kaiming(key, shape, fan_in):
    gain = (2.0 / (1.0 + NEG_SLOPE ** 2)) ** 0.5
    return (gain / fan_in ** 0.5) * jax.random.normal(key, shape, dtype=jnp.float32)


def init_params(key):
    keys = jax.random.split(key, 16)
    p = {}
    k = 4
    enc_ch = (N_CHANNEL,) + HS
    for i in range(4):
        cin, cout = enc_ch[i], enc_ch[i + 1]
        p[f"enc_conv{i}_w"] = _kaiming(keys[i], (cout, cin, k, k, k), cin * k ** 3)
        p[f"enc_conv{i}_b"] = jnp.zeros((cout,), jnp.float32)
    p["enc_lin_w"] = _kaiming(keys[4], (FLAT_DIM, HIDDEN_DIM), FLAT_DIM)
    p["enc_lin_b"] = jnp.zeros((HIDDEN_DIM,), jnp.float32)
    p["enc_fc_w"] = _kaiming(keys[5], (HIDDEN_DIM, LATENT_DIM), HIDDEN_DIM)
    p["enc_fc_b"] = jnp.zeros((LATENT_DIM,), jnp.float32)
    p["dec_lin1_w"] = _kaiming(keys[6], (LATENT_DIM, HIDDEN_DIM), LATENT_DIM)
    p["dec_lin1_b"] = jnp.zeros((HIDDEN_DIM,), jnp.float32)
    p["bn_gamma"] = jnp.ones((HIDDEN_DIM,), jnp.float32)
    p["bn_beta"] = jnp.zeros((HIDDEN_DIM,), jnp.float32)
    p["bn_mean"] = jnp.zeros((HIDDEN_DIM,), jnp.float32)
    p["bn_var"] = jnp.ones((HIDDEN_DIM,), jnp.float32)
    p["dec_lin2_w"] = _kaiming(keys[7], (HIDDEN_DIM, FLAT_DIM), HIDDEN_DIM)
    p["dec_lin2_b"] = jnp.zeros((FLAT_DIM,), jnp.float32)
    dec_ch = (HS[3], HS[2], HS[1], HS[0], N_CHANNEL)
    for i in range(4):
        cin, cout = dec_ch[i], dec_ch[i + 1]
        p[f"dec_conv{i}_w"] = _kaiming(keys[8 + i], (cin, cout, k, k, k), cin * k ** 3)
        p[f"dec_conv{i}_b"] = jnp.zeros((cout,), jnp.float32)
    return p


# ================== full forward pass =========================================
def video_autoencoder_forward(prep, video):
    n = video.shape[0]
    # ----- encoder convs 0, 1 (bf16, channels-major layout [C, N, T, H, W])
    x = video.astype(jnp.bfloat16).transpose(1, 0, 2, 3, 4)       # [3, N, 16^3]
    x = encoder_conv(x, prep["e0_w"], prep["e0_b"])               # [4, N, 8^3]
    x = encoder_conv(x, prep["e1_w"], prep["e1_b"])               # [8, N, 4^3]

    # ----- fused core: enc_conv2, enc_conv3, Flatten/Dropout(id), Linear,
    #       fc, dec Linear1(+BN), dec Linear2, Reshape, dec ConvT0, dec ConvT1
    x = x.reshape(HS[1], n, 64).transpose(1, 0, 2).reshape(n, HS[1] * 64)
    latent, y = core_mlp(x, prep["core"])                         # [N,16], [N,512]

    # ----- decoder conv-transposes 2, 3 (phase-folded)
    y = y.reshape(n, HS[1], 64).transpose(1, 0, 2).reshape(HS[1], n, 4, 4, 4)
    y = decoder_convt(y, prep["d2_w"], prep["d2_b"],
                      act="leaky_relu", out_dtype=jnp.bfloat16)   # [4, N, 8^3]
    y = decoder_convt(y, prep["d3_w"], prep["d3_b"],
                      act="sigmoid", out_dtype=jnp.float32,
                      batch_major=True)                           # [N, 3, 16^3]
    return y, latent


if __name__ == "__main__":
    key = jax.random.PRNGKey(0)
    pkey, xkey = jax.random.split(key)
    params = init_params(pkey)
    prep = prepare_params(params)          # hoisted weight prep (not jitted)
    video = jax.random.uniform(
        xkey, (BATCH, N_CHANNEL, N_FRAMES, HEIGHT, WIDTH), dtype=jnp.float32)

    fwd = jax.jit(video_autoencoder_forward)
    decoded, encoded = fwd(prep, video)
    jax.block_until_ready((decoded, encoded))

    assert decoded.shape == (BATCH, N_CHANNEL, N_FRAMES, HEIGHT, WIDTH), decoded.shape
    assert encoded.shape == (BATCH, LATENT_DIM), encoded.shape
    assert decoded.dtype == jnp.float32 and encoded.dtype == jnp.float32
    print("KERNEL_OK")
</pallas_src>

<mosaic_0001>
module attributes {stable_mosaic.version = 11 : i64} {
  func.func @_conv_mm_kernel(%arg0: i32, %arg1: memref<4x192xbf16, #tpu.memory_space<vmem>>, %arg2: memref<192x512xbf16, #tpu.memory_space<vmem>>, %arg3: memref<4x1xf32, #tpu.memory_space<vmem>>, %arg4: memref<4x512xbf16, #tpu.memory_space<vmem>>) attributes {dimension_semantics = [#tpu.dimension_semantics<parallel>], iteration_bounds = array<i64: 2>, scalar_prefetch = 0 : i64, scratch_operands = 0 : i64, tpu.core_type = #tpu.core_type<tc>, window_params = [{pipeline_mode = #tpu.pipeline_mode<synchronous>, transform_indices = @transform_0, window_bounds = array<i64: 4, 192>}, {transform_indices = @transform_1, window_bounds = array<i64: 192, 512>}, {pipeline_mode = #tpu.pipeline_mode<synchronous>, transform_indices = @transform_2, window_bounds = array<i64: 4, 1>}, {transform_indices = @transform_3, window_bounds = array<i64: 4, 512>}]} {
    %c0 = arith.constant 0 : index
    %c0_0 = arith.constant 0 : index
    %0 = vector.load %arg1[%c0, %c0_0] : memref<4x192xbf16, #tpu.memory_space<vmem>>, vector<4x192xbf16>
    %c0_1 = arith.constant 0 : index
    %c0_2 = arith.constant 0 : index
    %1 = vector.load %arg2[%c0_1, %c0_2] : memref<192x512xbf16, #tpu.memory_space<vmem>>, vector<192x512xbf16>
    %cst = arith.constant dense<0.000000e+00> : vector<4x512xf32>
    %2 = tpu.matmul %0, %1, %cst {dimension_numbers = #tpu.dot_dimension_numbers<[1], [0], [0], [1], [0, 0, 1, 1], [], []>} : vector<4x192xbf16>, vector<192x512xbf16>, vector<4x512xf32> -> vector<4x512xf32>
    %c0_3 = arith.constant 0 : index
    %c0_4 = arith.constant 0 : index
    %3 = vector.load %arg3[%c0_3, %c0_4] : memref<4x1xf32, #tpu.memory_space<vmem>>, vector<4x1xf32>
    %4 = vector.broadcast %3 : vector<4x1xf32> to vector<4x512xf32>
    %5 = arith.addf %2, %4 : vector<4x512xf32>
    %cst_5 = arith.constant 0.00999999977 : f32
    %6 = vector.broadcast %cst_5 : f32 to vector<4x512xf32>
    %7 = arith.mulf %6, %5 : vector<4x512xf32>
    %8 = arith.maximumf %5, %7 : vector<4x512xf32>
    %9 = arith.truncf %8 : vector<4x512xf32> to vector<4x512xbf16>
    %c0_6 = arith.constant 0 : index
    %c0_7 = arith.constant 0 : index
    %10 = vector.load %arg4[%c0_6, %c0_7] : memref<4x512xbf16, #tpu.memory_space<vmem>>, vector<4x512xbf16>
    tpu.vector_store %arg4[%c0_6, %c0_7], %9 {strides = array<i32>} : memref<4x512xbf16, #tpu.memory_space<vmem>>, vector<4x512xbf16>,
    return
  }
  func.func @transform_0(%arg0: i32) -> (i32, i32) {
    %c0_i32 = arith.constant 0 : i32
    %c0_i32_0 = arith.constant 0 : i32
    %c0_i32_1 = arith.constant 0 : i32
    return %c0_i32, %c0_i32_0 : i32, i32
  }
  func.func @transform_1(%arg0: i32) -> (i32, i32) {
    %c0_i32 = arith.constant 0 : i32
    %c0_i32_0 = arith.constant 0 : i32
    return %c0_i32, %arg0 : i32, i32
  }
  func.func @transform_2(%arg0: i32) -> (i32, i32) {
    %c0_i32 = arith.constant 0 : i32
    %c0_i32_0 = arith.constant 0 : i32
    %c0_i32_1 = arith.constant 0 : i32
    return %c0_i32, %c0_i32_0 : i32, i32
  }
  func.func @transform_3(%arg0: i32) -> (i32, i32) {
    %c0_i32 = arith.constant 0 : i32
    %c0_i32_0 = arith.constant 0 : i32
    return %c0_i32, %arg0 : i32, i32
  }
}

module attributes {stable_mosaic.version = 11 : i64} {
  func.func @_conv_mm_kernel(%arg0: i32, %arg1: memref<8x256xbf16, #tpu.memory_space<vmem>>, %arg2: memref<256x128xbf16, #tpu.memory_space<vmem>>, %arg3: memref<8x1xf32, #tpu.memory_space<vmem>>, %arg4: memref<8x128xbf16, #tpu.memory_space<vmem>>) attributes {dimension_semantics = [#tpu.dimension_semantics<parallel>], iteration_bounds = array<i64: 1>, scalar_prefetch = 0 : i64, scratch_operands = 0 : i64, tpu.core_type = #tpu.core_type<tc>, window_params = [{pipeline_mode = #tpu.pipeline_mode<synchronous>, transform_indices = @transform_0, window_bounds = array<i64: 8, 256>}, {transform_indices = @transform_1, window_bounds = array<i64: 256, 128>}, {pipeline_mode = #tpu.pipeline_mode<synchronous>, transform_indices = @transform_2, window_bounds = array<i64: 8, 1>}, {transform_indices = @transform_3, window_bounds = array<i64: 8, 128>}]} {
    %c0 = arith.constant 0 : index
    %c0_0 = arith.constant 0 : index
    %0 = vector.load %arg1[%c0, %c0_0] : memref<8x256xbf16, #tpu.memory_space<vmem>>, vector<8x256xbf16>
    %c0_1 = arith.constant 0 : index
    %c0_2 = arith.constant 0 : index
    %1 = vector.load %arg2[%c0_1, %c0_2] : memref<256x128xbf16, #tpu.memory_space<vmem>>, vector<256x128xbf16>
    %cst = arith.constant dense<0.000000e+00> : vector<8x128xf32>
    %2 = tpu.matmul %0, %1, %cst {dimension_numbers = #tpu.dot_dimension_numbers<[1], [0], [0], [1], [0, 0, 1, 1], [], []>} : vector<8x256xbf16>, vector<256x128xbf16>, vector<8x128xf32> -> vector<8x128xf32>
    %c0_3 = arith.constant 0 : index
    %c0_4 = arith.constant 0 : index
    %3 = vector.load %arg3[%c0_3, %c0_4] : memref<8x1xf32, #tpu.memory_space<vmem>>, vector<8x1xf32>
    %4 = vector.broadcast %3 : vector<8x1xf32> to vector<8x128xf32>
    %5 = arith.addf %2, %4 : vector<8x128xf32>
    %cst_5 = arith.constant 0.00999999977 : f32
    %6 = vector.broadcast %cst_5 : f32 to vector<8x128xf32>
    %7 = arith.mulf %6, %5 : vector<8x128xf32>
    %8 = arith.maximumf %5, %7 : vector<8x128xf32>
    %9 = arith.truncf %8 : vector<8x128xf32> to vector<8x128xbf16>
    %c0_6 = arith.constant 0 : index
    %c0_7 = arith.constant 0 : index
    %10 = vector.load %arg4[%c0_6, %c0_7] : memref<8x128xbf16, #tpu.memory_space<vmem>>, vector<8x128xbf16>
    tpu.vector_store %arg4[%c0_6, %c0_7], %9 {strides = array<i32>} : memref<8x128xbf16, #tpu.memory_space<vmem>>, vector<8x128xbf16>,
    return
  }
  func.func @transform_0(%arg0: i32) -> (i32, i32) {
    %c0_i32 = arith.constant 0 : i32
    %c0_i32_0 = arith.constant 0 : i32
    %c0_i32_1 = arith.constant 0 : i32
    return %c0_i32, %c0_i32_0 : i32, i32
  }
  func.func @transform_1(%arg0: i32) -> (i32, i32) {
    %c0_i32 = arith.constant 0 : i32
    %c0_i32_0 = arith.constant 0 : i32
    return %c0_i32, %arg0 : i32, i32
  }
  func.func @transform_2(%arg0: i32) -> (i32, i32) {
    %c0_i32 = arith.constant 0 : i32
    %c0_i32_0 = arith.constant 0 : i32
    %c0_i32_1 = arith.constant 0 : i32
    return %c0_i32, %c0_i32_0 : i32, i32
  }
  func.func @transform_3(%arg0: i32) -> (i32, i32) {
    %c0_i32 = arith.constant 0 : i32
    %c0_i32_0 = arith.constant 0 : i32
    return %c0_i32, %arg0 : i32, i32
  }
}

module attributes {stable_mosaic.version = 11 : i64} {
  func.func @_core_kernel(%arg0: memref<2x512xbf16, #tpu.memory_space<vmem>>, %arg1: memref<512x128xbf16, #tpu.memory_space<vmem>>, %arg2: memref<1x128xf32, #tpu.memory_space<vmem>>, %arg3: memref<128x32xbf16, #tpu.memory_space<vmem>>, %arg4: memref<1x32xf32, #tpu.memory_space<vmem>>, %arg5: memref<32x32xbf16, #tpu.memory_space<vmem>>, %arg6: memref<1x32xf32, #tpu.memory_space<vmem>>, %arg7: memref<32x16xbf16, #tpu.memory_space<vmem>>, %arg8: memref<1x16xf32, #tpu.memory_space<vmem>>, %arg9: memref<16x32xbf16, #tpu.memory_space<vmem>>, %arg10: memref<1x32xf32, #tpu.memory_space<vmem>>, %arg11: memref<32x32xbf16, #tpu.memory_space<vmem>>, %arg12: memref<1x32xf32, #tpu.memory_space<vmem>>, %arg13: memref<32x128xbf16, #tpu.memory_space<vmem>>, %arg14: memref<1x128xf32, #tpu.memory_space<vmem>>, %arg15: memref<128x512xbf16, #tpu.memory_space<vmem>>, %arg16: memref<1x512xf32, #tpu.memory_space<vmem>>, %arg17: memref<2x16xf32, #tpu.memory_space<vmem>>, %arg18: memref<2x512xbf16, #tpu.memory_space<vmem>>) attributes {dimension_semantics = [], scalar_prefetch = 0 : i64, scratch_operands = 0 : i64, tpu.core_type = #tpu.core_type<tc>} {
    %c0 = arith.constant 0 : index
    %c0_0 = arith.constant 0 : index
    %0 = vector.load %arg0[%c0, %c0_0] : memref<2x512xbf16, #tpu.memory_space<vmem>>, vector<2x512xbf16>
    %c0_1 = arith.constant 0 : index
    %c0_2 = arith.constant 0 : index
    %1 = vector.load %arg1[%c0_1, %c0_2] : memref<512x128xbf16, #tpu.memory_space<vmem>>, vector<512x128xbf16>
    %cst = arith.constant dense<0.000000e+00> : vector<2x128xf32>
    %2 = tpu.matmul %0, %1, %cst {dimension_numbers = #tpu.dot_dimension_numbers<[1], [0], [0], [1], [0, 0, 1, 1], [], []>} : vector<2x512xbf16>, vector<512x128xbf16>, vector<2x128xf32> -> vector<2x128xf32>
    %c0_3 = arith.constant 0 : index
    %c0_4 = arith.constant 0 : index
    %3 = vector.load %arg2[%c0_3, %c0_4] : memref<1x128xf32, #tpu.memory_space<vmem>>, vector<1x128xf32>
    %4 = vector.broadcast %3 : vector<1x128xf32> to vector<2x128xf32>
    %5 = arith.addf %2, %4 : vector<2x128xf32>
    %cst_5 = arith.constant 0.00999999977 : f32
    %6 = vector.broadcast %cst_5 : f32 to vector<2x128xf32>
    %7 = arith.mulf %6, %5 : vector<2x128xf32>
    %8 = arith.maximumf %5, %7 : vector<2x128xf32>
    %9 = arith.truncf %8 : vector<2x128xf32> to vector<2x128xbf16>
    %c0_6 = arith.constant 0 : index
    %c0_7 = arith.constant 0 : index
    %10 = vector.load %arg3[%c0_6, %c0_7] : memref<128x32xbf16, #tpu.memory_space<vmem>>, vector<128x32xbf16>
    %cst_8 = arith.constant dense<0.000000e+00> : vector<2x32xf32>
    %11 = tpu.matmul %9, %10, %cst_8 {dimension_numbers = #tpu.dot_dimension_numbers<[1], [0], [0], [1], [0, 0, 1, 1], [], []>} : vector<2x128xbf16>, vector<128x32xbf16>, vector<2x32xf32> -> vector<2x32xf32>
    %c0_9 = arith.constant 0 : index
    %c0_10 = arith.constant 0 : index
    %12 = vector.load %arg4[%c0_9, %c0_10] : memref<1x32xf32, #tpu.memory_space<vmem>>, vector<1x32xf32>
    %13 = vector.broadcast %12 : vector<1x32xf32> to vector<2x32xf32>
    %14 = arith.addf %11, %13 : vector<2x32xf32>
    %cst_11 = arith.constant 0.00999999977 : f32
    %15 = vector.broadcast %cst_11 : f32 to vector<2x32xf32>
    %16 = arith.mulf %15, %14 : vector<2x32xf32>
    %17 = arith.maximumf %14, %16 : vector<2x32xf32>
    %18 = arith.truncf %17 : vector<2x32xf32> to vector<2x32xbf16>
    %c0_12 = arith.constant 0 : index
    %c0_13 = arith.constant 0 : index
    %19 = vector.load %arg5[%c0_12, %c0_13] : memref<32x32xbf16, #tpu.memory_space<vmem>>, vector<32x32xbf16>
    %cst_14 = arith.constant dense<0.000000e+00> : vector<2x32xf32>
    %20 = tpu.matmul %18, %19, %cst_14 {dimension_numbers = #tpu.dot_dimension_numbers<[1], [0], [0], [1], [0, 0, 1, 1], [], []>} : vector<2x32xbf16>, vector<32x32xbf16>, vector<2x32xf32> -> vector<2x32xf32>
    %c0_15 = arith.constant 0 : index
    %c0_16 = arith.constant 0 : index
    %21 = vector.load %arg6[%c0_15, %c0_16] : memref<1x32xf32, #tpu.memory_space<vmem>>, vector<1x32xf32>
    %22 = vector.broadcast %21 : vector<1x32xf32> to vector<2x32xf32>
    %23 = arith.addf %20, %22 : vector<2x32xf32>
    %cst_17 = arith.constant 0.00999999977 : f32
    %24 = vector.broadcast %cst_17 : f32 to vector<2x32xf32>
    %25 = arith.mulf %24, %23 : vector<2x32xf32>
    %26 = arith.maximumf %23, %25 : vector<2x32xf32>
    %27 = arith.truncf %26 : vector<2x32xf32> to vector<2x32xbf16>
    %c0_18 = arith.constant 0 : index
    %c0_19 = arith.constant 0 : index
    %28 = vector.load %arg7[%c0_18, %c0_19] : memref<32x16xbf16, #tpu.memory_space<vmem>>, vector<32x16xbf16>
    %cst_20 = arith.constant dense<0.000000e+00> : vector<2x16xf32>
    %29 = tpu.matmul %27, %28, %cst_20 {dimension_numbers = #tpu.dot_dimension_numbers<[1], [0], [0], [1], [0, 0, 1, 1], [], []>} : vector<2x32xbf16>, vector<32x16xbf16>, vector<2x16xf32> -> vector<2x16xf32>
    %c0_21 = arith.constant 0 : index
    %c0_22 = arith.constant 0 : index
    %30 = vector.load %arg8[%c0_21, %c0_22] : memref<1x16xf32, #tpu.memory_space<vmem>>, vector<1x16xf32>
    %31 = vector.broadcast %30 : vector<1x16xf32> to vector<2x16xf32>
    %32 = arith.addf %29, %31 : vector<2x16xf32>
    %c0_23 = arith.constant 0 : index
    %c0_24 = arith.constant 0 : index
    %33 = vector.load %arg17[%c0_23, %c0_24] : memref<2x16xf32, #tpu.memory_space<vmem>>, vector<2x16xf32>
    tpu.vector_store %arg17[%c0_23, %c0_24], %32 {strides = array<i32>} : memref<2x16xf32, #tpu.memory_space<vmem>>, vector<2x16xf32>,
    %34 = arith.truncf %32 : vector<2x16xf32> to vector<2x16xbf16>
    %c0_25 = arith.constant 0 : index
    %c0_26 = arith.constant 0 : index
    %35 = vector.load %arg9[%c0_25, %c0_26] : memref<16x32xbf16, #tpu.memory_space<vmem>>, vector<16x32xbf16>
    %cst_27 = arith.constant dense<0.000000e+00> : vector<2x32xf32>
    %36 = tpu.matmul %34, %35, %cst_27 {dimension_numbers = #tpu.dot_dimension_numbers<[1], [0], [0], [1], [0, 0, 1, 1], [], []>} : vector<2x16xbf16>, vector<16x32xbf16>, vector<2x32xf32> -> vector<2x32xf32>
    %c0_28 = arith.constant 0 : index
    %c0_29 = arith.constant 0 : index
    %37 = vector.load %arg10[%c0_28, %c0_29] : memref<1x32xf32, #tpu.memory_space<vmem>>, vector<1x32xf32>
    %38 = vector.broadcast %37 : vector<1x32xf32> to vector<2x32xf32>
    %39 = arith.addf %36, %38 : vector<2x32xf32>
    %cst_30 = arith.constant 0.00999999977 : f32
    %40 = vector.broadcast %cst_30 : f32 to vector<2x32xf32>
    %41 = arith.mulf %40, %39 : vector<2x32xf32>
    %42 = arith.maximumf %39, %41 : vector<2x32xf32>
    %43 = arith.truncf %42 : vector<2x32xf32> to vector<2x32xbf16>
    %c0_31 = arith.constant 0 : index
    %c0_32 = arith.constant 0 : index
    %44 = vector.load %arg11[%c0_31, %c0_32] : memref<32x32xbf16, #tpu.memory_space<vmem>>, vector<32x32xbf16>
    %cst_33 = arith.constant dense<0.000000e+00> : vector<2x32xf32>
    %45 = tpu.matmul %43, %44, %cst_33 {dimension_numbers = #tpu.dot_dimension_numbers<[1], [0], [0], [1], [0, 0, 1, 1], [], []>} : vector<2x32xbf16>, vector<32x32xbf16>, vector<2x32xf32> -> vector<2x32xf32>
    %c0_34 = arith.constant 0 : index
    %c0_35 = arith.constant 0 : index
    %46 = vector.load %arg12[%c0_34, %c0_35] : memref<1x32xf32, #tpu.memory_space<vmem>>, vector<1x32xf32>
    %47 = vector.broadcast %46 : vector<1x32xf32> to vector<2x32xf32>
    %48 = arith.addf %45, %47 : vector<2x32xf32>
    %cst_36 = arith.constant 0.00999999977 : f32
    %49 = vector.broadcast %cst_36 : f32 to vector<2x32xf32>
    %50 = arith.mulf %49, %48 : vector<2x32xf32>
    %51 = arith.maximumf %48, %50 : vector<2x32xf32>
    %52 = arith.truncf %51 : vector<2x32xf32> to vector<2x32xbf16>
    %c0_37 = arith.constant 0 : index
    %c0_38 = arith.constant 0 : index
    %53 = vector.load %arg13[%c0_37, %c0_38] : memref<32x128xbf16, #tpu.memory_space<vmem>>, vector<32x128xbf16>
    %cst_39 = arith.constant dense<0.000000e+00> : vector<2x128xf32>
    %54 = tpu.matmul %52, %53, %cst_39 {dimension_numbers = #tpu.dot_dimension_numbers<[1], [0], [0], [1], [0, 0, 1, 1], [], []>} : vector<2x32xbf16>, vector<32x128xbf16>, vector<2x128xf32> -> vector<2x128xf32>
    %c0_40 = arith.constant 0 : index
    %c0_41 = arith.constant 0 : index
    %55 = vector.load %arg14[%c0_40, %c0_41] : memref<1x128xf32, #tpu.memory_space<vmem>>, vector<1x128xf32>
    %56 = vector.broadcast %55 : vector<1x128xf32> to vector<2x128xf32>
    %57 = arith.addf %54, %56 : vector<2x128xf32>
    %cst_42 = arith.constant 0.00999999977 : f32
    %58 = vector.broadcast %cst_42 : f32 to vector<2x128xf32>
    %59 = arith.mulf %58, %57 : vector<2x128xf32>
    %60 = arith.maximumf %57, %59 : vector<2x128xf32>
    %61 = arith.truncf %60 : vector<2x128xf32> to vector<2x128xbf16>
    %c0_43 = arith.constant 0 : index
    %c0_44 = arith.constant 0 : index
    %62 = vector.load %arg15[%c0_43, %c0_44] : memref<128x512xbf16, #tpu.memory_space<vmem>>, vector<128x512xbf16>
    %cst_45 = arith.constant dense<0.000000e+00> : vector<2x512xf32>
    %63 = tpu.matmul %61, %62, %cst_45 {dimension_numbers = #tpu.dot_dimension_numbers<[1], [0], [0], [1], [0, 0, 1, 1], [], []>} : vector<2x128xbf16>, vector<128x512xbf16>, vector<2x512xf32> -> vector<2x512xf32>
    %c0_46 = arith.constant 0 : index
    %c0_47 = arith.constant 0 : index
    %64 = vector.load %arg16[%c0_46, %c0_47] : memref<1x512xf32, #tpu.memory_space<vmem>>, vector<1x512xf32>
    %65 = vector.broadcast %64 : vector<1x512xf32> to vector<2x512xf32>
    %66 = arith.addf %63, %65 : vector<2x512xf32>
    %cst_48 = arith.constant 0.00999999977 : f32
    %67 = vector.broadcast %cst_48 : f32 to vector<2x512xf32>
    %68 = arith.mulf %67, %66 : vector<2x512xf32>
    %69 = arith.maximumf %66, %68 : vector<2x512xf32>
    %70 = arith.truncf %69 : vector<2x512xf32> to vector<2x512xbf16>
    %c0_49 = arith.constant 0 : index
    %c0_50 = arith.constant 0 : index
    %71 = vector.load %arg18[%c0_49, %c0_50] : memref<2x512xbf16, #tpu.memory_space<vmem>>, vector<2x512xbf16>
    tpu.vector_store %arg18[%c0_49, %c0_50], %70 {strides = array<i32>} : memref<2x512xbf16, #tpu.memory_space<vmem>>, vector<2x512xbf16>,
    return
  }
}

module attributes {stable_mosaic.version = 11 : i64} {
  func.func @_conv_mm_kernel(%arg0: i32, %arg1: memref<32x216xbf16, #tpu.memory_space<vmem>>, %arg2: memref<216x128xbf16, #tpu.memory_space<vmem>>, %arg3: memref<32x1xf32, #tpu.memory_space<vmem>>, %arg4: memref<32x128xbf16, #tpu.memory_space<vmem>>) attributes {dimension_semantics = [#tpu.dimension_semantics<parallel>], iteration_bounds = array<i64: 1>, scalar_prefetch = 0 : i64, scratch_operands = 0 : i64, tpu.core_type = #tpu.core_type<tc>, window_params = [{pipeline_mode = #tpu.pipeline_mode<synchronous>, transform_indices = @transform_0, window_bounds = array<i64: 32, 216>}, {transform_indices = @transform_1, window_bounds = array<i64: 216, 128>}, {pipeline_mode = #tpu.pipeline_mode<synchronous>, transform_indices = @transform_2, window_bounds = array<i64: 32, 1>}, {transform_indices = @transform_3, window_bounds = array<i64: 32, 128>}]} {
    %c0 = arith.constant 0 : index
    %c0_0 = arith.constant 0 : index
    %0 = vector.load %arg1[%c0, %c0_0] : memref<32x216xbf16, #tpu.memory_space<vmem>>, vector<32x216xbf16>
    %c0_1 = arith.constant 0 : index
    %c0_2 = arith.constant 0 : index
    %1 = vector.load %arg2[%c0_1, %c0_2] : memref<216x128xbf16, #tpu.memory_space<vmem>>, vector<216x128xbf16>
    %cst = arith.constant dense<0.000000e+00> : vector<32x128xf32>
    %2 = tpu.matmul %0, %1, %cst {dimension_numbers = #tpu.dot_dimension_numbers<[1], [0], [0], [1], [0, 0, 1, 1], [], []>} : vector<32x216xbf16>, vector<216x128xbf16>, vector<32x128xf32> -> vector<32x128xf32>
    %c0_3 = arith.constant 0 : index
    %c0_4 = arith.constant 0 : index
    %3 = vector.load %arg3[%c0_3, %c0_4] : memref<32x1xf32, #tpu.memory_space<vmem>>, vector<32x1xf32>
    %4 = vector.broadcast %3 : vector<32x1xf32> to vector<32x128xf32>
    %5 = arith.addf %2, %4 : vector<32x128xf32>
    %cst_5 = arith.constant 0.00999999977 : f32
    %6 = vector.broadcast %cst_5 : f32 to vector<32x128xf32>
    %7 = arith.mulf %6, %5 : vector<32x128xf32>
    %8 = arith.maximumf %5, %7 : vector<32x128xf32>
    %9 = arith.truncf %8 : vector<32x128xf32> to vector<32x128xbf16>
    %c0_6 = arith.constant 0 : index
    %c0_7 = arith.constant 0 : index
    %10 = vector.load %arg4[%c0_6, %c0_7] : memref<32x128xbf16, #tpu.memory_space<vmem>>, vector<32x128xbf16>
    tpu.vector_store %arg4[%c0_6, %c0_7], %9 {strides = array<i32>} : memref<32x128xbf16, #tpu.memory_space<vmem>>, vector<32x128xbf16>,
    return
  }
  func.func @transform_0(%arg0: i32) -> (i32, i32) {
    %c0_i32 = arith.constant 0 : i32
    %c0_i32_0 = arith.constant 0 : i32
    %c0_i32_1 = arith.constant 0 : i32
    return %c0_i32, %c0_i32_0 : i32, i32
  }
  func.func @transform_1(%arg0: i32) -> (i32, i32) {
    %c0_i32 = arith.constant 0 : i32
    %c0_i32_0 = arith.constant 0 : i32
    return %c0_i32, %arg0 : i32, i32
  }
  func.func @transform_2(%arg0: i32) -> (i32, i32) {
    %c0_i32 = arith.constant 0 : i32
    %c0_i32_0 = arith.constant 0 : i32
    %c0_i32_1 = arith.constant 0 : i32
    return %c0_i32, %c0_i32_0 : i32, i32
  }
  func.func @transform_3(%arg0: i32) -> (i32, i32) {
    %c0_i32 = arith.constant 0 : i32
    %c0_i32_0 = arith.constant 0 : i32
    return %c0_i32, %arg0 : i32, i32
  }
}

module attributes {stable_mosaic.version = 11 : i64} {
  func.func @_conv_mm_kernel(%arg0: i32, %arg1: memref<24x108xbf16, #tpu.memory_space<vmem>>, %arg2: memref<108x512xbf16, #tpu.memory_space<vmem>>, %arg3: memref<24x1xf32, #tpu.memory_space<vmem>>, %arg4: memref<24x512xf32, #tpu.memory_space<vmem>>) attributes {dimension_semantics = [#tpu.dimension_semantics<parallel>], iteration_bounds = array<i64: 2>, scalar_prefetch = 0 : i64, scratch_operands = 0 : i64, tpu.core_type = #tpu.core_type<tc>, window_params = [{pipeline_mode = #tpu.pipeline_mode<synchronous>, transform_indices = @transform_0, window_bounds = array<i64: 24, 108>}, {transform_indices = @transform_1, window_bounds = array<i64: 108, 512>}, {pipeline_mode = #tpu.pipeline_mode<synchronous>, transform_indices = @transform_2, window_bounds = array<i64: 24, 1>}, {transform_indices = @transform_3, window_bounds = array<i64: 24, 512>}]} {
    %c0 = arith.constant 0 : index
    %c0_0 = arith.constant 0 : index
    %0 = vector.load %arg1[%c0, %c0_0] : memref<24x108xbf16, #tpu.memory_space<vmem>>, vector<24x108xbf16>
    %c0_1 = arith.constant 0 : index
    %c0_2 = arith.constant 0 : index
    %1 = vector.load %arg2[%c0_1, %c0_2] : memref<108x512xbf16, #tpu.memory_space<vmem>>, vector<108x512xbf16>
    %cst = arith.constant dense<0.000000e+00> : vector<24x512xf32>
    %2 = tpu.matmul %0, %1, %cst {dimension_numbers = #tpu.dot_dimension_numbers<[1], [0], [0], [1], [0, 0, 1, 1], [], []>} : vector<24x108xbf16>, vector<108x512xbf16>, vector<24x512xf32> -> vector<24x512xf32>
    %c0_3 = arith.constant 0 : index
    %c0_4 = arith.constant 0 : index
    %3 = vector.load %arg3[%c0_3, %c0_4] : memref<24x1xf32, #tpu.memory_space<vmem>>, vector<24x1xf32>
    %4 = vector.broadcast %3 : vector<24x1xf32> to vector<24x512xf32>
    %5 = arith.addf %2, %4 : vector<24x512xf32>
    %6 = math.absf %5 : vector<24x512xf32>
    %cst_5 = arith.constant 0.000000e+00 : f32
    %7 = vector.broadcast %cst_5 : f32 to vector<24x512xf32>
    %8 = arith.subf %7, %6 : vector<24x512xf32>
    %9 = math.exp %8 : vector<24x512xf32>
    %cst_6 = arith.constant 0.000000e+00 : f32
    %10 = vector.broadcast %cst_6 : f32 to vector<24x512xf32>
    %11 = arith.cmpf oge, %5, %10 : vector<24x512xf32>
    %cst_7 = arith.constant 1.000000e+00 : f32
    %12 = vector.broadcast %cst_7 : f32 to vector<24x512xf32>
    %13 = arith.addf %12, %9 : vector<24x512xf32>
    %cst_8 = arith.constant 1.000000e+00 : f32
    %14 = vector.broadcast %cst_8 : f32 to vector<24x512xf32>
    %15 = arith.divf %14, %13 : vector<24x512xf32>
    %cst_9 = arith.constant 1.000000e+00 : f32
    %16 = vector.broadcast %cst_9 : f32 to vector<24x512xf32>
    %17 = arith.addf %16, %9 : vector<24x512xf32>
    %18 = arith.divf %9, %17 : vector<24x512xf32>
    %19 = arith.select %11, %15, %18 : vector<24x512xi1>, vector<24x512xf32>
    %c0_10 = arith.constant 0 : index
    %c0_11 = arith.constant 0 : index
    %20 = vector.load %arg4[%c0_10, %c0_11] : memref<24x512xf32, #tpu.memory_space<vmem>>, vector<24x512xf32>
    tpu.vector_store %arg4[%c0_10, %c0_11], %19 {strides = array<i32>} : memref<24x512xf32, #tpu.memory_space<vmem>>, vector<24x512xf32>,
    return
  }
  func.func @transform_0(%arg0: i32) -> (i32, i32) {
    %c0_i32 = arith.constant 0 : i32
    %c0_i32_0 = arith.constant 0 : i32
    %c0_i32_1 = arith.constant 0 : i32
    return %c0_i32, %c0_i32_0 : i32, i32
  }
  func.func @transform_1(%arg0: i32) -> (i32, i32) {
    %c0_i32 = arith.constant 0 : i32
    %c0_i32_0 = arith.constant 0 : i32
    return %c0_i32, %arg0 : i32, i32
  }
  func.func @transform_2(%arg0: i32) -> (i32, i32) {
    %c0_i32 = arith.constant 0 : i32
    %c0_i32_0 = arith.constant 0 : i32
    %c0_i32_1 = arith.constant 0 : i32
    return %c0_i32, %c0_i32_0 : i32, i32
  }
  func.func @transform_3(%arg0: i32) -> (i32, i32) {
    %c0_i32 = arith.constant 0 : i32
    %c0_i32_0 = arith.constant 0 : i32
    return %c0_i32, %arg0 : i32, i32
  }
}

</mosaic_0001>

<llo_original>
// kernel: video_autoencoder_forward.5
$region0: #{video_autoencoder_forward.5}
  #allocation0 [shape = 'u32[]', space=smem, size = 0x4, offset = 0x4, fixed_abs, tag = 'smem constant byte address 0x4 - core index']
  #allocation1 [shape = 'u32[144,128]{1,0:T(1,128)}', space=vmem, size = 0x12000, scoped, tag = 'internal scratch']
  %s0 = inlined_call_operand.vmem [shape: bf16[4,192], index: 0, kind: input, shape index: {}]
  %s1 = inlined_call_operand.vmem [shape: bf16[192,1024], index: 1, kind: input, shape index: {}]
  %s2 = inlined_call_operand.vmem [shape: f32[4,1], index: 2, kind: input, shape index: {}]
  %s3 = inlined_call_operand.vmem [shape: bf16[4,1024], index: 3, kind: output, shape index: {}]
  %s4 = sld [smem:[#allocation0]]
  $region68: #{video_autoencoder_forward.5} parent=0
    _
  %s6 = ssub.s32 1, %s4
  %s7 = scalar_select 0, %s6, %s4
  $region1: #{video_autoencoder_forward.5} parent=0
    #allocation2 [shape = 'u8[393216]{0}', space=vmem, size = 0x60000, scoped, tag = 'input window, operand 1']
    loop: start=0, step=1, limit=4
    $region2: #{video_autoencoder_forward.5} parent=1 // loop_pre_header
      _
    $region3: #{video_autoencoder_forward.5} parent=1 // loop_header
      %s9 = sphi 0, %s13
      %p10 = scmp.ge.s32.totalorder %s9, 4
      %s17 = sphi 0, %s17
      %s19 = sphi 0, %s17
      %s20 = sphi 0, %s19
      %s34 = sphi 0, %s20
      %s40 = sphi 0, %s42
      %s43 = sphi 0, %s40
      %s44 = sphi 0, %s43
      %s60 = sphi 0, %s44
      %s64 = sphi 0, %s64
      %s66 = sphi 0, %s64
      %s67 = sphi 0, %s66
      %s81 = sphi 0, %s67
      %s87 = sphi 0, %s89
      %s90 = sphi 0, %s87
      %s91 = sphi 0, %s90
      %s107 = sphi 0, %s91
    $region4: #{video_autoencoder_forward.5} parent=1 // loop_header_branch
      %12 = sbr.rel (%p10) target = $region8
    $region5: #{video_autoencoder_forward.5} parent=1 // loop_body
      %s14 = ssub.s32 %s9, 1
      %s15 = ssub.s32 %s9, 2
      %s16 = sadd.s32 %s9, 1
      %s18 = sadd.s32 %s17, 1
      %p21 = scmp.eq.s32.totalorder %s9, 1
      %p22 = scmp.ne.s32.totalorder %s17, %s19
      %p23 = scmp.eq.s32.totalorder %s9, 0
      %p24 = por %p22, %p23
      %p25 = scmp.ne.s32.totalorder %s17, %s19
      %p26 = scmp.eq.s32.totalorder %s14, 1
      %p27 = por %p25, %p26
      %p28 = scmp.ne.s32.totalorder %s19, %s20
      %p29 = scmp.eq.s32.totalorder %s14, 0
      %p30 = por %p28, %p29
      %p31 = scmp.ne.s32.totalorder %s19, %s20
      %p32 = scmp.eq.s32.totalorder %s15, 1
      %p33 = por %p31, %p32
      %p35 = scmp.ne.s32.totalorder %s20, %s34
      %p36 = scmp.eq.s32.totalorder %s15, 0
      %p37 = por %p35, %p36
      %s38 = ssub.s32 %s9, %s16
      %p39 = scmp.eq.s32.totalorder %s38, 0
      %s41 = sadd.s32 %s40, 1
      %s42 = scalar_select %p39, %s40, %s41
      %p45 = pneg %p39
      %p46 = scmp.eq.s32.totalorder %s9, 1
      %p47 = por %p45, %p46
      %p48 = scmp.ne.s32.totalorder %s40, %s43
      %p49 = scmp.eq.s32.totalorder %s9, 0
      %p50 = por %p48, %p49
      %p51 = scmp.ne.s32.totalorder %s40, %s43
      %p52 = scmp.eq.s32.totalorder %s14, 1
      %p53 = por %p51, %p52
      %p54 = scmp.ne.s32.totalorder %s43, %s44
      %p55 = scmp.eq.s32.totalorder %s14, 0
      %p56 = por %p54, %p55
      %p57 = scmp.ne.s32.totalorder %s43, %s44
      %p58 = scmp.eq.s32.totalorder %s15, 1
      %p59 = por %p57, %p58
      %p61 = scmp.ne.s32.totalorder %s44, %s60
      %p62 = scmp.eq.s32.totalorder %s15, 0
      %p63 = por %p61, %p62
      %s65 = sadd.s32 %s64, 1
      %p68 = scmp.eq.s32.totalorder %s9, 1
      %p69 = scmp.ne.s32.totalorder %s64, %s66
      %p70 = scmp.eq.s32.totalorder %s9, 0
      %p71 = por %p69, %p70
      %p72 = scmp.ne.s32.totalorder %s64, %s66
      %p73 = scmp.eq.s32.totalorder %s14, 1
      %p74 = por %p72, %p73
      %p75 = scmp.ne.s32.totalorder %s66, %s67
      %p76 = scmp.eq.s32.totalorder %s14, 0
      %p77 = por %p75, %p76
      %p78 = scmp.ne.s32.totalorder %s66, %s67
      %p79 = scmp.eq.s32.totalorder %s15, 1
      %p80 = por %p78, %p79
      %p82 = scmp.ne.s32.totalorder %s67, %s81
      %p83 = scmp.eq.s32.totalorder %s15, 0
      %p84 = por %p82, %p83
      %s85 = ssub.s32 %s9, %s16
      %p86 = scmp.eq.s32.totalorder %s85, 0
      %s88 = sadd.s32 %s87, 1
      %s89 = scalar_select %p86, %s87, %s88
      %p92 = pneg %p86
      %p93 = scmp.eq.s32.totalorder %s9, 1
      %p94 = por %p92, %p93
      %p95 = scmp.ne.s32.totalorder %s87, %s90
      %p96 = scmp.eq.s32.totalorder %s9, 0
      %p97 = por %p95, %p96
      %p98 = scmp.ne.s32.totalorder %s87, %s90
      %p99 = scmp.eq.s32.totalorder %s14, 1
      %p100 = por %p98, %p99
      %p101 = scmp.ne.s32.totalorder %s90, %s91
      %p102 = scmp.eq.s32.totalorder %s14, 0
      %p103 = por %p101, %p102
      %p104 = scmp.ne.s32.totalorder %s90, %s91
      %p105 = scmp.eq.s32.totalorder %s15, 1
      %p106 = por %p104, %p105
      %p108 = scmp.ne.s32.totalorder %s91, %s107
      %p109 = scmp.eq.s32.totalorder %s15, 0
      %p110 = por %p108, %p109
      %p111 = scmp.le.s32.totalorder 1, %s9
      %p112 = scmp.lt.s32.totalorder %s9, 3
      %p113 = pnand %p111, %p112
      %p114 = pneg %p113
      // Predicated region
      $region9: #{video_autoencoder_forward.5} parent=5 // pred_check
        _
      $region10: #{video_autoencoder_forward.5} parent=5 // pred_check_branch
        %116 = sbr.rel (%p113) target = $region12
      $region11: #{video_autoencoder_forward.5} parent=5 // pred_region
        %s117 = ssub.s32 %s9, 1
        // Predicated region
        $region13: #{video_autoencoder_forward.5} parent=11 // pred_check
          %p118 = pneg %p30
        $region14: #{video_autoencoder_forward.5} parent=11 // pred_check_branch
          %120 = sbr.rel (%p118) target = $region16
        $region15: #{video_autoencoder_forward.5} parent=11 // pred_region
          _
        $region16: #{video_autoencoder_forward.5} parent=11 // pred_fallthru
          _
        // Predicated region
        $region17: #{video_autoencoder_forward.5} parent=11 // pred_check
          %p121 = pneg %p77
        $region18: #{video_autoencoder_forward.5} parent=11 // pred_check_branch
          %123 = sbr.rel (%p121) target = $region20
        $region19: #{video_autoencoder_forward.5} parent=11 // pred_region
          _
        $region20: #{video_autoencoder_forward.5} parent=11 // pred_fallthru
          _
      $region12: #{video_autoencoder_forward.5} parent=5 // pred_fallthru
        _
      %p124 = scmp.lt.s32.totalorder %s9, 2
      // Predicated region
      $region21: #{video_autoencoder_forward.5} parent=5 // pred_check
        %p125 = pneg %p124
      $region22: #{video_autoencoder_forward.5} parent=5 // pred_check_branch
        %127 = sbr.rel (%p125) target = $region24
      $region23: #{video_autoencoder_forward.5} parent=5 // pred_region
        // Predicated region
        $region25: #{video_autoencoder_forward.5} parent=23 // pred_check
          %p128 = pneg %p50
        $region26: #{video_autoencoder_forward.5} parent=23 // pred_check_branch
          %130 = sbr.rel (%p128) target = $region28
        $region27: #{video_autoencoder_forward.5} parent=23 // pred_region
          %s131 = sand.u32 %s40, 1
          %s132 = sand.u32 %s40, 1
          %s133 = smul.addr %s132, 384
          %s134 = scalar_lea.vmem [#allocation2], %s133
          %s135 = smul.u32 4, %s9
          %s136 = smul.addr %s135, 4
          %s137 = scalar_lea.vmem %s1, %s136
          // Predicated region
          $region29: #{video_autoencoder_forward.5} parent=27 // pred_check
            _
          $region30: #{video_autoencoder_forward.5} parent=27 // pred_check_branch
            %139 = sbr.rel (0) target = $region32
          $region31: #{video_autoencoder_forward.5} parent=27 // pred_region
            // Predicated region
            $region33: #{video_autoencoder_forward.5} parent=31 // pred_check
              _
            $region34: #{video_autoencoder_forward.5} parent=31 // pred_check_branch
              %141 = sbr.rel (0) target = $region36
            $region35: #{video_autoencoder_forward.5} parent=31 // pred_region
              loop: start=0, step=1, limit=1
              $region37: #{video_autoencoder_forward.5} parent=35 // loop_pre_header
                _
              $region38: #{video_autoencoder_forward.5} parent=35 // loop_header
                %s143 = sphi 0, %s147
                %p144 = scmp.ge.s32.totalorder %s143, 1
                %s148 = sphi %s137, %s137
                %s149 = sphi %s134, %s134
              $region39: #{video_autoencoder_forward.5} parent=35 // loop_header_branch
                %146 = sbr.rel (%p144) target = $region43
              $region40: #{video_autoencoder_forward.5} parent=35 // loop_body
                %v150 = vld [vmem:[%s148] sm:$0xff]
                %151 = vst [vmem:[%s149] sm:$0xff] %v150
                %v152 = vld [vmem:[%s148 + $0x8] sm:$0xff]
                %153 = vst [vmem:[%s149 + $0x8] sm:$0xff] %v152
                %v154 = vld [vmem:[%s148 + $0x20] sm:$0xff]
                %155 = vst [vmem:[%s149 + $0x10] sm:$0xff] %v154
                %v156 = vld [vmem:[%s148 + $0x28] sm:$0xff]
                %157 = vst [vmem:[%s149 + $0x18] sm:$0xff] %v156
                %v158 = vld [vmem:[%s148 + $0x40] sm:$0xff]
                %159 = vst [vmem:[%s149 + $0x20] sm:$0xff] %v158
                %v160 = vld [vmem:[%s148 + $0x48] sm:$0xff]
                %161 = vst [vmem:[%s149 + $0x28] sm:$0xff] %v160
                %v162 = vld [vmem:[%s148 + $0x60] sm:$0xff]
                %163 = vst [vmem:[%s149 + $0x30] sm:$0xff] %v162
                %v164 = vld [vmem:[%s148 + $0x68] sm:$0xff]
                %165 = vst [vmem:[%s149 + $0x38] sm:$0xff] %v164
                %v166 = vld [vmem:[%s148 + $0x80] sm:$0xff]
                %167 = vst [vmem:[%s149 + $0x40] sm:$0xff] %v166
                %v168 = vld [vmem:[%s148 + $0x88] sm:$0xff]
                %169 = vst [vmem:[%s149 + $0x48] sm:$0xff] %v168
                %v170 = vld [vmem:[%s148 + $0xa0] sm:$0xff]
                %171 = vst [vmem:[%s149 + $0x50] sm:$0xff] %v170
                %v172 = vld [vmem:[%s148 + $0xa8] sm:$0xff]
                %173 = vst [vmem:[%s149 + $0x58] sm:$0xff] %v172
                %v174 = vld [vmem:[%s148 + $0xc0] sm:$0xff]
                %175 = vst [vmem:[%s149 + $0x60] sm:$0xff] %v174
                %v176 = vld [vmem:[%s148 + $0xc8] sm:$0xff]
                %177 = vst [vmem:[%s149 + $0x68] sm:$0xff] %v176
                %v178 = vld [vmem:[%s148 + $0xe0] sm:$0xff]
                %179 = vst [vmem:[%s149 + $0x70] sm:$0xff] %v178
                %v180 = vld [vmem:[%s148 + $0xe8] sm:$0xff]
                %181 = vst [vmem:[%s149 + $0x78] sm:$0xff] %v180
                %v182 = vld [vmem:[%s148 + $0x100] sm:$0xff]
                %183 = vst [vmem:[%s149 + $0x80] sm:$0xff] %v182
                %v184 = vld [vmem:[%s148 + $0x108] sm:$0xff]
                %185 = vst [vmem:[%s149 + $0x88] sm:$0xff] %v184
                %v186 = vld [vmem:[%s148 + $0x120] sm:$0xff]
                %187 = vst [vmem:[%s149 + $0x90] sm:$0xff] %v186
                %v188 = vld [vmem:[%s148 + $0x128] sm:$0xff]
                %189 = vst [vmem:[%s149 + $0x98] sm:$0xff] %v188
                %v190 = vld [vmem:[%s148 + $0x140] sm:$0xff]
                %191 = vst [vmem:[%s149 + $0xa0] sm:$0xff] %v190
                %v192 = vld [vmem:[%s148 + $0x148] sm:$0xff]
                %193 = vst [vmem:[%s149 + $0xa8] sm:$0xff] %v192
                %v194 = vld [vmem:[%s148 + $0x160] sm:$0xff]
                %195 = vst [vmem:[%s149 + $0xb0] sm:$0xff] %v194
                %v196 = vld [vmem:[%s148 + $0x168] sm:$0xff]
                %197 = vst [vmem:[%s149 + $0xb8] sm:$0xff] %v196
                %v198 = vld [vmem:[%s148 + $0x180] sm:$0xff]
                %199 = vst [vmem:[%s149 + $0xc0] sm:$0xff] %v198
                %v200 = vld [vmem:[%s148 + $0x188] sm:$0xff]
                %201 = vst [vmem:[%s149 + $0xc8] sm:$0xff] %v200
                %v202 = vld [vmem:[%s148 + $0x1a0] sm:$0xff]
                %203 = vst [vmem:[%s149 + $0xd0] sm:$0xff] %v202
                %v204 = vld [vmem:[%s148 + $0x1a8] sm:$0xff]
                %205 = vst [vmem:[%s149 + $0xd8] sm:$0xff] %v204
                %v206 = vld [vmem:[%s148 + $0x1c0] sm:$0xff]
                %207 = vst [vmem:[%s149 + $0xe0] sm:$0xff] %v206
                %v208 = vld [vmem:[%s148 + $0x1c8] sm:$0xff]
                %209 = vst [vmem:[%s149 + $0xe8] sm:$0xff] %v208
                %v210 = vld [vmem:[%s148 + $0x1e0] sm:$0xff]
                %211 = vst [vmem:[%s149 + $0xf0] sm:$0xff] %v210
                %v212 = vld [vmem:[%s148 + $0x1e8] sm:$0xff]
                %213 = vst [vmem:[%s149 + $0xf8] sm:$0xff] %v212
                %v214 = vld [vmem:[%s148 + $0x200] sm:$0xff]
                %215 = vst [vmem:[%s149 + $0x100] sm:$0xff] %v214
                %v216 = vld [vmem:[%s148 + $0x208] sm:$0xff]
                %217 = vst [vmem:[%s149 + $0x108] sm:$0xff] %v216
                %v218 = vld [vmem:[%s148 + $0x220] sm:$0xff]
                %219 = vst [vmem:[%s149 + $0x110] sm:$0xff] %v218
                %v220 = vld [vmem:[%s148 + $0x228] sm:$0xff]
                %221 = vst [vmem:[%s149 + $0x118] sm:$0xff] %v220
                %v222 = vld [vmem:[%s148 + $0x240] sm:$0xff]
                %223 = vst [vmem:[%s149 + $0x120] sm:$0xff] %v222
                %v224 = vld [vmem:[%s148 + $0x248] sm:$0xff]
                %225 = vst [vmem:[%s149 + $0x128] sm:$0xff] %v224
                %v226 = vld [vmem:[%s148 + $0x260] sm:$0xff]
                %227 = vst [vmem:[%s149 + $0x130] sm:$0xff] %v226
                %v228 = vld [vmem:[%s148 + $0x268] sm:$0xff]
                %229 = vst [vmem:[%s149 + $0x138] sm:$0xff] %v228
                %v230 = vld [vmem:[%s148 + $0x280] sm:$0xff]
                %231 = vst [vmem:[%s149 + $0x140] sm:$0xff] %v230
                %v232 = vld [vmem:[%s148 + $0x288] sm:$0xff]
                %233 = vst [vmem:[%s149 + $0x148] sm:$0xff] %v232
                %v234 = vld [vmem:[%s148 + $0x2a0] sm:$0xff]
                %235 = vst [vmem:[%s149 + $0x150] sm:$0xff] %v234
                %v236 = vld [vmem:[%s148 + $0x2a8] sm:$0xff]
                %237 = vst [vmem:[%s149 + $0x158] sm:$0xff] %v236
                %v238 = vld [vmem:[%s148 + $0x2c0] sm:$0xff]
                %239 = vst [vmem:[%s149 + $0x160] sm:$0xff] %v238
                %v240 = vld [vmem:[%s148 + $0x2c8] sm:$0xff]
                %241 = vst [vmem:[%s149 + $0x168] sm:$0xff] %v240
                %v242 = vld [vmem:[%s148 + $0x2e0] sm:$0xff]
                %243 = vst [vmem:[%s149 + $0x170] sm:$0xff] %v242
                %v244 = vld [vmem:[%s148 + $0x2e8] sm:$0xff]
                %245 = vst [vmem:[%s149 + $0x178] sm:$0xff] %v244
              $region41: #{video_autoencoder_forward.5} parent=35 // loop_footer
                %s147 = sadd.s32 1, %s143
              $region42: #{video_autoencoder_forward.5} parent=35 // loop_footer_branch
                %142 = sbr.rel target = $region38
              $region43: #{video_autoencoder_forward.5} parent=35 // loop_exit
                _
            $region36: #{video_autoencoder_forward.5} parent=31 // pred_fallthru
              _
            // Predicated region
            $region44: #{video_autoencoder_forward.5} parent=31 // pred_check
              _
            $region45: #{video_autoencoder_forward.5} parent=31 // pred_check_branch
              %247 = sbr.rel target = $region47
            $region46: #{video_autoencoder_forward.5} parent=31 // pred_region
              _
            $region47: #{video_autoencoder_forward.5} parent=31 // pred_fallthru
              _
          $region32: #{video_autoencoder_forward.5} parent=27 // pred_fallthru
            _
          %248 = vnop
        $region28: #{video_autoencoder_forward.5} parent=23 // pred_fallthru
          _
      $region24: #{video_autoencoder_forward.5} parent=5 // pred_fallthru
        _
      %p249 = scmp.le.s32.totalorder 1, %s9
      %p250 = scmp.lt.s32.totalorder %s9, 3
      %p251 = pnand %p249, %p250
      %p252 = pneg %p251
      // Predicated region
      $region48: #{video_autoencoder_forward.5} parent=5 // pred_check
        _
      $region49: #{video_autoencoder_forward.5} parent=5 // pred_check_branch
        %254 = sbr.rel (%p251) target = $region51
      $region50: #{video_autoencoder_forward.5} parent=5 // pred_region
        %s255 = ssub.s32 %s9, 1
        %s256 = sand.u32 %s43, 1
        %s257 = sand.u32 %s43, 1
        %s258 = smul.addr %s257, 384
        %s259 = scalar_lea.vmem [#allocation2], %s258
        // Predicated region
        $region52: #{video_autoencoder_forward.5} parent=50 // pred_check
          %p260 = pneg %p56
        $region53: #{video_autoencoder_forward.5} parent=50 // pred_check_branch
          %262 = sbr.rel (%p260) target = $region55
        $region54: #{video_autoencoder_forward.5} parent=50 // pred_region
          _
        $region55: #{video_autoencoder_forward.5} parent=50 // pred_fallthru
          _
        %p263 = pneg %p30
        %p264 = pneg %p27
        %s265 = sand.u32 %s43, 1
        %s266 = sand.u32 %s43, 1
        %s267 = smul.addr %s266, 384
        %s268 = scalar_lea.vmem [#allocation2], %s267
        %p269 = pneg %p56
        %p270 = pneg %p53
        %p271 = pneg %p77
        %p272 = pneg %p74
        %p273 = pneg %p103
        %p274 = pneg %p100
        %s275 = smul.u32 4, %s14
        %p276 = scmp.lt.s32.totalorder %s275, 7
        %s277 = scalar_select %p276, %s275, 7
        %s278 = smul.addr %s277, 2
        %s279 = scalar_lea.vmem %s3, %s278
        %s280 = smul.u32 4, %s14
        %s281 = smul.u32 4, %s14
        %p282 = scmp.lt.s32.totalorder %s281, 7
        %s283 = scalar_select %p282, %s281, 7
        %s284 = smul.addr %s283, 2
        %s285 = scalar_lea.vmem %s3, %s284
        %s286 = smul.u32 4, %s14
        %v288 = vld [vmem:[%s0] sm:$0xf]
        %v289 = vld [vmem:[%s259] sm:$0xff]
        %v290 = vld [vmem:[%s259 + $0x8] sm:$0xff]
        %v291 = vld [vmem:[%s259 + $0x10] sm:$0xff]
        %v292 = vld [vmem:[%s259 + $0x18] sm:$0xff]
        %v293 = vld [vmem:[%s259 + $0x20] sm:$0xff]
        %v294 = vld [vmem:[%s259 + $0x28] sm:$0xff]
        %v295 = vld [vmem:[%s259 + $0x30] sm:$0xff]
        %v296 = vld [vmem:[%s259 + $0x38] sm:$0xff]
        %v297 = vld [vmem:[%s259 + $0x40] sm:$0xff]
        %v298 = vld [vmem:[%s259 + $0x48] sm:$0xff]
        %v299 = vld [vmem:[%s259 + $0x50] sm:$0xff]
        %v300 = vld [vmem:[%s259 + $0x58] sm:$0xff]
        %v301 = vld [vmem:[%s259 + $0x60] sm:$0xff]
        %v302 = vld [vmem:[%s259 + $0x68] sm:$0xff]
        %v303 = vld [vmem:[%s259 + $0x70] sm:$0xff]
        %v304 = vld [vmem:[%s259 + $0x78] sm:$0xff]
        %v305 = vld [vmem:[%s259 + $0x80] sm:$0xff]
        %v306 = vld [vmem:[%s259 + $0x88] sm:$0xff]
        %v307 = vld [vmem:[%s259 + $0x90] sm:$0xff]
        %v308 = vld [vmem:[%s259 + $0x98] sm:$0xff]
        %v309 = vld [vmem:[%s259 + $0xa0] sm:$0xff]
        %v310 = vld [vmem:[%s259 + $0xa8] sm:$0xff]
        %v311 = vld [vmem:[%s259 + $0xb0] sm:$0xff]
        %v312 = vld [vmem:[%s259 + $0xb8] sm:$0xff]
        %v313 = vld [vmem:[%s259 + $0xc0] sm:$0xff]
        %v314 = vld [vmem:[%s259 + $0xc8] sm:$0xff]
        %v315 = vld [vmem:[%s259 + $0xd0] sm:$0xff]
        %v316 = vld [vmem:[%s259 + $0xd8] sm:$0xff]
        %v317 = vld [vmem:[%s259 + $0xe0] sm:$0xff]
        %v318 = vld [vmem:[%s259 + $0xe8] sm:$0xff]
        %v319 = vld [vmem:[%s259 + $0xf0] sm:$0xff]
        %v320 = vld [vmem:[%s259 + $0xf8] sm:$0xff]
        %v321 = vld [vmem:[%s259 + $0x100] sm:$0xff]
        %v322 = vld [vmem:[%s259 + $0x108] sm:$0xff]
        %v323 = vld [vmem:[%s259 + $0x110] sm:$0xff]
        %v324 = vld [vmem:[%s259 + $0x118] sm:$0xff]
        %v325 = vld [vmem:[%s259 + $0x120] sm:$0xff]
        %v326 = vld [vmem:[%s259 + $0x128] sm:$0xff]
        %v327 = vld [vmem:[%s259 + $0x130] sm:$0xff]
        %v328 = vld [vmem:[%s259 + $0x138] sm:$0xff]
        %v329 = vld [vmem:[%s259 + $0x140] sm:$0xff]
        %v330 = vld [vmem:[%s259 + $0x148] sm:$0xff]
        %v331 = vld [vmem:[%s259 + $0x150] sm:$0xff]
        %v332 = vld [vmem:[%s259 + $0x158] sm:$0xff]
        %v333 = vld [vmem:[%s259 + $0x160] sm:$0xff]
        %v334 = vld [vmem:[%s259 + $0x168] sm:$0xff]
        %v335 = vld [vmem:[%s259 + $0x170] sm:$0xff]
        %v336 = vld [vmem:[%s259 + $0x178] sm:$0xff]
        %v337 = vld [vmem:[%s2] sm:$0xf]
        %339 = vset.pattern.permute.xlu0 0
        %340 = vperm.xlu0 %339, %v337
        %v341 = vpop.permute.xlu0 %340
        %v345 = vunpack.c.l.s4 1983009808
        %v346 = vunpack.c.0.s8 %v345
        %v347 = vlaneseq
        %v348 = vshrl.u32 %v347, 7
        %v349 = vsub.s32 %v346, %v348
        %v350 = vrot.slane %v288, %v349
        %v351 = vcombine.high %v350, %v350
        %v401 = vunpack.c.l.b16 %v289
        %v402 = vunpack.c.h.b16 %v289
        %v403 = vunpack.c.l.b16 %v290
        %v404 = vunpack.c.h.b16 %v290
        %v405 = vunpack.c.l.b16 %v291
        %v406 = vunpack.c.h.b16 %v291
        %v407 = vunpack.c.l.b16 %v292
        %v408 = vunpack.c.h.b16 %v292
        %v409 = vunpack.c.l.b16 %v293
        %v410 = vunpack.c.h.b16 %v293
        %v411 = vunpack.c.l.b16 %v294
        %v412 = vunpack.c.h.b16 %v294
        %v413 = vunpack.c.l.b16 %v295
        %v414 = vunpack.c.h.b16 %v295
        %v415 = vunpack.c.l.b16 %v296
        %v416 = vunpack.c.h.b16 %v296
        %v417 = vunpack.c.l.b16 %v297
        %v418 = vunpack.c.h.b16 %v297
        %v419 = vunpack.c.l.b16 %v298
        %v420 = vunpack.c.h.b16 %v298
        %v421 = vunpack.c.l.b16 %v299
        %v422 = vunpack.c.h.b16 %v299
        %v423 = vunpack.c.l.b16 %v300
        %v424 = vunpack.c.h.b16 %v300
        %v425 = vunpack.c.l.b16 %v301
        %v426 = vunpack.c.h.b16 %v301
        %v427 = vunpack.c.l.b16 %v302
        %v428 = vunpack.c.h.b16 %v302
        %v429 = vunpack.c.l.b16 %v303
        %v430 = vunpack.c.h.b16 %v303
        %v431 = vunpack.c.l.b16 %v304
        %v432 = vunpack.c.h.b16 %v304
        %v433 = vunpack.c.l.b16 %v305
        %v434 = vunpack.c.h.b16 %v305
        %v435 = vunpack.c.l.b16 %v306
        %v436 = vunpack.c.h.b16 %v306
        %v437 = vunpack.c.l.b16 %v307
        %v438 = vunpack.c.h.b16 %v307
        %v439 = vunpack.c.l.b16 %v308
        %v440 = vunpack.c.h.b16 %v308
        %v441 = vunpack.c.l.b16 %v309
        %v442 = vunpack.c.h.b16 %v309
        %v443 = vunpack.c.l.b16 %v310
        %v444 = vunpack.c.h.b16 %v310
        %v445 = vunpack.c.l.b16 %v311
        %v446 = vunpack.c.h.b16 %v311
        %v447 = vunpack.c.l.b16 %v312
        %v448 = vunpack.c.h.b16 %v312
        %v449 = vunpack.c.l.b16 %v313
        %v450 = vunpack.c.h.b16 %v313
        %v451 = vunpack.c.l.b16 %v314
        %v452 = vunpack.c.h.b16 %v314
        %v453 = vunpack.c.l.b16 %v315
        %v454 = vunpack.c.h.b16 %v315
        %v455 = vunpack.c.l.b16 %v316
        %v456 = vunpack.c.h.b16 %v316
        %v457 = vunpack.c.l.b16 %v317
        %v458 = vunpack.c.h.b16 %v317
        %v459 = vunpack.c.l.b16 %v318
        %v460 = vunpack.c.h.b16 %v318
        %v461 = vunpack.c.l.b16 %v319
        %v462 = vunpack.c.h.b16 %v319
        %v463 = vunpack.c.l.b16 %v320
        %v464 = vunpack.c.h.b16 %v320
        %v465 = vunpack.c.l.b16 %v321
        %v466 = vunpack.c.h.b16 %v321
        %v467 = vunpack.c.l.b16 %v322
        %v468 = vunpack.c.h.b16 %v322
        %v469 = vunpack.c.l.b16 %v323
        %v470 = vunpack.c.h.b16 %v323
        %v471 = vunpack.c.l.b16 %v324
        %v472 = vunpack.c.h.b16 %v324
        %v473 = vunpack.c.l.b16 %v325
        %v474 = vunpack.c.h.b16 %v325
        %v475 = vunpack.c.l.b16 %v326
        %v476 = vunpack.c.h.b16 %v326
        %v477 = vunpack.c.l.b16 %v327
        %v478 = vunpack.c.h.b16 %v327
        %v479 = vunpack.c.l.b16 %v328
        %v480 = vunpack.c.h.b16 %v328
        %v481 = vunpack.c.l.b16 %v329
        %v482 = vunpack.c.h.b16 %v329
        %v483 = vunpack.c.l.b16 %v330
        %v484 = vunpack.c.h.b16 %v330
        %v485 = vunpack.c.l.b16 %v331
        %v486 = vunpack.c.h.b16 %v331
        %v487 = vunpack.c.l.b16 %v332
        %v488 = vunpack.c.h.b16 %v332
        %v489 = vunpack.c.l.b16 %v333
        %v490 = vunpack.c.h.b16 %v333
        %v491 = vunpack.c.l.b16 %v334
        %v492 = vunpack.c.h.b16 %v334
        %v493 = vunpack.c.l.b16 %v335
        %v494 = vunpack.c.h.b16 %v335
        %v495 = vunpack.c.l.b16 %v336
        %v496 = vunpack.c.h.b16 %v336
        %v497 = vpack.c.b16 %v405, %v401
        %v498 = vpack.c.b16 %v406, %v402
        %v499 = vpack.c.b16 %v407, %v403
        %v500 = vpack.c.b16 %v408, %v404
        %v501 = vpack.c.b16 %v413, %v409
        %v502 = vpack.c.b16 %v414, %v410
        %v503 = vpack.c.b16 %v415, %v411
        %v504 = vpack.c.b16 %v416, %v412
        %v505 = vpack.c.b16 %v421, %v417
        %v506 = vpack.c.b16 %v422, %v418
        %v507 = vpack.c.b16 %v423, %v419
        %v508 = vpack.c.b16 %v424, %v420
        %v509 = vpack.c.b16 %v429, %v425
        %v510 = vpack.c.b16 %v430, %v426
        %v511 = vpack.c.b16 %v431, %v427
        %v512 = vpack.c.b16 %v432, %v428
        %v513 = vpack.c.b16 %v437, %v433
        %v514 = vpack.c.b16 %v438, %v434
        %v515 = vpack.c.b16 %v439, %v435
        %v516 = vpack.c.b16 %v440, %v436
        %v517 = vpack.c.b16 %v445, %v441
        %v518 = vpack.c.b16 %v446, %v442
        %v519 = vpack.c.b16 %v447, %v443
        %v520 = vpack.c.b16 %v448, %v444
        %v521 = vpack.c.b16 %v453, %v449
        %v522 = vpack.c.b16 %v454, %v450
        %v523 = vpack.c.b16 %v455, %v451
        %v524 = vpack.c.b16 %v456, %v452
        %v525 = vpack.c.b16 %v461, %v457
        %v526 = vpack.c.b16 %v462, %v458
        %v527 = vpack.c.b16 %v463, %v459
        %v528 = vpack.c.b16 %v464, %v460
        %v529 = vpack.c.b16 %v469, %v465
        %v530 = vpack.c.b16 %v470, %v466
        %v531 = vpack.c.b16 %v471, %v467
        %v532 = vpack.c.b16 %v472, %v468
        %v533 = vpack.c.b16 %v477, %v473
        %v534 = vpack.c.b16 %v478, %v474
        %v535 = vpack.c.b16 %v479, %v475
        %v536 = vpack.c.b16 %v480, %v476
        %v537 = vpack.c.b16 %v485, %v481
        %v538 = vpack.c.b16 %v486, %v482
        %v539 = vpack.c.b16 %v487, %v483
        %v540 = vpack.c.b16 %v488, %v484
        %v541 = vpack.c.b16 %v493, %v489
        %v542 = vpack.c.b16 %v494, %v490
        %v543 = vpack.c.b16 %v495, %v491
        %v544 = vpack.c.b16 %v496, %v492
        %vm593 = vcmask 523264
        %v595 = vsel %vm593, %v351, 0
        %597 = vmatprep.subr.bf16.mxu0 %v498
        %598 = vmatpush1.bf16.msra.mxu0 %v497
        %599 = vmatprep.subr.bf16.mxu0 %v502
        %600 = vmatpush1.bf16.msra.mxu0 %v501
        %601 = vmatprep.subr.bf16.mxu0 %v506
        %602 = vmatpush1.bf16.msra.mxu0 %v505
        %603 = vmatprep.subr.bf16.mxu0 %v510
        %604 = vmatpush1.bf16.msra.mxu0 %v509
        %605 = vmatprep.subr.bf16.mxu0 %v514
        %606 = vmatpush1.bf16.msra.mxu0 %v513
        %607 = vmatprep.subr.bf16.mxu0 %v518
        %608 = vmatpush1.bf16.msra.mxu0 %v517
        %609 = vmatprep.subr.bf16.mxu0 %v522
        %610 = vmatpush1.bf16.msra.mxu0 %v521
        %611 = vmatprep.subr.bf16.mxu0 %v526
        %612 = vmatpush1.bf16.msra.mxu0 %v525
        %613 = vmatprep.subr.bf16.mxu0 %v530
        %614 = vmatpush1.bf16.msra.mxu0 %v529
        %615 = vmatprep.subr.bf16.mxu0 %v534
        %616 = vmatpush1.bf16.msra.mxu0 %v533
        %617 = vmatprep.subr.bf16.mxu0 %v538
        %618 = vmatpush1.bf16.msra.mxu0 %v537
        %619 = vmatprep.subr.bf16.mxu0 %v542
        %620 = vmatpush1.bf16.msra.mxu0 %v541
        %621 = vmatprep.subr.bf16.mxu0 0
        %622 = vmatpush1.bf16.msra.mxu0 0
        %623 = vmatprep.subr.bf16.mxu0 0
        %624 = vmatpush1.bf16.msra.mxu0 0
        %625 = vmatprep.subr.bf16.mxu0 0
        %626 = vmatpush1.bf16.msra.mxu0 0
        %627 = vmatprep.subr.bf16.mxu0 0
        %628 = vmatpush1.bf16.msra.mxu0 0
        %629 = vmatprep.mubr.bf16.mxu0 %v595
        %630 = vmatmul.mubr.bf16.gmra.mrb[0].mxu0 %v350
        %v631 = vpop.f32.mrb[0].mxu0
        %v632 = vadd.f32 %v341, %v631
        %v633 = vpop.f32.mrb[0].mxu0
        %v634 = vadd.f32 %v341, %v633
        %v635 = vpop.f32.mrb[0].mxu0
        %v636 = vpop.f32.mrb[0].mxu0
        %637 = vdwg.mxu0
        %638 = vmatprep.subr.bf16.mxu0 %v500
        %639 = vmatpush1.bf16.msra.mxu0 %v499
        %640 = vmatprep.subr.bf16.mxu0 %v504
        %641 = vmatpush1.bf16.msra.mxu0 %v503
        %642 = vmatprep.subr.bf16.mxu0 %v508
        %643 = vmatpush1.bf16.msra.mxu0 %v507
        %644 = vmatprep.subr.bf16.mxu0 %v512
        %645 = vmatpush1.bf16.msra.mxu0 %v511
        %646 = vmatprep.subr.bf16.mxu0 %v516
        %647 = vmatpush1.bf16.msra.mxu0 %v515
        %648 = vmatprep.subr.bf16.mxu0 %v520
        %649 = vmatpush1.bf16.msra.mxu0 %v519
        %650 = vmatprep.subr.bf16.mxu0 %v524
        %651 = vmatpush1.bf16.msra.mxu0 %v523
        %652 = vmatprep.subr.bf16.mxu0 %v528
        %653 = vmatpush1.bf16.msra.mxu0 %v527
        %654 = vmatprep.subr.bf16.mxu0 %v532
        %655 = vmatpush1.bf16.msra.mxu0 %v531
        %656 = vmatprep.subr.bf16.mxu0 %v536
        %657 = vmatpush1.bf16.msra.mxu0 %v535
        %658 = vmatprep.subr.bf16.mxu0 %v540
        %659 = vmatpush1.bf16.msra.mxu0 %v539
        %660 = vmatprep.subr.bf16.mxu0 %v544
        %661 = vmatpush1.bf16.msra.mxu0 %v543
        %662 = vmatprep.subr.bf16.mxu0 0
        %663 = vmatpush1.bf16.msra.mxu0 0
        %664 = vmatprep.subr.bf16.mxu0 0
        %665 = vmatpush1.bf16.msra.mxu0 0
        %666 = vmatprep.subr.bf16.mxu0 0
        %667 = vmatpush1.bf16.msra.mxu0 0
        %668 = vmatprep.subr.bf16.mxu0 0
        %669 = vmatpush1.bf16.msra.mxu0 0
        %670 = vmatprep.mubr.bf16.mxu0 %v595
        %671 = vmatmul.mubr.bf16.gmra.mrb[0].mxu0 %v350
        %v672 = vpop.f32.mrb[0].mxu0
        %v673 = vadd.f32 %v341, %v672
        %v674 = vpop.f32.mrb[0].mxu0
        %v675 = vadd.f32 %v341, %v674
        %v676 = vpop.f32.mrb[0].mxu0
        %v677 = vpop.f32.mrb[0].mxu0
        %678 = vdwg.mxu0
        %v679 = vmul.f32 %v632, 0.01
        %v680 = vmul.f32 %v634, 0.01
        %v681 = vmul.f32 %v673, 0.01
        %v682 = vmul.f32 %v675, 0.01
        %v683 = vmax.f32 %v632, %v679
        %v684 = vmax.f32 %v634, %v680
        %v685 = vmax.f32 %v673, %v681
        %v686 = vmax.f32 %v675, %v682
        %v687 = vpack.c.bf16 %v683, %v683
        %v688 = vpack.c.bf16 %v684, %v684
        %v689 = vpack.c.bf16 %v685, %v685
        %v690 = vpack.c.bf16 %v686, %v686
        %v695 = vcombine.low %v687, %v688
        %v696 = vcombine.low %v689, %v690
        %v698 = vunpack.c.l.s4 1983009808
        %v699 = vunpack.c.0.s8 %v698
        %v700 = vlaneseq
        %v701 = vshrl.u32 %v700, 7
        %v702 = vsub.s32 %v699, %v701
        %v703 = vrot.slane %v695, %v702
        %v705 = vunpack.c.l.s4 1983009808
        %v706 = vunpack.c.0.s8 %v705
        %v707 = vlaneseq
        %v708 = vshrl.u32 %v707, 7
        %v709 = vsub.s32 %v706, %v708
        %v710 = vrot.slane %v696, %v709
        %v711 = vcombine.low %v703, %v710
        %713 = vst [vmem:[%s285] sm:$0xff] %v711
        %s714 = smul.u32 4, %s14
        %p715 = scmp.lt.s32.totalorder %s714, 7
        %s716 = scalar_select %p715, %s714, 7
        %s717 = smul.addr %s716, 2
        %s718 = scalar_lea.vmem %s3, %s717
        // Predicated region
        $region56: #{video_autoencoder_forward.5} parent=50 // pred_check
          %p719 = pneg %p100
        $region57: #{video_autoencoder_forward.5} parent=50 // pred_check_branch
          %721 = sbr.rel (%p719) target = $region59
        $region58: #{video_autoencoder_forward.5} parent=50 // pred_region
          %s722 = smul.u32 4, %s14
        $region59: #{video_autoencoder_forward.5} parent=50 // pred_fallthru
          _
      $region51: #{video_autoencoder_forward.5} parent=5 // pred_fallthru
        _
      %p723 = scmp.le.s32.totalorder 2, %s9
      // Predicated region
      $region60: #{video_autoencoder_forward.5} parent=5 // pred_check
        %p724 = pneg %p723
      $region61: #{video_autoencoder_forward.5} parent=5 // pred_check_branch
        %726 = sbr.rel (%p724) target = $region63
      $region62: #{video_autoencoder_forward.5} parent=5 // pred_region
        %s727 = ssub.s32 %s9, 2
        // Predicated region
        $region64: #{video_autoencoder_forward.5} parent=62 // pred_check
          %p728 = pneg %p106
        $region65: #{video_autoencoder_forward.5} parent=62 // pred_check_branch
          %730 = sbr.rel (%p728) target = $region67
        $region66: #{video_autoencoder_forward.5} parent=62 // pred_region
          %s731 = smul.u32 4, %s15
          %p732 = scmp.lt.s32.totalorder %s731, 7
          %s733 = scalar_select %p732, %s731, 7
          %s734 = smul.addr %s733, 2
          %s735 = scalar_lea.vmem %s3, %s734
        $region67: #{video_autoencoder_forward.5} parent=62 // pred_fallthru
          _
      $region63: #{video_autoencoder_forward.5} parent=5 // pred_fallthru
        _
    $region6: #{video_autoencoder_forward.5} parent=1 // loop_footer
      %s13 = sadd.s32 1, %s9
    $region7: #{video_autoencoder_forward.5} parent=1 // loop_footer_branch
      %8 = sbr.rel target = $region3
    $region8: #{video_autoencoder_forward.5} parent=1 // loop_exit
      _

// kernel: video_autoencoder_forward.6
$region0: #{video_autoencoder_forward.6}
  #allocation0 [shape = 'u32[]', space=smem, size = 0x4, offset = 0x4, fixed_abs, tag = 'smem constant byte address 0x4 - core index']
  #allocation1 [shape = 'u32[144,128]{1,0:T(1,128)}', space=vmem, size = 0x12000, scoped, tag = 'internal scratch']
  %s0 = inlined_call_operand.vmem [shape: bf16[8,256], index: 0, kind: input, shape index: {}]
  %s1 = inlined_call_operand.vmem [shape: bf16[256,128], index: 1, kind: input, shape index: {}]
  %s2 = inlined_call_operand.vmem [shape: f32[8,1], index: 2, kind: input, shape index: {}]
  %s3 = inlined_call_operand.vmem [shape: bf16[8,128], index: 3, kind: output, shape index: {}]
  %s4 = sld [smem:[#allocation0]]
  $region22: #{video_autoencoder_forward.6} parent=0
    _
  %s6 = ssub.s32 1, %s4
  %s7 = scalar_select 0, %s6, %s4
  // Predicated region
  $region2: #{video_autoencoder_forward.6} parent=0 // pred_check
    _
  $region3: #{video_autoencoder_forward.6} parent=0 // pred_check_branch
    %9 = sbr.rel (0) target = $region5
  $region4: #{video_autoencoder_forward.6} parent=0 // pred_region
    _
  $region5: #{video_autoencoder_forward.6} parent=0 // pred_fallthru
    _
  // Predicated region
  $region6: #{video_autoencoder_forward.6} parent=0 // pred_check
    _
  $region7: #{video_autoencoder_forward.6} parent=0 // pred_check_branch
    %11 = sbr.rel (0) target = $region9
  $region8: #{video_autoencoder_forward.6} parent=0 // pred_region
    _
  $region9: #{video_autoencoder_forward.6} parent=0 // pred_fallthru
    _
  // Predicated region
  $region10: #{video_autoencoder_forward.6} parent=0 // pred_check
    _
  $region11: #{video_autoencoder_forward.6} parent=0 // pred_check_branch
    %13 = sbr.rel (0) target = $region13
  $region12: #{video_autoencoder_forward.6} parent=0 // pred_region
    _
  $region13: #{video_autoencoder_forward.6} parent=0 // pred_fallthru
    _
  %v15 = vld [vmem:[%s0] sm:$0xff]
  %v16 = vld [vmem:[%s1] sm:$0xf]
  %v17 = vld [vmem:[%s1 + $0x4] sm:$0xf]
  %v18 = vld [vmem:[%s1 + $0x8] sm:$0xf]
  %v19 = vld [vmem:[%s1 + $0xc] sm:$0xf]
  %v20 = vld [vmem:[%s1 + $0x10] sm:$0xf]
  %v21 = vld [vmem:[%s1 + $0x14] sm:$0xf]
  %v22 = vld [vmem:[%s1 + $0x18] sm:$0xf]
  %v23 = vld [vmem:[%s1 + $0x1c] sm:$0xf]
  %v24 = vld [vmem:[%s1 + $0x20] sm:$0xf]
  %v25 = vld [vmem:[%s1 + $0x24] sm:$0xf]
  %v26 = vld [vmem:[%s1 + $0x28] sm:$0xf]
  %v27 = vld [vmem:[%s1 + $0x2c] sm:$0xf]
  %v28 = vld [vmem:[%s1 + $0x30] sm:$0xf]
  %v29 = vld [vmem:[%s1 + $0x34] sm:$0xf]
  %v30 = vld [vmem:[%s1 + $0x38] sm:$0xf]
  %v31 = vld [vmem:[%s1 + $0x3c] sm:$0xf]
  %v32 = vld [vmem:[%s1 + $0x40] sm:$0xf]
  %v33 = vld [vmem:[%s1 + $0x44] sm:$0xf]
  %v34 = vld [vmem:[%s1 + $0x48] sm:$0xf]
  %v35 = vld [vmem:[%s1 + $0x4c] sm:$0xf]
  %v36 = vld [vmem:[%s1 + $0x50] sm:$0xf]
  %v37 = vld [vmem:[%s1 + $0x54] sm:$0xf]
  %v38 = vld [vmem:[%s1 + $0x58] sm:$0xf]
  %v39 = vld [vmem:[%s1 + $0x5c] sm:$0xf]
  %v40 = vld [vmem:[%s1 + $0x60] sm:$0xf]
  %v41 = vld [vmem:[%s1 + $0x64] sm:$0xf]
  %v42 = vld [vmem:[%s1 + $0x68] sm:$0xf]
  %v43 = vld [vmem:[%s1 + $0x6c] sm:$0xf]
  %v44 = vld [vmem:[%s1 + $0x70] sm:$0xf]
  %v45 = vld [vmem:[%s1 + $0x74] sm:$0xf]
  %v46 = vld [vmem:[%s1 + $0x78] sm:$0xf]
  %v47 = vld [vmem:[%s1 + $0x7c] sm:$0xf]
  %v48 = vld [vmem:[%s2] sm:$0xff]
  %50 = vset.pattern.permute.xlu0 0
  %51 = vperm.xlu0 %50, %v48
  %v52 = vpop.permute.xlu0 %51
  %v55 = vunpack.c.l.b16 %v15
  %v56 = vunpack.c.h.b16 %v15
  %v57 = vpack.c.b16 %v55, %v55
  %v58 = vpack.c.b16 %v56, %v56
  %v93 = vunpack.c.l.b16 %v16
  %v94 = vunpack.c.l.b16 %v17
  %v95 = vunpack.c.l.b16 %v18
  %v96 = vunpack.c.l.b16 %v19
  %v97 = vunpack.c.l.b16 %v20
  %v98 = vunpack.c.l.b16 %v21
  %v99 = vunpack.c.l.b16 %v22
  %v100 = vunpack.c.l.b16 %v23
  %v101 = vunpack.c.l.b16 %v24
  %v102 = vunpack.c.l.b16 %v25
  %v103 = vunpack.c.l.b16 %v26
  %v104 = vunpack.c.l.b16 %v27
  %v105 = vunpack.c.l.b16 %v28
  %v106 = vunpack.c.l.b16 %v29
  %v107 = vunpack.c.l.b16 %v30
  %v108 = vunpack.c.l.b16 %v31
  %v109 = vunpack.c.l.b16 %v32
  %v110 = vunpack.c.l.b16 %v33
  %v111 = vunpack.c.l.b16 %v34
  %v112 = vunpack.c.l.b16 %v35
  %v113 = vunpack.c.l.b16 %v36
  %v114 = vunpack.c.l.b16 %v37
  %v115 = vunpack.c.l.b16 %v38
  %v116 = vunpack.c.l.b16 %v39
  %v117 = vunpack.c.l.b16 %v40
  %v118 = vunpack.c.l.b16 %v41
  %v119 = vunpack.c.l.b16 %v42
  %v120 = vunpack.c.l.b16 %v43
  %v121 = vunpack.c.l.b16 %v44
  %v122 = vunpack.c.l.b16 %v45
  %v123 = vunpack.c.l.b16 %v46
  %v124 = vunpack.c.l.b16 %v47
  %v125 = vpack.c.b16 %v94, %v93
  %v126 = vpack.c.b16 %v96, %v95
  %v127 = vpack.c.b16 %v98, %v97
  %v128 = vpack.c.b16 %v100, %v99
  %v129 = vpack.c.b16 %v102, %v101
  %v130 = vpack.c.b16 %v104, %v103
  %v131 = vpack.c.b16 %v106, %v105
  %v132 = vpack.c.b16 %v108, %v107
  %v133 = vpack.c.b16 %v110, %v109
  %v134 = vpack.c.b16 %v112, %v111
  %v135 = vpack.c.b16 %v114, %v113
  %v136 = vpack.c.b16 %v116, %v115
  %v137 = vpack.c.b16 %v118, %v117
  %v138 = vpack.c.b16 %v120, %v119
  %v139 = vpack.c.b16 %v122, %v121
  %v140 = vpack.c.b16 %v124, %v123
  %157 = vmatprep.subr.bf16.mxu0 0
  %158 = vmatpush1.bf16.msra.mxu0 %v125
  %159 = vmatprep.subr.bf16.mxu0 0
  %160 = vmatpush1.bf16.msra.mxu0 %v126
  %161 = vmatprep.subr.bf16.mxu0 0
  %162 = vmatpush1.bf16.msra.mxu0 %v127
  %163 = vmatprep.subr.bf16.mxu0 0
  %164 = vmatpush1.bf16.msra.mxu0 %v128
  %165 = vmatprep.subr.bf16.mxu0 0
  %166 = vmatpush1.bf16.msra.mxu0 %v129
  %167 = vmatprep.subr.bf16.mxu0 0
  %168 = vmatpush1.bf16.msra.mxu0 %v130
  %169 = vmatprep.subr.bf16.mxu0 0
  %170 = vmatpush1.bf16.msra.mxu0 %v131
  %171 = vmatprep.subr.bf16.mxu0 0
  %172 = vmatpush1.bf16.msra.mxu0 %v132
  %173 = vmatprep.subr.bf16.mxu0 0
  %174 = vmatpush1.bf16.msra.mxu0 %v133
  %175 = vmatprep.subr.bf16.mxu0 0
  %176 = vmatpush1.bf16.msra.mxu0 %v134
  %177 = vmatprep.subr.bf16.mxu0 0
  %178 = vmatpush1.bf16.msra.mxu0 %v135
  %179 = vmatprep.subr.bf16.mxu0 0
  %180 = vmatpush1.bf16.msra.mxu0 %v136
  %181 = vmatprep.subr.bf16.mxu0 0
  %182 = vmatpush1.bf16.msra.mxu0 %v137
  %183 = vmatprep.subr.bf16.mxu0 0
  %184 = vmatpush1.bf16.msra.mxu0 %v138
  %185 = vmatprep.subr.bf16.mxu0 0
  %186 = vmatpush1.bf16.msra.mxu0 %v139
  %187 = vmatprep.subr.bf16.mxu0 0
  %188 = vmatpush1.bf16.msra.mxu0 %v140
  %189 = vmatprep.mubr.bf16.mxu0 %v58
  %190 = vmatmul.mubr.bf16.gmra.mrb[0].mxu0 %v57
  %v191 = vpop.f32.mrb[0].mxu0
  %v192 = vadd.f32 %v52, %v191
  %v193 = vpop.f32.mrb[0].mxu0
  %v194 = vpop.f32.mrb[0].mxu0
  %v195 = vpop.f32.mrb[0].mxu0
  %196 = vdwg.mxu0
  %v197 = vmul.f32 %v192, 0.01
  %v198 = vmax.f32 %v192, %v197
  %v199 = vpack.c.bf16 %v198, %v198
  %200 = vst [vmem:[%s3] sm:$0xf] %v199
  // Predicated region
  $region14: #{video_autoencoder_forward.6} parent=0 // pred_check
    _
  $region15: #{video_autoencoder_forward.6} parent=0 // pred_check_branch
    %202 = sbr.rel (0) target = $region17
  $region16: #{video_autoencoder_forward.6} parent=0 // pred_region
    _
  $region17: #{video_autoencoder_forward.6} parent=0 // pred_fallthru
    _
  // Predicated region
  $region18: #{video_autoencoder_forward.6} parent=0 // pred_check
    _
  $region19: #{video_autoencoder_forward.6} parent=0 // pred_check_branch
    %204 = sbr.rel (0) target = $region21
  $region20: #{video_autoencoder_forward.6} parent=0 // pred_region
    _
  $region21: #{video_autoencoder_forward.6} parent=0 // pred_fallthru
    _

// kernel: video_autoencoder_forward.7
$region0: #{video_autoencoder_forward.7}
  #allocation0 [shape = 'u32[]', space=smem, size = 0x4, offset = 0x4, fixed_abs, tag = 'smem constant byte address 0x4 - core index']
  #allocation1 [shape = 'u32[144,128]{1,0:T(1,128)}', space=vmem, size = 0x12000, scoped, tag = 'internal scratch']
  %s0 = inlined_call_operand.vmem [shape: bf16[2,512], index: 0, kind: input, shape index: {}]
  %s1 = inlined_call_operand.vmem [shape: bf16[512,128], index: 1, kind: input, shape index: {}]
  %s2 = inlined_call_operand.vmem [shape: f32[1,128], index: 2, kind: input, shape index: {}]
  %s3 = inlined_call_operand.vmem [shape: bf16[128,32], index: 3, kind: input, shape index: {}]
  %s4 = inlined_call_operand.vmem [shape: f32[1,32], index: 4, kind: input, shape index: {}]
  %s5 = inlined_call_operand.vmem [shape: bf16[32,32], index: 5, kind: input, shape index: {}]
  %s6 = inlined_call_operand.vmem [shape: f32[1,32], index: 6, kind: input, shape index: {}]
  %s7 = inlined_call_operand.vmem [shape: bf16[32,16], index: 7, kind: input, shape index: {}]
  %s8 = inlined_call_operand.vmem [shape: f32[1,16], index: 8, kind: input, shape index: {}]
  %s9 = inlined_call_operand.vmem [shape: bf16[16,32], index: 9, kind: input, shape index: {}]
  %s10 = inlined_call_operand.vmem [shape: f32[1,32], index: 10, kind: input, shape index: {}]
  %s11 = inlined_call_operand.vmem [shape: bf16[32,32], index: 11, kind: input, shape index: {}]
  %s12 = inlined_call_operand.vmem [shape: f32[1,32], index: 12, kind: input, shape index: {}]
  %s13 = inlined_call_operand.vmem [shape: bf16[32,128], index: 13, kind: input, shape index: {}]
  %s14 = inlined_call_operand.vmem [shape: f32[1,128], index: 14, kind: input, shape index: {}]
  %s15 = inlined_call_operand.vmem [shape: bf16[128,512], index: 15, kind: input, shape index: {}]
  %s16 = inlined_call_operand.vmem [shape: f32[1,512], index: 16, kind: input, shape index: {}]
  %s17 = inlined_call_operand.hbm [shape: f32[2,16], index: 17, kind: output, shape index: {0}]
  %s18 = inlined_call_operand.vmem [shape: bf16[2,512], index: 18, kind: output, shape index: {1}]
  %19 = xla_tuple %s17, %s18
  %s20 = sld [smem:[#allocation0]]
  $region86: #{video_autoencoder_forward.7} parent=0
    _
  %s22 = ssub.s32 1, %s20
  %s23 = scalar_select 0, %s22, %s20
  $region1: #{video_autoencoder_forward.7} parent=0
    #allocation2 [shape = 'u8[1024]{0}', space=vmem, size = 0x400, scoped, tag = 'output window, operand 0, single buffered']
    #allocation3 [shape = 's32[1]{0}', space=sflag, size = 0x4, scoped, tag = 'scoped memory for video_autoencoder_forward.7']
    %24 = vsyncpa [#allocation3], 0
    // Predicated region
    $region2: #{video_autoencoder_forward.7} parent=1 // pred_check
      _
    $region3: #{video_autoencoder_forward.7} parent=1 // pred_check_branch
      %26 = sbr.rel (0) target = $region5
    $region4: #{video_autoencoder_forward.7} parent=1 // pred_region
      _
    $region5: #{video_autoencoder_forward.7} parent=1 // pred_fallthru
      _
    // Predicated region
    $region6: #{video_autoencoder_forward.7} parent=1 // pred_check
      _
    $region7: #{video_autoencoder_forward.7} parent=1 // pred_check_branch
      %28 = sbr.rel (0) target = $region9
    $region8: #{video_autoencoder_forward.7} parent=1 // pred_region
      _
    $region9: #{video_autoencoder_forward.7} parent=1 // pred_fallthru
      _
    // Predicated region
    $region10: #{video_autoencoder_forward.7} parent=1 // pred_check
      _
    $region11: #{video_autoencoder_forward.7} parent=1 // pred_check_branch
      %30 = sbr.rel (0) target = $region13
    $region12: #{video_autoencoder_forward.7} parent=1 // pred_region
      _
    $region13: #{video_autoencoder_forward.7} parent=1 // pred_fallthru
      _
    // Predicated region
    $region14: #{video_autoencoder_forward.7} parent=1 // pred_check
      _
    $region15: #{video_autoencoder_forward.7} parent=1 // pred_check_branch
      %32 = sbr.rel (0) target = $region17
    $region16: #{video_autoencoder_forward.7} parent=1 // pred_region
      _
    $region17: #{video_autoencoder_forward.7} parent=1 // pred_fallthru
      _
    // Predicated region
    $region18: #{video_autoencoder_forward.7} parent=1 // pred_check
      _
    $region19: #{video_autoencoder_forward.7} parent=1 // pred_check_branch
      %34 = sbr.rel (0) target = $region21
    $region20: #{video_autoencoder_forward.7} parent=1 // pred_region
      _
    $region21: #{video_autoencoder_forward.7} parent=1 // pred_fallthru
      _
    // Predicated region
    $region22: #{video_autoencoder_forward.7} parent=1 // pred_check
      _
    $region23: #{video_autoencoder_forward.7} parent=1 // pred_check_branch
      %36 = sbr.rel (0) target = $region25
    $region24: #{video_autoencoder_forward.7} parent=1 // pred_region
      _
    $region25: #{video_autoencoder_forward.7} parent=1 // pred_fallthru
      _
    // Predicated region
    $region26: #{video_autoencoder_forward.7} parent=1 // pred_check
      _
    $region27: #{video_autoencoder_forward.7} parent=1 // pred_check_branch
      %38 = sbr.rel (0) target = $region29
    $region28: #{video_autoencoder_forward.7} parent=1 // pred_region
      _
    $region29: #{video_autoencoder_forward.7} parent=1 // pred_fallthru
      _
    // Predicated region
    $region30: #{video_autoencoder_forward.7} parent=1 // pred_check
      _
    $region31: #{video_autoencoder_forward.7} parent=1 // pred_check_branch
      %40 = sbr.rel (0) target = $region33
    $region32: #{video_autoencoder_forward.7} parent=1 // pred_region
      _
    $region33: #{video_autoencoder_forward.7} parent=1 // pred_fallthru
      _
    // Predicated region
    $region34: #{video_autoencoder_forward.7} parent=1 // pred_check
      _
    $region35: #{video_autoencoder_forward.7} parent=1 // pred_check_branch
      %42 = sbr.rel (0) target = $region37
    $region36: #{video_autoencoder_forward.7} parent=1 // pred_region
      _
    $region37: #{video_autoencoder_forward.7} parent=1 // pred_fallthru
      _
    // Predicated region
    $region38: #{video_autoencoder_forward.7} parent=1 // pred_check
      _
    $region39: #{video_autoencoder_forward.7} parent=1 // pred_check_branch
      %44 = sbr.rel (0) target = $region41
    $region40: #{video_autoencoder_forward.7} parent=1 // pred_region
      _
    $region41: #{video_autoencoder_forward.7} parent=1 // pred_fallthru
      _
    // Predicated region
    $region42: #{video_autoencoder_forward.7} parent=1 // pred_check
      _
    $region43: #{video_autoencoder_forward.7} parent=1 // pred_check_branch
      %46 = sbr.rel (0) target = $region45
    $region44: #{video_autoencoder_forward.7} parent=1 // pred_region
      _
    $region45: #{video_autoencoder_forward.7} parent=1 // pred_fallthru
      _
    // Predicated region
    $region46: #{video_autoencoder_forward.7} parent=1 // pred_check
      _
    $region47: #{video_autoencoder_forward.7} parent=1 // pred_check_branch
      %48 = sbr.rel (0) target = $region49
    $region48: #{video_autoencoder_forward.7} parent=1 // pred_region
      _
    $region49: #{video_autoencoder_forward.7} parent=1 // pred_fallthru
      _
    // Predicated region
    $region50: #{video_autoencoder_forward.7} parent=1 // pred_check
      _
    $region51: #{video_autoencoder_forward.7} parent=1 // pred_check_branch
      %50 = sbr.rel (0) target = $region53
    $region52: #{video_autoencoder_forward.7} parent=1 // pred_region
      _
    $region53: #{video_autoencoder_forward.7} parent=1 // pred_fallthru
      _
    // Predicated region
    $region54: #{video_autoencoder_forward.7} parent=1 // pred_check
      _
    $region55: #{video_autoencoder_forward.7} parent=1 // pred_check_branch
      %52 = sbr.rel (0) target = $region57
    $region56: #{video_autoencoder_forward.7} parent=1 // pred_region
      _
    $region57: #{video_autoencoder_forward.7} parent=1 // pred_fallthru
      _
    // Predicated region
    $region58: #{video_autoencoder_forward.7} parent=1 // pred_check
      _
    $region59: #{video_autoencoder_forward.7} parent=1 // pred_check_branch
      %54 = sbr.rel (0) target = $region61
    $region60: #{video_autoencoder_forward.7} parent=1 // pred_region
      _
    $region61: #{video_autoencoder_forward.7} parent=1 // pred_fallthru
      _
    // Predicated region
    $region62: #{video_autoencoder_forward.7} parent=1 // pred_check
      _
    $region63: #{video_autoencoder_forward.7} parent=1 // pred_check_branch
      %56 = sbr.rel (0) target = $region65
    $region64: #{video_autoencoder_forward.7} parent=1 // pred_region
      _
    $region65: #{video_autoencoder_forward.7} parent=1 // pred_fallthru
      _
    // Predicated region
    $region66: #{video_autoencoder_forward.7} parent=1 // pred_check
      _
    $region67: #{video_autoencoder_forward.7} parent=1 // pred_check_branch
      %58 = sbr.rel (0) target = $region69
    $region68: #{video_autoencoder_forward.7} parent=1 // pred_region
      _
    $region69: #{video_autoencoder_forward.7} parent=1 // pred_fallthru
      _
    %v60 = vld [vmem:[%s0] sm:$0xf]
    %v61 = vld [vmem:[%s1] sm:$0xf]
    %v62 = vld [vmem:[%s1 + $0x4] sm:$0xf]
    %v63 = vld [vmem:[%s1 + $0x8] sm:$0xf]
    %v64 = vld [vmem:[%s1 + $0xc] sm:$0xf]
    %v65 = vld [vmem:[%s1 + $0x10] sm:$0xf]
    %v66 = vld [vmem:[%s1 + $0x14] sm:$0xf]
    %v67 = vld [vmem:[%s1 + $0x18] sm:$0xf]
    %v68 = vld [vmem:[%s1 + $0x1c] sm:$0xf]
    %v69 = vld [vmem:[%s1 + $0x20] sm:$0xf]
    %v70 = vld [vmem:[%s1 + $0x24] sm:$0xf]
    %v71 = vld [vmem:[%s1 + $0x28] sm:$0xf]
    %v72 = vld [vmem:[%s1 + $0x2c] sm:$0xf]
    %v73 = vld [vmem:[%s1 + $0x30] sm:$0xf]
    %v74 = vld [vmem:[%s1 + $0x34] sm:$0xf]
    %v75 = vld [vmem:[%s1 + $0x38] sm:$0xf]
    %v76 = vld [vmem:[%s1 + $0x3c] sm:$0xf]
    %v77 = vld [vmem:[%s1 + $0x40] sm:$0xf]
    %v78 = vld [vmem:[%s1 + $0x44] sm:$0xf]
    %v79 = vld [vmem:[%s1 + $0x48] sm:$0xf]
    %v80 = vld [vmem:[%s1 + $0x4c] sm:$0xf]
    %v81 = vld [vmem:[%s1 + $0x50] sm:$0xf]
    %v82 = vld [vmem:[%s1 + $0x54] sm:$0xf]
    %v83 = vld [vmem:[%s1 + $0x58] sm:$0xf]
    %v84 = vld [vmem:[%s1 + $0x5c] sm:$0xf]
    %v85 = vld [vmem:[%s1 + $0x60] sm:$0xf]
    %v86 = vld [vmem:[%s1 + $0x64] sm:$0xf]
    %v87 = vld [vmem:[%s1 + $0x68] sm:$0xf]
    %v88 = vld [vmem:[%s1 + $0x6c] sm:$0xf]
    %v89 = vld [vmem:[%s1 + $0x70] sm:$0xf]
    %v90 = vld [vmem:[%s1 + $0x74] sm:$0xf]
    %v91 = vld [vmem:[%s1 + $0x78] sm:$0xf]
    %v92 = vld [vmem:[%s1 + $0x7c] sm:$0xf]
    %v93 = vld [vmem:[%s1 + $0x80] sm:$0xf]
    %v94 = vld [vmem:[%s1 + $0x84] sm:$0xf]
    %v95 = vld [vmem:[%s1 + $0x88] sm:$0xf]
    %v96 = vld [vmem:[%s1 + $0x8c] sm:$0xf]
    %v97 = vld [vmem:[%s1 + $0x90] sm:$0xf]
    %v98 = vld [vmem:[%s1 + $0x94] sm:$0xf]
    %v99 = vld [vmem:[%s1 + $0x98] sm:$0xf]
    %v100 = vld [vmem:[%s1 + $0x9c] sm:$0xf]
    %v101 = vld [vmem:[%s1 + $0xa0] sm:$0xf]
    %v102 = vld [vmem:[%s1 + $0xa4] sm:$0xf]
    %v103 = vld [vmem:[%s1 + $0xa8] sm:$0xf]
    %v104 = vld [vmem:[%s1 + $0xac] sm:$0xf]
    %v105 = vld [vmem:[%s1 + $0xb0] sm:$0xf]
    %v106 = vld [vmem:[%s1 + $0xb4] sm:$0xf]
    %v107 = vld [vmem:[%s1 + $0xb8] sm:$0xf]
    %v108 = vld [vmem:[%s1 + $0xbc] sm:$0xf]
    %v109 = vld [vmem:[%s1 + $0xc0] sm:$0xf]
    %v110 = vld [vmem:[%s1 + $0xc4] sm:$0xf]
    %v111 = vld [vmem:[%s1 + $0xc8] sm:$0xf]
    %v112 = vld [vmem:[%s1 + $0xcc] sm:$0xf]
    %v113 = vld [vmem:[%s1 + $0xd0] sm:$0xf]
    %v114 = vld [vmem:[%s1 + $0xd4] sm:$0xf]
    %v115 = vld [vmem:[%s1 + $0xd8] sm:$0xf]
    %v116 = vld [vmem:[%s1 + $0xdc] sm:$0xf]
    %v117 = vld [vmem:[%s1 + $0xe0] sm:$0xf]
    %v118 = vld [vmem:[%s1 + $0xe4] sm:$0xf]
    %v119 = vld [vmem:[%s1 + $0xe8] sm:$0xf]
    %v120 = vld [vmem:[%s1 + $0xec] sm:$0xf]
    %v121 = vld [vmem:[%s1 + $0xf0] sm:$0xf]
    %v122 = vld [vmem:[%s1 + $0xf4] sm:$0xf]
    %v123 = vld [vmem:[%s1 + $0xf8] sm:$0xf]
    %v124 = vld [vmem:[%s1 + $0xfc] sm:$0xf]
    %v125 = vld [vmem:[%s2] sm:$0x1]
    %v127 = vlaneseq
    %v128 = vshrl.u32 %v127, 7
    %v129 = vsub.s32 0, %v128
    %v130 = vrot.slane %v125, %v129
    %v134 = vunpack.c.l.s4 1966171168
    %v135 = vunpack.c.0.s8 %v134
    %v136 = vlaneseq
    %v137 = vshrl.u32 %v136, 7
    %v138 = vsub.s32 %v135, %v137
    %v139 = vrot.slane %v60, %v138
    %v140 = vcombine.high %v139, %v139
    %v142 = vunpack.c.l.s4 1966171168
    %v143 = vunpack.c.0.s8 %v142
    %v144 = vlaneseq
    %v145 = vshrl.u32 %v144, 7
    %v146 = vsub.s32 %v143, %v145
    %v147 = vrot.slane %v139, %v146
    %v149 = vunpack.c.l.s4 1966171168
    %v150 = vunpack.c.0.s8 %v149
    %v151 = vlaneseq
    %v152 = vshrl.u32 %v151, 7
    %v153 = vsub.s32 %v150, %v152
    %v154 = vrot.slane %v140, %v153
    %v155 = vcombine.high %v147, %v147
    %v156 = vcombine.high %v154, %v154
    %v225 = vunpack.c.l.b16 %v61
    %v226 = vunpack.c.l.b16 %v62
    %v227 = vunpack.c.l.b16 %v63
    %v228 = vunpack.c.l.b16 %v64
    %v229 = vunpack.c.l.b16 %v65
    %v230 = vunpack.c.l.b16 %v66
    %v231 = vunpack.c.l.b16 %v67
    %v232 = vunpack.c.l.b16 %v68
    %v233 = vunpack.c.l.b16 %v69
    %v234 = vunpack.c.l.b16 %v70
    %v235 = vunpack.c.l.b16 %v71
    %v236 = vunpack.c.l.b16 %v72
    %v237 = vunpack.c.l.b16 %v73
    %v238 = vunpack.c.l.b16 %v74
    %v239 = vunpack.c.l.b16 %v75
    %v240 = vunpack.c.l.b16 %v76
    %v241 = vunpack.c.l.b16 %v77
    %v242 = vunpack.c.l.b16 %v78
    %v243 = vunpack.c.l.b16 %v79
    %v244 = vunpack.c.l.b16 %v80
    %v245 = vunpack.c.l.b16 %v81
    %v246 = vunpack.c.l.b16 %v82
    %v247 = vunpack.c.l.b16 %v83
    %v248 = vunpack.c.l.b16 %v84
    %v249 = vunpack.c.l.b16 %v85
    %v250 = vunpack.c.l.b16 %v86
    %v251 = vunpack.c.l.b16 %v87
    %v252 = vunpack.c.l.b16 %v88
    %v253 = vunpack.c.l.b16 %v89
    %v254 = vunpack.c.l.b16 %v90
    %v255 = vunpack.c.l.b16 %v91
    %v256 = vunpack.c.l.b16 %v92
    %v257 = vunpack.c.l.b16 %v93
    %v258 = vunpack.c.l.b16 %v94
    %v259 = vunpack.c.l.b16 %v95
    %v260 = vunpack.c.l.b16 %v96
    %v261 = vunpack.c.l.b16 %v97
    %v262 = vunpack.c.l.b16 %v98
    %v263 = vunpack.c.l.b16 %v99
    %v264 = vunpack.c.l.b16 %v100
    %v265 = vunpack.c.l.b16 %v101
    %v266 = vunpack.c.l.b16 %v102
    %v267 = vunpack.c.l.b16 %v103
    %v268 = vunpack.c.l.b16 %v104
    %v269 = vunpack.c.l.b16 %v105
    %v270 = vunpack.c.l.b16 %v106
    %v271 = vunpack.c.l.b16 %v107
    %v272 = vunpack.c.l.b16 %v108
    %v273 = vunpack.c.l.b16 %v109
    %v274 = vunpack.c.l.b16 %v110
    %v275 = vunpack.c.l.b16 %v111
    %v276 = vunpack.c.l.b16 %v112
    %v277 = vunpack.c.l.b16 %v113
    %v278 = vunpack.c.l.b16 %v114
    %v279 = vunpack.c.l.b16 %v115
    %v280 = vunpack.c.l.b16 %v116
    %v281 = vunpack.c.l.b16 %v117
    %v282 = vunpack.c.l.b16 %v118
    %v283 = vunpack.c.l.b16 %v119
    %v284 = vunpack.c.l.b16 %v120
    %v285 = vunpack.c.l.b16 %v121
    %v286 = vunpack.c.l.b16 %v122
    %v287 = vunpack.c.l.b16 %v123
    %v288 = vunpack.c.l.b16 %v124
    %v289 = vpack.c.b16 %v226, %v225
    %v290 = vpack.c.b16 %v228, %v227
    %v291 = vpack.c.b16 %v230, %v229
    %v292 = vpack.c.b16 %v232, %v231
    %v293 = vpack.c.b16 %v234, %v233
    %v294 = vpack.c.b16 %v236, %v235
    %v295 = vpack.c.b16 %v238, %v237
    %v296 = vpack.c.b16 %v240, %v239
    %v297 = vpack.c.b16 %v242, %v241
    %v298 = vpack.c.b16 %v244, %v243
    %v299 = vpack.c.b16 %v246, %v245
    %v300 = vpack.c.b16 %v248, %v247
    %v301 = vpack.c.b16 %v250, %v249
    %v302 = vpack.c.b16 %v252, %v251
    %v303 = vpack.c.b16 %v254, %v253
    %v304 = vpack.c.b16 %v256, %v255
    %v305 = vpack.c.b16 %v258, %v257
    %v306 = vpack.c.b16 %v260, %v259
    %v307 = vpack.c.b16 %v262, %v261
    %v308 = vpack.c.b16 %v264, %v263
    %v309 = vpack.c.b16 %v266, %v265
    %v310 = vpack.c.b16 %v268, %v267
    %v311 = vpack.c.b16 %v270, %v269
    %v312 = vpack.c.b16 %v272, %v271
    %v313 = vpack.c.b16 %v274, %v273
    %v314 = vpack.c.b16 %v276, %v275
    %v315 = vpack.c.b16 %v278, %v277
    %v316 = vpack.c.b16 %v280, %v279
    %v317 = vpack.c.b16 %v282, %v281
    %v318 = vpack.c.b16 %v284, %v283
    %v319 = vpack.c.b16 %v286, %v285
    %v320 = vpack.c.b16 %v288, %v287
    %353 = vmatprep.subr.bf16.mxu0 0
    %354 = vmatpush1.bf16.msra.mxu0 %v289
    %355 = vmatprep.subr.bf16.mxu0 0
    %356 = vmatpush1.bf16.msra.mxu0 %v290
    %357 = vmatprep.subr.bf16.mxu0 0
    %358 = vmatpush1.bf16.msra.mxu0 %v291
    %359 = vmatprep.subr.bf16.mxu0 0
    %360 = vmatpush1.bf16.msra.mxu0 %v292
    %361 = vmatprep.subr.bf16.mxu0 0
    %362 = vmatpush1.bf16.msra.mxu0 %v293
    %363 = vmatprep.subr.bf16.mxu0 0
    %364 = vmatpush1.bf16.msra.mxu0 %v294
    %365 = vmatprep.subr.bf16.mxu0 0
    %366 = vmatpush1.bf16.msra.mxu0 %v295
    %367 = vmatprep.subr.bf16.mxu0 0
    %368 = vmatpush1.bf16.msra.mxu0 %v296
    %369 = vmatprep.subr.bf16.mxu0 0
    %370 = vmatpush1.bf16.msra.mxu0 %v297
    %371 = vmatprep.subr.bf16.mxu0 0
    %372 = vmatpush1.bf16.msra.mxu0 %v298
    %373 = vmatprep.subr.bf16.mxu0 0
    %374 = vmatpush1.bf16.msra.mxu0 %v299
    %375 = vmatprep.subr.bf16.mxu0 0
    %376 = vmatpush1.bf16.msra.mxu0 %v300
    %377 = vmatprep.subr.bf16.mxu0 0
    %378 = vmatpush1.bf16.msra.mxu0 %v301
    %379 = vmatprep.subr.bf16.mxu0 0
    %380 = vmatpush1.bf16.msra.mxu0 %v302
    %381 = vmatprep.subr.bf16.mxu0 0
    %382 = vmatpush1.bf16.msra.mxu0 %v303
    %383 = vmatprep.subr.bf16.mxu0 0
    %384 = vmatpush1.bf16.msra.mxu0 %v304
    %385 = vmatprep.mubr.bf16.mxu0 %v154
    %386 = vmatmul.mubr.bf16.gmra.mrb[0].mxu0 %v147
    %v387 = vpop.f32.mrb[0].mxu0
    %v388 = vadd.f32 %v130, %v387
    %v389 = vpop.f32.mrb[0].mxu0
    %v390 = vpop.f32.mrb[0].mxu0
    %v391 = vpop.f32.mrb[0].mxu0
    %392 = vdwg.mxu0
    %393 = vmatprep.subr.bf16.mxu0 0
    %394 = vmatpush1.bf16.msra.mxu0 %v305
    %395 = vmatprep.subr.bf16.mxu0 0
    %396 = vmatpush1.bf16.msra.mxu0 %v306
    %397 = vmatprep.subr.bf16.mxu0 0
    %398 = vmatpush1.bf16.msra.mxu0 %v307
    %399 = vmatprep.subr.bf16.mxu0 0
    %400 = vmatpush1.bf16.msra.mxu0 %v308
    %401 = vmatprep.subr.bf16.mxu0 0
    %402 = vmatpush1.bf16.msra.mxu0 %v309
    %403 = vmatprep.subr.bf16.mxu0 0
    %404 = vmatpush1.bf16.msra.mxu0 %v310
    %405 = vmatprep.subr.bf16.mxu0 0
    %406 = vmatpush1.bf16.msra.mxu0 %v311
    %407 = vmatprep.subr.bf16.mxu0 0
    %408 = vmatpush1.bf16.msra.mxu0 %v312
    %409 = vmatprep.subr.bf16.mxu0 0
    %410 = vmatpush1.bf16.msra.mxu0 %v313
    %411 = vmatprep.subr.bf16.mxu0 0
    %412 = vmatpush1.bf16.msra.mxu0 %v314
    %413 = vmatprep.subr.bf16.mxu0 0
    %414 = vmatpush1.bf16.msra.mxu0 %v315
    %415 = vmatprep.subr.bf16.mxu0 0
    %416 = vmatpush1.bf16.msra.mxu0 %v316
    %417 = vmatprep.subr.bf16.mxu0 0
    %418 = vmatpush1.bf16.msra.mxu0 %v317
    %419 = vmatprep.subr.bf16.mxu0 0
    %420 = vmatpush1.bf16.msra.mxu0 %v318
    %421 = vmatprep.subr.bf16.mxu0 0
    %422 = vmatpush1.bf16.msra.mxu0 %v319
    %423 = vmatprep.subr.bf16.mxu0 0
    %424 = vmatpush1.bf16.msra.mxu0 %v320
    %425 = vmatprep.mubr.bf16.mxu0 %v156
    %426 = vmatmul.mubr.bf16.gmra.mrb[0].mxu0 %v155
    %v427 = vpop.f32.mrb[0].mxu0
    %v428 = vadd.f32 %v388, %v427
    %v429 = vpop.f32.mrb[0].mxu0
    %v430 = vpop.f32.mrb[0].mxu0
    %v431 = vpop.f32.mrb[0].mxu0
    %432 = vdwg.mxu0
    %v433 = vmul.f32 %v428, 0.01
    %v434 = vmax.f32 %v428, %v433
    %v435 = vpack.c.bf16 %v434, %v434
    %v436 = vld [vmem:[%s3] sm:$0xf]
    %v437 = vld [vmem:[%s3 + $0x4] sm:$0xf]
    %v438 = vld [vmem:[%s3 + $0x8] sm:$0xf]
    %v439 = vld [vmem:[%s3 + $0xc] sm:$0xf]
    %v440 = vld [vmem:[%s3 + $0x10] sm:$0xf]
    %v441 = vld [vmem:[%s3 + $0x14] sm:$0xf]
    %v442 = vld [vmem:[%s3 + $0x18] sm:$0xf]
    %v443 = vld [vmem:[%s3 + $0x1c] sm:$0xf]
    %v444 = vld [vmem:[%s3 + $0x20] sm:$0xf]
    %v445 = vld [vmem:[%s3 + $0x24] sm:$0xf]
    %v446 = vld [vmem:[%s3 + $0x28] sm:$0xf]
    %v447 = vld [vmem:[%s3 + $0x2c] sm:$0xf]
    %v448 = vld [vmem:[%s3 + $0x30] sm:$0xf]
    %v449 = vld [vmem:[%s3 + $0x34] sm:$0xf]
    %v450 = vld [vmem:[%s3 + $0x38] sm:$0xf]
    %v451 = vld [vmem:[%s3 + $0x3c] sm:$0xf]
    %v452 = vld [vmem:[%s4] sm:$0x1]
    %v454 = vlaneseq
    %v455 = vshrl.u32 %v454, 7
    %v456 = vsub.s32 0, %v455
    %v457 = vrot.slane %v452, %v456
    %v475 = vunpack.c.l.b16 %v436
    %v476 = vunpack.c.l.b16 %v437
    %v477 = vunpack.c.l.b16 %v438
    %v478 = vunpack.c.l.b16 %v439
    %v479 = vunpack.c.l.b16 %v440
    %v480 = vunpack.c.l.b16 %v441
    %v481 = vunpack.c.l.b16 %v442
    %v482 = vunpack.c.l.b16 %v443
    %v483 = vunpack.c.l.b16 %v444
    %v484 = vunpack.c.l.b16 %v445
    %v485 = vunpack.c.l.b16 %v446
    %v486 = vunpack.c.l.b16 %v447
    %v487 = vunpack.c.l.b16 %v448
    %v488 = vunpack.c.l.b16 %v449
    %v489 = vunpack.c.l.b16 %v450
    %v490 = vunpack.c.l.b16 %v451
    %v491 = vpack.c.b16 %v476, %v475
    %v492 = vpack.c.b16 %v478, %v477
    %v493 = vpack.c.b16 %v480, %v479
    %v494 = vpack.c.b16 %v482, %v481
    %v495 = vpack.c.b16 %v484, %v483
    %v496 = vpack.c.b16 %v486, %v485
    %v497 = vpack.c.b16 %v488, %v487
    %v498 = vpack.c.b16 %v490, %v489
    %507 = vmatprep.subr.bf16.mxu0 0
    %508 = vmatpush1.bf16.msra.mxu0 %v491
    %509 = vmatprep.subr.bf16.mxu0 0
    %510 = vmatpush1.bf16.msra.mxu0 %v492
    %511 = vmatprep.subr.bf16.mxu0 0
    %512 = vmatpush1.bf16.msra.mxu0 %v493
    %513 = vmatprep.subr.bf16.mxu0 0
    %514 = vmatpush1.bf16.msra.mxu0 %v494
    %515 = vmatprep.subr.bf16.mxu0 0
    %516 = vmatpush1.bf16.msra.mxu0 %v495
    %517 = vmatprep.subr.bf16.mxu0 0
    %518 = vmatpush1.bf16.msra.mxu0 %v496
    %519 = vmatprep.subr.bf16.mxu0 0
    %520 = vmatpush1.bf16.msra.mxu0 %v497
    %521 = vmatprep.subr.bf16.mxu0 0
    %522 = vmatpush1.bf16.msra.mxu0 %v498
    %523 = vmatprep.subr.bf16.mxu0 0
    %524 = vmatpush1.bf16.msra.mxu0 0
    %525 = vmatprep.subr.bf16.mxu0 0
    %526 = vmatpush1.bf16.msra.mxu0 0
    %527 = vmatprep.subr.bf16.mxu0 0
    %528 = vmatpush1.bf16.msra.mxu0 0
    %529 = vmatprep.subr.bf16.mxu0 0
    %530 = vmatpush1.bf16.msra.mxu0 0
    %531 = vmatprep.subr.bf16.mxu0 0
    %532 = vmatpush1.bf16.msra.mxu0 0
    %533 = vmatprep.subr.bf16.mxu0 0
    %534 = vmatpush1.bf16.msra.mxu0 0
    %535 = vmatprep.subr.bf16.mxu0 0
    %536 = vmatpush1.bf16.msra.mxu0 0
    %537 = vmatprep.subr.bf16.mxu0 0
    %538 = vmatpush1.bf16.msra.mxu0 0
    %539 = vmatprep.mubr.bf16.mxu0 0
    %540 = vmatmul.mubr.bf16.gmra.mrb[0].mxu0 %v435
    %v541 = vpop.f32.mrb[0].mxu0
    %v542 = vadd.f32 %v457, %v541
    %v543 = vpop.f32.mrb[0].mxu0
    %v544 = vpop.f32.mrb[0].mxu0
    %v545 = vpop.f32.mrb[0].mxu0
    %546 = vdwg.mxu0
    %v547 = vmul.f32 %v542, 0.01
    %v548 = vmax.f32 %v542, %v547
    %v549 = vpack.c.bf16 %v548, %v548
    %v550 = vld [vmem:[%s5] sm:$0xf]
    %v551 = vld [vmem:[%s5 + $0x4] sm:$0xf]
    %v552 = vld [vmem:[%s5 + $0x8] sm:$0xf]
    %v553 = vld [vmem:[%s5 + $0xc] sm:$0xf]
    %v554 = vld [vmem:[%s6] sm:$0x1]
    %v556 = vlaneseq
    %v557 = vshrl.u32 %v556, 7
    %v558 = vsub.s32 0, %v557
    %v559 = vrot.slane %v554, %v558
    %v565 = vunpack.c.l.b16 %v550
    %v566 = vunpack.c.l.b16 %v551
    %v567 = vunpack.c.l.b16 %v552
    %v568 = vunpack.c.l.b16 %v553
    %v569 = vpack.c.b16 %v566, %v565
    %v570 = vpack.c.b16 %v568, %v567
    %vm573 = vcmask 261120
    %v575 = vsel %vm573, %v549, 0
    %577 = vmatprep.subr.bf16.mxu0 0
    %578 = vmatpush1.bf16.msra.mxu0 %v569
    %579 = vmatprep.subr.bf16.mxu0 0
    %580 = vmatpush1.bf16.msra.mxu0 %v570
    %581 = vmatprep.subr.bf16.mxu0 0
    %582 = vmatpush1.bf16.msra.mxu0 0
    %583 = vmatprep.subr.bf16.mxu0 0
    %584 = vmatpush1.bf16.msra.mxu0 0
    %585 = vmatprep.subr.bf16.mxu0 0
    %586 = vmatpush1.bf16.msra.mxu0 0
    %587 = vmatprep.subr.bf16.mxu0 0
    %588 = vmatpush1.bf16.msra.mxu0 0
    %589 = vmatprep.subr.bf16.mxu0 0
    %590 = vmatpush1.bf16.msra.mxu0 0
    %591 = vmatprep.subr.bf16.mxu0 0
    %592 = vmatpush1.bf16.msra.mxu0 0
    %593 = vmatprep.subr.bf16.mxu0 0
    %594 = vmatpush1.bf16.msra.mxu0 0
    %595 = vmatprep.subr.bf16.mxu0 0
    %596 = vmatpush1.bf16.msra.mxu0 0
    %597 = vmatprep.subr.bf16.mxu0 0
    %598 = vmatpush1.bf16.msra.mxu0 0
    %599 = vmatprep.subr.bf16.mxu0 0
    %600 = vmatpush1.bf16.msra.mxu0 0
    %601 = vmatprep.subr.bf16.mxu0 0
    %602 = vmatpush1.bf16.msra.mxu0 0
    %603 = vmatprep.subr.bf16.mxu0 0
    %604 = vmatpush1.bf16.msra.mxu0 0
    %605 = vmatprep.subr.bf16.mxu0 0
    %606 = vmatpush1.bf16.msra.mxu0 0
    %607 = vmatprep.subr.bf16.mxu0 0
    %608 = vmatpush1.bf16.msra.mxu0 0
    %609 = vmatprep.mubr.bf16.mxu0 0
    %610 = vmatmul.mubr.bf16.gmra.mrb[0].mxu0 %v575
    %v611 = vpop.f32.mrb[0].mxu0
    %v612 = vadd.f32 %v559, %v611
    %v613 = vpop.f32.mrb[0].mxu0
    %v614 = vpop.f32.mrb[0].mxu0
    %v615 = vpop.f32.mrb[0].mxu0
    %616 = vdwg.mxu0
    %v617 = vmul.f32 %v612, 0.01
    %v618 = vmax.f32 %v612, %v617
    %v619 = vpack.c.bf16 %v618, %v618
    %v620 = vld [vmem:[%s7] sm:$0xf]
    %v621 = vld [vmem:[%s7 + $0x4] sm:$0xf]
    %v622 = vld [vmem:[%s7 + $0x8] sm:$0xf]
    %v623 = vld [vmem:[%s7 + $0xc] sm:$0xf]
    %v624 = vld [vmem:[%s8] sm:$0x1]
    %v626 = vlaneseq
    %v627 = vshrl.u32 %v626, 7
    %v628 = vsub.s32 0, %v627
    %v629 = vrot.slane %v624, %v628
    %v635 = vunpack.c.l.b16 %v620
    %v636 = vunpack.c.l.b16 %v621
    %v637 = vunpack.c.l.b16 %v622
    %v638 = vunpack.c.l.b16 %v623
    %v639 = vpack.c.b16 %v636, %v635
    %v640 = vpack.c.b16 %v638, %v637
    %v644 = vsel %vm573, %v619, 0
    %646 = vmatprep.subr.bf16.mxu0 0
    %647 = vmatpush1.bf16.msra.mxu0 %v639
    %648 = vmatprep.subr.bf16.mxu0 0
    %649 = vmatpush1.bf16.msra.mxu0 %v640
    %650 = vmatprep.subr.bf16.mxu0 0
    %651 = vmatpush1.bf16.msra.mxu0 0
    %652 = vmatprep.subr.bf16.mxu0 0
    %653 = vmatpush1.bf16.msra.mxu0 0
    %654 = vmatprep.subr.bf16.mxu0 0
    %655 = vmatpush1.bf16.msra.mxu0 0
    %656 = vmatprep.subr.bf16.mxu0 0
    %657 = vmatpush1.bf16.msra.mxu0 0
    %658 = vmatprep.subr.bf16.mxu0 0
    %659 = vmatpush1.bf16.msra.mxu0 0
    %660 = vmatprep.subr.bf16.mxu0 0
    %661 = vmatpush1.bf16.msra.mxu0 0
    %662 = vmatprep.subr.bf16.mxu0 0
    %663 = vmatpush1.bf16.msra.mxu0 0
    %664 = vmatprep.subr.bf16.mxu0 0
    %665 = vmatpush1.bf16.msra.mxu0 0
    %666 = vmatprep.subr.bf16.mxu0 0
    %667 = vmatpush1.bf16.msra.mxu0 0
    %668 = vmatprep.subr.bf16.mxu0 0
    %669 = vmatpush1.bf16.msra.mxu0 0
    %670 = vmatprep.subr.bf16.mxu0 0
    %671 = vmatpush1.bf16.msra.mxu0 0
    %672 = vmatprep.subr.bf16.mxu0 0
    %673 = vmatpush1.bf16.msra.mxu0 0
    %674 = vmatprep.subr.bf16.mxu0 0
    %675 = vmatpush1.bf16.msra.mxu0 0
    %676 = vmatprep.subr.bf16.mxu0 0
    %677 = vmatpush1.bf16.msra.mxu0 0
    %678 = vmatprep.mubr.bf16.mxu0 0
    %679 = vmatmul.mubr.bf16.gmra.mrb[0].mxu0 %v644
    %v680 = vpop.f32.mrb[0].mxu0
    %v681 = vadd.f32 %v629, %v680
    %v682 = vpop.f32.mrb[0].mxu0
    %v683 = vpop.f32.mrb[0].mxu0
    %v684 = vpop.f32.mrb[0].mxu0
    %685 = vdwg.mxu0
    %vm686 = vcmask 123904
    %687 = vst.msk [vmem:[#allocation2] sm:$0x3] %vm686, %v681
    %v688 = vpack.c.bf16 %v681, %v681
    %v689 = vld [vmem:[%s9] sm:$0xf]
    %v690 = vld [vmem:[%s9 + $0x4] sm:$0xf]
    %v691 = vld [vmem:[%s10] sm:$0x1]
    %v693 = vlaneseq
    %v694 = vshrl.u32 %v693, 7
    %v695 = vsub.s32 0, %v694
    %v696 = vrot.slane %v691, %v695
    %v700 = vunpack.c.l.b16 %v689
    %v701 = vunpack.c.l.b16 %v690
    %v702 = vpack.c.b16 %v701, %v700
    %vm704 = vcmask 130048
    %v706 = vsel %vm704, %v688, 0
    %708 = vmatprep.subr.bf16.mxu0 0
    %709 = vmatpush1.bf16.msra.mxu0 %v702
    %710 = vmatprep.subr.bf16.mxu0 0
    %711 = vmatpush1.bf16.msra.mxu0 0
    %712 = vmatprep.subr.bf16.mxu0 0
    %713 = vmatpush1.bf16.msra.mxu0 0
    %714 = vmatprep.subr.bf16.mxu0 0
    %715 = vmatpush1.bf16.msra.mxu0 0
    %716 = vmatprep.subr.bf16.mxu0 0
    %717 = vmatpush1.bf16.msra.mxu0 0
    %718 = vmatprep.subr.bf16.mxu0 0
    %719 = vmatpush1.bf16.msra.mxu0 0
    %720 = vmatprep.subr.bf16.mxu0 0
    %721 = vmatpush1.bf16.msra.mxu0 0
    %722 = vmatprep.subr.bf16.mxu0 0
    %723 = vmatpush1.bf16.msra.mxu0 0
    %724 = vmatprep.subr.bf16.mxu0 0
    %725 = vmatpush1.bf16.msra.mxu0 0
    %726 = vmatprep.subr.bf16.mxu0 0
    %727 = vmatpush1.bf16.msra.mxu0 0
    %728 = vmatprep.subr.bf16.mxu0 0
    %729 = vmatpush1.bf16.msra.mxu0 0
    %730 = vmatprep.subr.bf16.mxu0 0
    %731 = vmatpush1.bf16.msra.mxu0 0
    %732 = vmatprep.subr.bf16.mxu0 0
    %733 = vmatpush1.bf16.msra.mxu0 0
    %734 = vmatprep.subr.bf16.mxu0 0
    %735 = vmatpush1.bf16.msra.mxu0 0
    %736 = vmatprep.subr.bf16.mxu0 0
    %737 = vmatpush1.bf16.msra.mxu0 0
    %738 = vmatprep.subr.bf16.mxu0 0
    %739 = vmatpush1.bf16.msra.mxu0 0
    %740 = vmatprep.mubr.bf16.mxu0 0
    %741 = vmatmul.mubr.bf16.gmra.mrb[0].mxu0 %v706
    %v742 = vpop.f32.mrb[0].mxu0
    %v743 = vadd.f32 %v696, %v742
    %v744 = vpop.f32.mrb[0].mxu0
    %v745 = vpop.f32.mrb[0].mxu0
    %v746 = vpop.f32.mrb[0].mxu0
    %747 = vdwg.mxu0
    %v748 = vmul.f32 %v743, 0.01
    %v749 = vmax.f32 %v743, %v748
    %v750 = vpack.c.bf16 %v749, %v749
    %v751 = vld [vmem:[%s11] sm:$0xf]
    %v752 = vld [vmem:[%s11 + $0x4] sm:$0xf]
    %v753 = vld [vmem:[%s11 + $0x8] sm:$0xf]
    %v754 = vld [vmem:[%s11 + $0xc] sm:$0xf]
    %v755 = vld [vmem:[%s12] sm:$0x1]
    %v757 = vlaneseq
    %v758 = vshrl.u32 %v757, 7
    %v759 = vsub.s32 0, %v758
    %v760 = vrot.slane %v755, %v759
    %v766 = vunpack.c.l.b16 %v751
    %v767 = vunpack.c.l.b16 %v752
    %v768 = vunpack.c.l.b16 %v753
    %v769 = vunpack.c.l.b16 %v754
    %v770 = vpack.c.b16 %v767, %v766
    %v771 = vpack.c.b16 %v769, %v768
    %v775 = vsel %vm573, %v750, 0
    %777 = vmatprep.subr.bf16.mxu0 0
    %778 = vmatpush1.bf16.msra.mxu0 %v770
    %779 = vmatprep.subr.bf16.mxu0 0
    %780 = vmatpush1.bf16.msra.mxu0 %v771
    %781 = vmatprep.subr.bf16.mxu0 0
    %782 = vmatpush1.bf16.msra.mxu0 0
    %783 = vmatprep.subr.bf16.mxu0 0
    %784 = vmatpush1.bf16.msra.mxu0 0
    %785 = vmatprep.subr.bf16.mxu0 0
    %786 = vmatpush1.bf16.msra.mxu0 0
    %787 = vmatprep.subr.bf16.mxu0 0
    %788 = vmatpush1.bf16.msra.mxu0 0
    %789 = vmatprep.subr.bf16.mxu0 0
    %790 = vmatpush1.bf16.msra.mxu0 0
    %791 = vmatprep.subr.bf16.mxu0 0
    %792 = vmatpush1.bf16.msra.mxu0 0
    %793 = vmatprep.subr.bf16.mxu0 0
    %794 = vmatpush1.bf16.msra.mxu0 0
    %795 = vmatprep.subr.bf16.mxu0 0
    %796 = vmatpush1.bf16.msra.mxu0 0
    %797 = vmatprep.subr.bf16.mxu0 0
    %798 = vmatpush1.bf16.msra.mxu0 0
    %799 = vmatprep.subr.bf16.mxu0 0
    %800 = vmatpush1.bf16.msra.mxu0 0
    %801 = vmatprep.subr.bf16.mxu0 0
    %802 = vmatpush1.bf16.msra.mxu0 0
    %803 = vmatprep.subr.bf16.mxu0 0
    %804 = vmatpush1.bf16.msra.mxu0 0
    %805 = vmatprep.subr.bf16.mxu0 0
    %806 = vmatpush1.bf16.msra.mxu0 0
    %807 = vmatprep.subr.bf16.mxu0 0
    %808 = vmatpush1.bf16.msra.mxu0 0
    %809 = vmatprep.mubr.bf16.mxu0 0
    %810 = vmatmul.mubr.bf16.gmra.mrb[0].mxu0 %v775
    %v811 = vpop.f32.mrb[0].mxu0
    %v812 = vadd.f32 %v760, %v811
    %v813 = vpop.f32.mrb[0].mxu0
    %v814 = vpop.f32.mrb[0].mxu0
    %v815 = vpop.f32.mrb[0].mxu0
    %816 = vdwg.mxu0
    %v817 = vmul.f32 %v812, 0.01
    %v818 = vmax.f32 %v812, %v817
    %v819 = vpack.c.bf16 %v818, %v818
    %v820 = vld [vmem:[%s13] sm:$0xf]
    %v821 = vld [vmem:[%s13 + $0x4] sm:$0xf]
    %v822 = vld [vmem:[%s13 + $0x8] sm:$0xf]
    %v823 = vld [vmem:[%s13 + $0xc] sm:$0xf]
    %v824 = vld [vmem:[%s14] sm:$0x1]
    %v826 = vlaneseq
    %v827 = vshrl.u32 %v826, 7
    %v828 = vsub.s32 0, %v827
    %v829 = vrot.slane %v824, %v828
    %v835 = vunpack.c.l.b16 %v820
    %v836 = vunpack.c.l.b16 %v821
    %v837 = vunpack.c.l.b16 %v822
    %v838 = vunpack.c.l.b16 %v823
    %v839 = vpack.c.b16 %v836, %v835
    %v840 = vpack.c.b16 %v838, %v837
    %v844 = vsel %vm573, %v819, 0
    %846 = vmatprep.subr.bf16.mxu0 0
    %847 = vmatpush1.bf16.msra.mxu0 %v839
    %848 = vmatprep.subr.bf16.mxu0 0
    %849 = vmatpush1.bf16.msra.mxu0 %v840
    %850 = vmatprep.subr.bf16.mxu0 0
    %851 = vmatpush1.bf16.msra.mxu0 0
    %852 = vmatprep.subr.bf16.mxu0 0
    %853 = vmatpush1.bf16.msra.mxu0 0
    %854 = vmatprep.subr.bf16.mxu0 0
    %855 = vmatpush1.bf16.msra.mxu0 0
    %856 = vmatprep.subr.bf16.mxu0 0
    %857 = vmatpush1.bf16.msra.mxu0 0
    %858 = vmatprep.subr.bf16.mxu0 0
    %859 = vmatpush1.bf16.msra.mxu0 0
    %860 = vmatprep.subr.bf16.mxu0 0
    %861 = vmatpush1.bf16.msra.mxu0 0
    %862 = vmatprep.subr.bf16.mxu0 0
    %863 = vmatpush1.bf16.msra.mxu0 0
    %864 = vmatprep.subr.bf16.mxu0 0
    %865 = vmatpush1.bf16.msra.mxu0 0
    %866 = vmatprep.subr.bf16.mxu0 0
    %867 = vmatpush1.bf16.msra.mxu0 0
    %868 = vmatprep.subr.bf16.mxu0 0
    %869 = vmatpush1.bf16.msra.mxu0 0
    %870 = vmatprep.subr.bf16.mxu0 0
    %871 = vmatpush1.bf16.msra.mxu0 0
    %872 = vmatprep.subr.bf16.mxu0 0
    %873 = vmatpush1.bf16.msra.mxu0 0
    %874 = vmatprep.subr.bf16.mxu0 0
    %875 = vmatpush1.bf16.msra.mxu0 0
    %876 = vmatprep.subr.bf16.mxu0 0
    %877 = vmatpush1.bf16.msra.mxu0 0
    %878 = vmatprep.mubr.bf16.mxu0 0
    %879 = vmatmul.mubr.bf16.gmra.mrb[0].mxu0 %v844
    %v880 = vpop.f32.mrb[0].mxu0
    %v881 = vadd.f32 %v829, %v880
    %v882 = vpop.f32.mrb[0].mxu0
    %v883 = vpop.f32.mrb[0].mxu0
    %v884 = vpop.f32.mrb[0].mxu0
    %885 = vdwg.mxu0
    %v886 = vmul.f32 %v881, 0.01
    %v887 = vmax.f32 %v881, %v886
    %v888 = vpack.c.bf16 %v887, %v887
    %v889 = vld [vmem:[%s15] sm:$0xff]
    %v890 = vld [vmem:[%s15 + $0x8] sm:$0xff]
    %v891 = vld [vmem:[%s15 + $0x10] sm:$0xff]
    %v892 = vld [vmem:[%s15 + $0x18] sm:$0xff]
    %v893 = vld [vmem:[%s15 + $0x20] sm:$0xff]
    %v894 = vld [vmem:[%s15 + $0x28] sm:$0xff]
    %v895 = vld [vmem:[%s15 + $0x30] sm:$0xff]
    %v896 = vld [vmem:[%s15 + $0x38] sm:$0xff]
    %v897 = vld [vmem:[%s15 + $0x40] sm:$0xff]
    %v898 = vld [vmem:[%s15 + $0x48] sm:$0xff]
    %v899 = vld [vmem:[%s15 + $0x50] sm:$0xff]
    %v900 = vld [vmem:[%s15 + $0x58] sm:$0xff]
    %v901 = vld [vmem:[%s15 + $0x60] sm:$0xff]
    %v902 = vld [vmem:[%s15 + $0x68] sm:$0xff]
    %v903 = vld [vmem:[%s15 + $0x70] sm:$0xff]
    %v904 = vld [vmem:[%s15 + $0x78] sm:$0xff]
    %v905 = vld [vmem:[%s15 + $0x80] sm:$0xff]
    %v906 = vld [vmem:[%s15 + $0x88] sm:$0xff]
    %v907 = vld [vmem:[%s15 + $0x90] sm:$0xff]
    %v908 = vld [vmem:[%s15 + $0x98] sm:$0xff]
    %v909 = vld [vmem:[%s15 + $0xa0] sm:$0xff]
    %v910 = vld [vmem:[%s15 + $0xa8] sm:$0xff]
    %v911 = vld [vmem:[%s15 + $0xb0] sm:$0xff]
    %v912 = vld [vmem:[%s15 + $0xb8] sm:$0xff]
    %v913 = vld [vmem:[%s15 + $0xc0] sm:$0xff]
    %v914 = vld [vmem:[%s15 + $0xc8] sm:$0xff]
    %v915 = vld [vmem:[%s15 + $0xd0] sm:$0xff]
    %v916 = vld [vmem:[%s15 + $0xd8] sm:$0xff]
    %v917 = vld [vmem:[%s15 + $0xe0] sm:$0xff]
    %v918 = vld [vmem:[%s15 + $0xe8] sm:$0xff]
    %v919 = vld [vmem:[%s15 + $0xf0] sm:$0xff]
    %v920 = vld [vmem:[%s15 + $0xf8] sm:$0xff]
    %v921 = vld [vmem:[%s16] sm:$0xf]
    %v923 = vlaneseq
    %v924 = vshrl.u32 %v923, 7
    %v925 = vsub.s32 0, %v924
    %v926 = vrot.slane %v921, %v925
    %v927 = vlaneseq
    %v928 = vshrl.u32 %v927, 7
    %v929 = vsub.s32 1, %v928
    %v930 = vrot.slane %v921, %v929
    %v931 = vlaneseq
    %v932 = vshrl.u32 %v931, 7
    %v933 = vsub.s32 2, %v932
    %v934 = vrot.slane %v921, %v933
    %v935 = vlaneseq
    %v936 = vshrl.u32 %v935, 7
    %v937 = vsub.s32 3, %v936
    %v938 = vrot.slane %v921, %v937
    %v975 = vunpack.c.l.b16 %v889
    %v976 = vunpack.c.h.b16 %v889
    %v977 = vunpack.c.l.b16 %v890
    %v978 = vunpack.c.h.b16 %v890
    %v979 = vunpack.c.l.b16 %v891
    %v980 = vunpack.c.h.b16 %v891
    %v981 = vunpack.c.l.b16 %v892
    %v982 = vunpack.c.h.b16 %v892
    %v983 = vunpack.c.l.b16 %v893
    %v984 = vunpack.c.h.b16 %v893
    %v985 = vunpack.c.l.b16 %v894
    %v986 = vunpack.c.h.b16 %v894
    %v987 = vunpack.c.l.b16 %v895
    %v988 = vunpack.c.h.b16 %v895
    %v989 = vunpack.c.l.b16 %v896
    %v990 = vunpack.c.h.b16 %v896
    %v991 = vunpack.c.l.b16 %v897
    %v992 = vunpack.c.h.b16 %v897
    %v993 = vunpack.c.l.b16 %v898
    %v994 = vunpack.c.h.b16 %v898
    %v995 = vunpack.c.l.b16 %v899
    %v996 = vunpack.c.h.b16 %v899
    %v997 = vunpack.c.l.b16 %v900
    %v998 = vunpack.c.h.b16 %v900
    %v999 = vunpack.c.l.b16 %v901
    %v1000 = vunpack.c.h.b16 %v901
    %v1001 = vunpack.c.l.b16 %v902
    %v1002 = vunpack.c.h.b16 %v902
    %v1003 = vunpack.c.l.b16 %v903
    %v1004 = vunpack.c.h.b16 %v903
    %v1005 = vunpack.c.l.b16 %v904
    %v1006 = vunpack.c.h.b16 %v904
    %v1007 = vunpack.c.l.b16 %v905
    %v1008 = vunpack.c.h.b16 %v905
    %v1009 = vunpack.c.l.b16 %v906
    %v1010 = vunpack.c.h.b16 %v906
    %v1011 = vunpack.c.l.b16 %v907
    %v1012 = vunpack.c.h.b16 %v907
    %v1013 = vunpack.c.l.b16 %v908
    %v1014 = vunpack.c.h.b16 %v908
    %v1015 = vunpack.c.l.b16 %v909
    %v1016 = vunpack.c.h.b16 %v909
    %v1017 = vunpack.c.l.b16 %v910
    %v1018 = vunpack.c.h.b16 %v910
    %v1019 = vunpack.c.l.b16 %v911
    %v1020 = vunpack.c.h.b16 %v911
    %v1021 = vunpack.c.l.b16 %v912
    %v1022 = vunpack.c.h.b16 %v912
    %v1023 = vunpack.c.l.b16 %v913
    %v1024 = vunpack.c.h.b16 %v913
    %v1025 = vunpack.c.l.b16 %v914
    %v1026 = vunpack.c.h.b16 %v914
    %v1027 = vunpack.c.l.b16 %v915
    %v1028 = vunpack.c.h.b16 %v915
    %v1029 = vunpack.c.l.b16 %v916
    %v1030 = vunpack.c.h.b16 %v916
    %v1031 = vunpack.c.l.b16 %v917
    %v1032 = vunpack.c.h.b16 %v917
    %v1033 = vunpack.c.l.b16 %v918
    %v1034 = vunpack.c.h.b16 %v918
    %v1035 = vunpack.c.l.b16 %v919
    %v1036 = vunpack.c.h.b16 %v919
    %v1037 = vunpack.c.l.b16 %v920
    %v1038 = vunpack.c.h.b16 %v920
    %v1039 = vpack.c.b16 %v979, %v975
    %v1040 = vpack.c.b16 %v980, %v976
    %v1041 = vpack.c.b16 %v981, %v977
    %v1042 = vpack.c.b16 %v982, %v978
    %v1043 = vpack.c.b16 %v987, %v983
    %v1044 = vpack.c.b16 %v988, %v984
    %v1045 = vpack.c.b16 %v989, %v985
    %v1046 = vpack.c.b16 %v990, %v986
    %v1047 = vpack.c.b16 %v995, %v991
    %v1048 = vpack.c.b16 %v996, %v992
    %v1049 = vpack.c.b16 %v997, %v993
    %v1050 = vpack.c.b16 %v998, %v994
    %v1051 = vpack.c.b16 %v1003, %v999
    %v1052 = vpack.c.b16 %v1004, %v1000
    %v1053 = vpack.c.b16 %v1005, %v1001
    %v1054 = vpack.c.b16 %v1006, %v1002
    %v1055 = vpack.c.b16 %v1011, %v1007
    %v1056 = vpack.c.b16 %v1012, %v1008
    %v1057 = vpack.c.b16 %v1013, %v1009
    %v1058 = vpack.c.b16 %v1014, %v1010
    %v1059 = vpack.c.b16 %v1019, %v1015
    %v1060 = vpack.c.b16 %v1020, %v1016
    %v1061 = vpack.c.b16 %v1021, %v1017
    %v1062 = vpack.c.b16 %v1022, %v1018
    %v1063 = vpack.c.b16 %v1027, %v1023
    %v1064 = vpack.c.b16 %v1028, %v1024
    %v1065 = vpack.c.b16 %v1029, %v1025
    %v1066 = vpack.c.b16 %v1030, %v1026
    %v1067 = vpack.c.b16 %v1035, %v1031
    %v1068 = vpack.c.b16 %v1036, %v1032
    %v1069 = vpack.c.b16 %v1037, %v1033
    %v1070 = vpack.c.b16 %v1038, %v1034
    %1103 = vmatprep.subr.bf16.mxu0 %v1040
    %1104 = vmatpush1.bf16.msra.mxu0 %v1039
    %1105 = vmatprep.subr.bf16.mxu0 %v1044
    %1106 = vmatpush1.bf16.msra.mxu0 %v1043
    %1107 = vmatprep.subr.bf16.mxu0 %v1048
    %1108 = vmatpush1.bf16.msra.mxu0 %v1047
    %1109 = vmatprep.subr.bf16.mxu0 %v1052
    %1110 = vmatpush1.bf16.msra.mxu0 %v1051
    %1111 = vmatprep.subr.bf16.mxu0 %v1056
    %1112 = vmatpush1.bf16.msra.mxu0 %v1055
    %1113 = vmatprep.subr.bf16.mxu0 %v1060
    %1114 = vmatpush1.bf16.msra.mxu0 %v1059
    %1115 = vmatprep.subr.bf16.mxu0 %v1064
    %1116 = vmatpush1.bf16.msra.mxu0 %v1063
    %1117 = vmatprep.subr.bf16.mxu0 %v1068
    %1118 = vmatpush1.bf16.msra.mxu0 %v1067
    %1119 = vmatprep.subr.bf16.mxu0 0
    %1120 = vmatpush1.bf16.msra.mxu0 0
    %1121 = vmatprep.subr.bf16.mxu0 0
    %1122 = vmatpush1.bf16.msra.mxu0 0
    %1123 = vmatprep.subr.bf16.mxu0 0
    %1124 = vmatpush1.bf16.msra.mxu0 0
    %1125 = vmatprep.subr.bf16.mxu0 0
    %1126 = vmatpush1.bf16.msra.mxu0 0
    %1127 = vmatprep.subr.bf16.mxu0 0
    %1128 = vmatpush1.bf16.msra.mxu0 0
    %1129 = vmatprep.subr.bf16.mxu0 0
    %1130 = vmatpush1.bf16.msra.mxu0 0
    %1131 = vmatprep.subr.bf16.mxu0 0
    %1132 = vmatpush1.bf16.msra.mxu0 0
    %1133 = vmatprep.subr.bf16.mxu0 0
    %1134 = vmatpush1.bf16.msra.mxu0 0
    %1135 = vmatprep.mubr.bf16.mxu0 0
    %1136 = vmatmul.mubr.bf16.gmra.mrb[0].mxu0 %v888
    %v1137 = vpop.f32.mrb[0].mxu0
    %v1138 = vadd.f32 %v926, %v1137
    %v1139 = vpop.f32.mrb[0].mxu0
    %v1140 = vadd.f32 %v930, %v1139
    %v1141 = vpop.f32.mrb[0].mxu0
    %v1142 = vpop.f32.mrb[0].mxu0
    %1143 = vdwg.mxu0
    %1144 = vmatprep.subr.bf16.mxu0 %v1042
    %1145 = vmatpush1.bf16.msra.mxu0 %v1041
    %1146 = vmatprep.subr.bf16.mxu0 %v1046
    %1147 = vmatpush1.bf16.msra.mxu0 %v1045
    %1148 = vmatprep.subr.bf16.mxu0 %v1050
    %1149 = vmatpush1.bf16.msra.mxu0 %v1049
    %1150 = vmatprep.subr.bf16.mxu0 %v1054
    %1151 = vmatpush1.bf16.msra.mxu0 %v1053
    %1152 = vmatprep.subr.bf16.mxu0 %v1058
    %1153 = vmatpush1.bf16.msra.mxu0 %v1057
    %1154 = vmatprep.subr.bf16.mxu0 %v1062
    %1155 = vmatpush1.bf16.msra.mxu0 %v1061
    %1156 = vmatprep.subr.bf16.mxu0 %v1066
    %1157 = vmatpush1.bf16.msra.mxu0 %v1065
    %1158 = vmatprep.subr.bf16.mxu0 %v1070
    %1159 = vmatpush1.bf16.msra.mxu0 %v1069
    %1160 = vmatprep.subr.bf16.mxu0 0
    %1161 = vmatpush1.bf16.msra.mxu0 0
    %1162 = vmatprep.subr.bf16.mxu0 0
    %1163 = vmatpush1.bf16.msra.mxu0 0
    %1164 = vmatprep.subr.bf16.mxu0 0
    %1165 = vmatpush1.bf16.msra.mxu0 0
    %1166 = vmatprep.subr.bf16.mxu0 0
    %1167 = vmatpush1.bf16.msra.mxu0 0
    %1168 = vmatprep.subr.bf16.mxu0 0
    %1169 = vmatpush1.bf16.msra.mxu0 0
    %1170 = vmatprep.subr.bf16.mxu0 0
    %1171 = vmatpush1.bf16.msra.mxu0 0
    %1172 = vmatprep.subr.bf16.mxu0 0
    %1173 = vmatpush1.bf16.msra.mxu0 0
    %1174 = vmatprep.subr.bf16.mxu0 0
    %1175 = vmatpush1.bf16.msra.mxu0 0
    %1176 = vmatprep.mubr.bf16.mxu0 0
    %1177 = vmatmul.mubr.bf16.gmra.mrb[0].mxu0 %v888
    %v1178 = vpop.f32.mrb[0].mxu0
    %v1179 = vadd.f32 %v934, %v1178
    %v1180 = vpop.f32.mrb[0].mxu0
    %v1181 = vadd.f32 %v938, %v1180
    %v1182 = vpop.f32.mrb[0].mxu0
    %v1183 = vpop.f32.mrb[0].mxu0
    %1184 = vdwg.mxu0
    %v1185 = vmul.f32 %v1138, 0.01
    %v1186 = vmul.f32 %v1140, 0.01
    %v1187 = vmul.f32 %v1179, 0.01
    %v1188 = vmul.f32 %v1181, 0.01
    %v1189 = vmax.f32 %v1138, %v1185
    %v1190 = vmax.f32 %v1140, %v1186
    %v1191 = vmax.f32 %v1179, %v1187
    %v1192 = vmax.f32 %v1181, %v1188
    %v1193 = vpack.c.bf16 %v1189, %v1189
    %v1194 = vpack.c.bf16 %v1190, %v1190
    %v1195 = vpack.c.bf16 %v1191, %v1191
    %v1196 = vpack.c.bf16 %v1192, %v1192
    %v1201 = vcombine.low %v1193, %v1194
    %v1202 = vcombine.low %v1195, %v1196
    %v1204 = vunpack.c.l.s4 1966171168
    %v1205 = vunpack.c.0.s8 %v1204
    %v1206 = vlaneseq
    %v1207 = vshrl.u32 %v1206, 7
    %v1208 = vsub.s32 %v1205, %v1207
    %v1209 = vrot.slane %v1201, %v1208
    %v1211 = vunpack.c.l.s4 1966171168
    %v1212 = vunpack.c.0.s8 %v1211
    %v1213 = vlaneseq
    %v1214 = vshrl.u32 %v1213, 7
    %v1215 = vsub.s32 %v1212, %v1214
    %v1216 = vrot.slane %v1202, %v1215
    %v1217 = vcombine.low %v1209, %v1216
    %v1219 = vunpack.c.l.s4 1966171168
    %v1220 = vunpack.c.0.s8 %v1219
    %v1221 = vlaneseq
    %v1222 = vshrl.u32 %v1221, 7
    %v1223 = vsub.s32 %v1220, %v1222
    %v1224 = vrot.slane %v1217, %v1223
    %1226 = vst [vmem:[%s18] sm:$0xf] %v1224
    // Predicated region
    $region70: #{video_autoencoder_forward.7} parent=1 // pred_check
      _
    $region71: #{video_autoencoder_forward.7} parent=1 // pred_check_branch
      %1228 = sbr.rel (0) target = $region73
    $region72: #{video_autoencoder_forward.7} parent=1 // pred_region
      %s1230 = ssub.s32 32, 32
      %1231 = vsyncadd [#allocation3], %s1230
      %s1233 = sshll.u32 [#allocation2], 4
      %s1234 = int_to_ptr.vmem [resolvable:$true] %s1233
      %1236 = dma.vmem_to_hbm [thread:$0]  %s1234, 32, %s17, [#allocation3]
    $region73: #{video_autoencoder_forward.7} parent=1 // pred_fallthru
      _
    // Predicated region
    $region74: #{video_autoencoder_forward.7} parent=1 // pred_check
      _
    $region75: #{video_autoencoder_forward.7} parent=1 // pred_check_branch
      %1238 = sbr.rel (0) target = $region77
    $region76: #{video_autoencoder_forward.7} parent=1 // pred_region
      _
    $region77: #{video_autoencoder_forward.7} parent=1 // pred_fallthru
      _
    // Predicated region
    $region78: #{video_autoencoder_forward.7} parent=1 // pred_check
      _
    $region79: #{video_autoencoder_forward.7} parent=1 // pred_check_branch
      %1240 = sbr.rel (0) target = $region81
    $region80: #{video_autoencoder_forward.7} parent=1 // pred_region
      %1241 = dma.done [#allocation3], 32
    $region81: #{video_autoencoder_forward.7} parent=1 // pred_fallthru
      _
    // Predicated region
    $region82: #{video_autoencoder_forward.7} parent=1 // pred_check
      _
    $region83: #{video_autoencoder_forward.7} parent=1 // pred_check_branch
      %1243 = sbr.rel (0) target = $region85
    $region84: #{video_autoencoder_forward.7} parent=1 // pred_region
      _
    $region85: #{video_autoencoder_forward.7} parent=1 // pred_fallthru
      _
    %1244 = vsyncpa [#allocation3], 1

// kernel: video_autoencoder_forward.8
$region0: #{video_autoencoder_forward.8}
  #allocation0 [shape = 'u32[]', space=smem, size = 0x4, offset = 0x4, fixed_abs, tag = 'smem constant byte address 0x4 - core index']
  #allocation1 [shape = 'u32[144,128]{1,0:T(1,128)}', space=vmem, size = 0x12000, scoped, tag = 'internal scratch']
  %s0 = inlined_call_operand.vmem [shape: bf16[32,216], index: 0, kind: input, shape index: {}]
  %s1 = inlined_call_operand.vmem [shape: bf16[216,128], index: 1, kind: input, shape index: {}]
  %s2 = inlined_call_operand.vmem [shape: f32[32,1], index: 2, kind: input, shape index: {}]
  %s3 = inlined_call_operand.vmem [shape: bf16[32,128], index: 3, kind: output, shape index: {}]
  %s4 = sld [smem:[#allocation0]]
  $region22: #{video_autoencoder_forward.8} parent=0
    _
  %s6 = ssub.s32 1, %s4
  %s7 = scalar_select 0, %s6, %s4
  // Predicated region
  $region2: #{video_autoencoder_forward.8} parent=0 // pred_check
    _
  $region3: #{video_autoencoder_forward.8} parent=0 // pred_check_branch
    %9 = sbr.rel (0) target = $region5
  $region4: #{video_autoencoder_forward.8} parent=0 // pred_region
    _
  $region5: #{video_autoencoder_forward.8} parent=0 // pred_fallthru
    _
  // Predicated region
  $region6: #{video_autoencoder_forward.8} parent=0 // pred_check
    _
  $region7: #{video_autoencoder_forward.8} parent=0 // pred_check_branch
    %11 = sbr.rel (0) target = $region9
  $region8: #{video_autoencoder_forward.8} parent=0 // pred_region
    _
  $region9: #{video_autoencoder_forward.8} parent=0 // pred_fallthru
    _
  // Predicated region
  $region10: #{video_autoencoder_forward.8} parent=0 // pred_check
    _
  $region11: #{video_autoencoder_forward.8} parent=0 // pred_check_branch
    %13 = sbr.rel (0) target = $region13
  $region12: #{video_autoencoder_forward.8} parent=0 // pred_region
    _
  $region13: #{video_autoencoder_forward.8} parent=0 // pred_fallthru
    _
  %v15 = vld [vmem:[%s0] sm:$0xff]
  %v16 = vld [vmem:[%s0 + $0x8] sm:$0xff]
  %v17 = vld [vmem:[%s0 + $0x10] sm:$0xff]
  %v18 = vld [vmem:[%s0 + $0x18] sm:$0xff]
  %v19 = vld [vmem:[%s1] sm:$0xf]
  %v20 = vld [vmem:[%s1 + $0x4] sm:$0xf]
  %v21 = vld [vmem:[%s1 + $0x8] sm:$0xf]
  %v22 = vld [vmem:[%s1 + $0xc] sm:$0xf]
  %v23 = vld [vmem:[%s1 + $0x10] sm:$0xf]
  %v24 = vld [vmem:[%s1 + $0x14] sm:$0xf]
  %v25 = vld [vmem:[%s1 + $0x18] sm:$0xf]
  %v26 = vld [vmem:[%s1 + $0x1c] sm:$0xf]
  %v27 = vld [vmem:[%s1 + $0x20] sm:$0xf]
  %v28 = vld [vmem:[%s1 + $0x24] sm:$0xf]
  %v29 = vld [vmem:[%s1 + $0x28] sm:$0xf]
  %v30 = vld [vmem:[%s1 + $0x2c] sm:$0xf]
  %v31 = vld [vmem:[%s1 + $0x30] sm:$0xf]
  %v32 = vld [vmem:[%s1 + $0x34] sm:$0xf]
  %v33 = vld [vmem:[%s1 + $0x38] sm:$0xf]
  %v34 = vld [vmem:[%s1 + $0x3c] sm:$0xf]
  %v35 = vld [vmem:[%s1 + $0x40] sm:$0xf]
  %v36 = vld [vmem:[%s1 + $0x44] sm:$0xf]
  %v37 = vld [vmem:[%s1 + $0x48] sm:$0xf]
  %v38 = vld [vmem:[%s1 + $0x4c] sm:$0xf]
  %v39 = vld [vmem:[%s1 + $0x50] sm:$0xf]
  %v40 = vld [vmem:[%s1 + $0x54] sm:$0xf]
  %v41 = vld [vmem:[%s1 + $0x58] sm:$0xf]
  %v42 = vld [vmem:[%s1 + $0x5c] sm:$0xf]
  %v43 = vld [vmem:[%s1 + $0x60] sm:$0xf]
  %v44 = vld [vmem:[%s1 + $0x64] sm:$0xf]
  %v45 = vld [vmem:[%s1 + $0x68] sm:$0xf]
  %v46 = vld [vmem:[%s2] sm:$0xff]
  %v47 = vld [vmem:[%s2 + $0x8] sm:$0xff]
  %v48 = vld [vmem:[%s2 + $0x10] sm:$0xff]
  %v49 = vld [vmem:[%s2 + $0x18] sm:$0xff]
  %51 = vset.pattern.permute.xlu0 0
  %52 = vperm.xlu0 %51, %v46
  %v53 = vpop.permute.xlu0 %52
  %56 = vset.pattern.permute.xlu0 0
  %57 = vperm.xlu0 %56, %v47
  %v58 = vpop.permute.xlu0 %57
  %61 = vset.pattern.permute.xlu0 0
  %62 = vperm.xlu0 %61, %v48
  %v63 = vpop.permute.xlu0 %62
  %66 = vset.pattern.permute.xlu0 0
  %67 = vperm.xlu0 %66, %v49
  %v68 = vpop.permute.xlu0 %67
  %v74 = vunpack.c.l.b16 %v15
  %v75 = vunpack.c.h.b16 %v15
  %v76 = vunpack.c.l.b16 %v16
  %v77 = vunpack.c.h.b16 %v16
  %v78 = vunpack.c.l.b16 %v17
  %v79 = vunpack.c.h.b16 %v17
  %v80 = vunpack.c.l.b16 %v18
  %v81 = vunpack.c.h.b16 %v18
  %v82 = vpack.c.b16 %v76, %v74
  %v83 = vpack.c.b16 %v77, %v75
  %v84 = vpack.c.b16 %v80, %v78
  %v85 = vpack.c.b16 %v81, %v79
  %v115 = vunpack.c.l.b16 %v19
  %v116 = vunpack.c.l.b16 %v20
  %v117 = vunpack.c.l.b16 %v21
  %v118 = vunpack.c.l.b16 %v22
  %v119 = vunpack.c.l.b16 %v23
  %v120 = vunpack.c.l.b16 %v24
  %v121 = vunpack.c.l.b16 %v25
  %v122 = vunpack.c.l.b16 %v26
  %v123 = vunpack.c.l.b16 %v27
  %v124 = vunpack.c.l.b16 %v28
  %v125 = vunpack.c.l.b16 %v29
  %v126 = vunpack.c.l.b16 %v30
  %v127 = vunpack.c.l.b16 %v31
  %v128 = vunpack.c.l.b16 %v32
  %v129 = vunpack.c.l.b16 %v33
  %v130 = vunpack.c.l.b16 %v34
  %v131 = vunpack.c.l.b16 %v35
  %v132 = vunpack.c.l.b16 %v36
  %v133 = vunpack.c.l.b16 %v37
  %v134 = vunpack.c.l.b16 %v38
  %v135 = vunpack.c.l.b16 %v39
  %v136 = vunpack.c.l.b16 %v40
  %v137 = vunpack.c.l.b16 %v41
  %v138 = vunpack.c.l.b16 %v42
  %v139 = vunpack.c.l.b16 %v43
  %v140 = vunpack.c.l.b16 %v44
  %v141 = vunpack.c.l.b16 %v45
  %v142 = vpack.c.b16 %v116, %v115
  %v143 = vpack.c.b16 %v118, %v117
  %v144 = vpack.c.b16 %v120, %v119
  %v145 = vpack.c.b16 %v122, %v121
  %v146 = vpack.c.b16 %v124, %v123
  %v147 = vpack.c.b16 %v126, %v125
  %v148 = vpack.c.b16 %v128, %v127
  %v149 = vpack.c.b16 %v130, %v129
  %v150 = vpack.c.b16 %v132, %v131
  %v151 = vpack.c.b16 %v134, %v133
  %v152 = vpack.c.b16 %v136, %v135
  %v153 = vpack.c.b16 %v138, %v137
  %v154 = vpack.c.b16 %v140, %v139
  %v155 = vpack.c.b16 %v141, %v141
  %vm169 = vcmask 719872
  %v171 = vsel %vm169, %v83, 0
  %v174 = vsel %vm169, %v85, 0
  %vm176 = vcmask 1043456
  %v178 = vsel %vm176, %v155, 0
  %180 = vmatprep.subr.bf16.mxu0 0
  %181 = vmatpush1.bf16.msra.mxu0 %v142
  %182 = vmatprep.subr.bf16.mxu0 0
  %183 = vmatpush1.bf16.msra.mxu0 %v143
  %184 = vmatprep.subr.bf16.mxu0 0
  %185 = vmatpush1.bf16.msra.mxu0 %v144
  %186 = vmatprep.subr.bf16.mxu0 0
  %187 = vmatpush1.bf16.msra.mxu0 %v145
  %188 = vmatprep.subr.bf16.mxu0 0
  %189 = vmatpush1.bf16.msra.mxu0 %v146
  %190 = vmatprep.subr.bf16.mxu0 0
  %191 = vmatpush1.bf16.msra.mxu0 %v147
  %192 = vmatprep.subr.bf16.mxu0 0
  %193 = vmatpush1.bf16.msra.mxu0 %v148
  %194 = vmatprep.subr.bf16.mxu0 0
  %195 = vmatpush1.bf16.msra.mxu0 %v149
  %196 = vmatprep.subr.bf16.mxu0 0
  %197 = vmatpush1.bf16.msra.mxu0 %v150
  %198 = vmatprep.subr.bf16.mxu0 0
  %199 = vmatpush1.bf16.msra.mxu0 %v151
  %200 = vmatprep.subr.bf16.mxu0 0
  %201 = vmatpush1.bf16.msra.mxu0 %v152
  %202 = vmatprep.subr.bf16.mxu0 0
  %203 = vmatpush1.bf16.msra.mxu0 %v153
  %204 = vmatprep.subr.bf16.mxu0 0
  %205 = vmatpush1.bf16.msra.mxu0 %v154
  %206 = vmatprep.subr.bf16.mxu0 0
  %207 = vmatpush1.bf16.msra.mxu0 %v178
  %208 = vmatprep.subr.bf16.mxu0 0
  %209 = vmatpush1.bf16.msra.mxu0 0
  %210 = vmatprep.subr.bf16.mxu0 0
  %211 = vmatpush1.bf16.msra.mxu0 0
  %212 = vmatprep.mubr.bf16.mxu0 %v171
  %213 = vmatmul.mubr.bf16.gmra.mrb[0].mxu0 %v82
  %v214 = vpop.f32.mrb[0].mxu0
  %v215 = vadd.f32 %v53, %v214
  %v216 = vpop.f32.mrb[0].mxu0
  %v217 = vpop.f32.mrb[0].mxu0
  %v218 = vadd.f32 %v58, %v217
  %v219 = vpop.f32.mrb[0].mxu0
  %220 = vmatprep.mubr.bf16.mxu0 %v174
  %221 = vmatmul.mubr.bf16.gmra.mrb[0].mxu0 %v84
  %v222 = vpop.f32.mrb[0].mxu0
  %v223 = vadd.f32 %v63, %v222
  %v224 = vpop.f32.mrb[0].mxu0
  %v225 = vpop.f32.mrb[0].mxu0
  %v226 = vadd.f32 %v68, %v225
  %v227 = vpop.f32.mrb[0].mxu0
  %228 = vdwg.mxu0
  %v229 = vmul.f32 %v215, 0.01
  %v230 = vmul.f32 %v218, 0.01
  %v231 = vmul.f32 %v223, 0.01
  %v232 = vmul.f32 %v226, 0.01
  %v233 = vmax.f32 %v215, %v229
  %v234 = vmax.f32 %v218, %v230
  %v235 = vmax.f32 %v223, %v231
  %v236 = vmax.f32 %v226, %v232
  %v237 = vpack.c.bf16 %v234, %v233
  %v238 = vpack.c.bf16 %v236, %v235
  %v241 = vunpack.c.l.b16 %v237
  %v242 = vunpack.c.h.b16 %v237
  %v243 = vunpack.c.l.b16 %v238
  %v244 = vunpack.c.h.b16 %v238
  %v245 = vpack.c.b16 %v241, %v241
  %v246 = vpack.c.b16 %v242, %v242
  %v247 = vpack.c.b16 %v243, %v243
  %v248 = vpack.c.b16 %v244, %v244
  %253 = vst [vmem:[%s3] sm:$0xf] %v245
  %254 = vst [vmem:[%s3 + $0x4] sm:$0xf] %v246
  %255 = vst [vmem:[%s3 + $0x8] sm:$0xf] %v247
  %256 = vst [vmem:[%s3 + $0xc] sm:$0xf] %v248
  // Predicated region
  $region14: #{video_autoencoder_forward.8} parent=0 // pred_check
    _
  $region15: #{video_autoencoder_forward.8} parent=0 // pred_check_branch
    %258 = sbr.rel (0) target = $region17
  $region16: #{video_autoencoder_forward.8} parent=0 // pred_region
    _
  $region17: #{video_autoencoder_forward.8} parent=0 // pred_fallthru
    _
  // Predicated region
  $region18: #{video_autoencoder_forward.8} parent=0 // pred_check
    _
  $region19: #{video_autoencoder_forward.8} parent=0 // pred_check_branch
    %260 = sbr.rel (0) target = $region21
  $region20: #{video_autoencoder_forward.8} parent=0 // pred_region
    _
  $region21: #{video_autoencoder_forward.8} parent=0 // pred_fallthru
    _

// kernel: video_autoencoder_forward.9
$region0: #{video_autoencoder_forward.9}
  #allocation0 [shape = 'u32[]', space=smem, size = 0x4, offset = 0x4, fixed_abs, tag = 'smem constant byte address 0x4 - core index']
  #allocation1 [shape = 'u32[144,128]{1,0:T(1,128)}', space=vmem, size = 0x12000, scoped, tag = 'internal scratch']
  %s0 = inlined_call_operand.vmem [shape: bf16[24,108], index: 0, kind: input, shape index: {}]
  %s1 = inlined_call_operand.vmem [shape: bf16[108,1024], index: 1, kind: input, shape index: {}]
  %s2 = inlined_call_operand.vmem [shape: f32[24,1], index: 2, kind: input, shape index: {}]
  %s3 = inlined_call_operand.vmem [shape: f32[24,1024], index: 3, kind: output, shape index: {}]
  %s4 = sld [smem:[#allocation0]]
  $region87: #{video_autoencoder_forward.9} parent=0
    _
  %s6 = ssub.s32 1, %s4
  %s7 = scalar_select 0, %s6, %s4
  $region1: #{video_autoencoder_forward.9} parent=0
    #allocation2 [shape = 'u8[229376]{0}', space=vmem, size = 0x38000, scoped, tag = 'input window, operand 1']
    #allocation3 [shape = 'u8[98304]{0}', space=vmem, size = 0x18000, scoped, tag = 'output window, operand 0']
    loop: start=0, step=1, limit=4
    $region2: #{video_autoencoder_forward.9} parent=1 // loop_pre_header
      _
    $region3: #{video_autoencoder_forward.9} parent=1 // loop_header
      %s9 = sphi 0, %s13
      %p10 = scmp.ge.s32.totalorder %s9, 4
      %s17 = sphi 0, %s17
      %s19 = sphi 0, %s17
      %s20 = sphi 0, %s19
      %s34 = sphi 0, %s20
      %s40 = sphi 0, %s42
      %s43 = sphi 0, %s40
      %s44 = sphi 0, %s43
      %s60 = sphi 0, %s44
      %s64 = sphi 0, %s64
      %s66 = sphi 0, %s64
      %s67 = sphi 0, %s66
      %s81 = sphi 0, %s67
      %s87 = sphi 0, %s89
      %s90 = sphi 0, %s87
      %s91 = sphi 0, %s90
      %s107 = sphi 0, %s91
    $region4: #{video_autoencoder_forward.9} parent=1 // loop_header_branch
      %12 = sbr.rel (%p10) target = $region8
    $region5: #{video_autoencoder_forward.9} parent=1 // loop_body
      %s14 = ssub.s32 %s9, 1
      %s15 = ssub.s32 %s9, 2
      %s16 = sadd.s32 %s9, 1
      %s18 = sadd.s32 %s17, 1
      %p21 = scmp.eq.s32.totalorder %s9, 1
      %p22 = scmp.ne.s32.totalorder %s17, %s19
      %p23 = scmp.eq.s32.totalorder %s9, 0
      %p24 = por %p22, %p23
      %p25 = scmp.ne.s32.totalorder %s17, %s19
      %p26 = scmp.eq.s32.totalorder %s14, 1
      %p27 = por %p25, %p26
      %p28 = scmp.ne.s32.totalorder %s19, %s20
      %p29 = scmp.eq.s32.totalorder %s14, 0
      %p30 = por %p28, %p29
      %p31 = scmp.ne.s32.totalorder %s19, %s20
      %p32 = scmp.eq.s32.totalorder %s15, 1
      %p33 = por %p31, %p32
      %p35 = scmp.ne.s32.totalorder %s20, %s34
      %p36 = scmp.eq.s32.totalorder %s15, 0
      %p37 = por %p35, %p36
      %s38 = ssub.s32 %s9, %s16
      %p39 = scmp.eq.s32.totalorder %s38, 0
      %s41 = sadd.s32 %s40, 1
      %s42 = scalar_select %p39, %s40, %s41
      %p45 = pneg %p39
      %p46 = scmp.eq.s32.totalorder %s9, 1
      %p47 = por %p45, %p46
      %p48 = scmp.ne.s32.totalorder %s40, %s43
      %p49 = scmp.eq.s32.totalorder %s9, 0
      %p50 = por %p48, %p49
      %p51 = scmp.ne.s32.totalorder %s40, %s43
      %p52 = scmp.eq.s32.totalorder %s14, 1
      %p53 = por %p51, %p52
      %p54 = scmp.ne.s32.totalorder %s43, %s44
      %p55 = scmp.eq.s32.totalorder %s14, 0
      %p56 = por %p54, %p55
      %p57 = scmp.ne.s32.totalorder %s43, %s44
      %p58 = scmp.eq.s32.totalorder %s15, 1
      %p59 = por %p57, %p58
      %p61 = scmp.ne.s32.totalorder %s44, %s60
      %p62 = scmp.eq.s32.totalorder %s15, 0
      %p63 = por %p61, %p62
      %s65 = sadd.s32 %s64, 1
      %p68 = scmp.eq.s32.totalorder %s9, 1
      %p69 = scmp.ne.s32.totalorder %s64, %s66
      %p70 = scmp.eq.s32.totalorder %s9, 0
      %p71 = por %p69, %p70
      %p72 = scmp.ne.s32.totalorder %s64, %s66
      %p73 = scmp.eq.s32.totalorder %s14, 1
      %p74 = por %p72, %p73
      %p75 = scmp.ne.s32.totalorder %s66, %s67
      %p76 = scmp.eq.s32.totalorder %s14, 0
      %p77 = por %p75, %p76
      %p78 = scmp.ne.s32.totalorder %s66, %s67
      %p79 = scmp.eq.s32.totalorder %s15, 1
      %p80 = por %p78, %p79
      %p82 = scmp.ne.s32.totalorder %s67, %s81
      %p83 = scmp.eq.s32.totalorder %s15, 0
      %p84 = por %p82, %p83
      %s85 = ssub.s32 %s9, %s16
      %p86 = scmp.eq.s32.totalorder %s85, 0
      %s88 = sadd.s32 %s87, 1
      %s89 = scalar_select %p86, %s87, %s88
      %p92 = pneg %p86
      %p93 = scmp.eq.s32.totalorder %s9, 1
      %p94 = por %p92, %p93
      %p95 = scmp.ne.s32.totalorder %s87, %s90
      %p96 = scmp.eq.s32.totalorder %s9, 0
      %p97 = por %p95, %p96
      %p98 = scmp.ne.s32.totalorder %s87, %s90
      %p99 = scmp.eq.s32.totalorder %s14, 1
      %p100 = por %p98, %p99
      %p101 = scmp.ne.s32.totalorder %s90, %s91
      %p102 = scmp.eq.s32.totalorder %s14, 0
      %p103 = por %p101, %p102
      %p104 = scmp.ne.s32.totalorder %s90, %s91
      %p105 = scmp.eq.s32.totalorder %s15, 1
      %p106 = por %p104, %p105
      %p108 = scmp.ne.s32.totalorder %s91, %s107
      %p109 = scmp.eq.s32.totalorder %s15, 0
      %p110 = por %p108, %p109
      %p111 = scmp.le.s32.totalorder 1, %s9
      %p112 = scmp.lt.s32.totalorder %s9, 3
      %p113 = pnand %p111, %p112
      %p114 = pneg %p113
      // Predicated region
      $region9: #{video_autoencoder_forward.9} parent=5 // pred_check
        _
      $region10: #{video_autoencoder_forward.9} parent=5 // pred_check_branch
        %116 = sbr.rel (%p113) target = $region12
      $region11: #{video_autoencoder_forward.9} parent=5 // pred_region
        %s117 = ssub.s32 %s9, 1
        // Predicated region
        $region13: #{video_autoencoder_forward.9} parent=11 // pred_check
          %p118 = pneg %p30
        $region14: #{video_autoencoder_forward.9} parent=11 // pred_check_branch
          %120 = sbr.rel (%p118) target = $region16
        $region15: #{video_autoencoder_forward.9} parent=11 // pred_region
          _
        $region16: #{video_autoencoder_forward.9} parent=11 // pred_fallthru
          _
        // Predicated region
        $region17: #{video_autoencoder_forward.9} parent=11 // pred_check
          %p121 = pneg %p77
        $region18: #{video_autoencoder_forward.9} parent=11 // pred_check_branch
          %123 = sbr.rel (%p121) target = $region20
        $region19: #{video_autoencoder_forward.9} parent=11 // pred_region
          _
        $region20: #{video_autoencoder_forward.9} parent=11 // pred_fallthru
          _
      $region12: #{video_autoencoder_forward.9} parent=5 // pred_fallthru
        _
      %p124 = scmp.lt.s32.totalorder %s9, 2
      // Predicated region
      $region21: #{video_autoencoder_forward.9} parent=5 // pred_check
        %p125 = pneg %p124
      $region22: #{video_autoencoder_forward.9} parent=5 // pred_check_branch
        %127 = sbr.rel (%p125) target = $region24
      $region23: #{video_autoencoder_forward.9} parent=5 // pred_region
        // Predicated region
        $region25: #{video_autoencoder_forward.9} parent=23 // pred_check
          %p128 = pneg %p50
        $region26: #{video_autoencoder_forward.9} parent=23 // pred_check_branch
          %130 = sbr.rel (%p128) target = $region28
        $region27: #{video_autoencoder_forward.9} parent=23 // pred_region
          %s131 = sand.u32 %s40, 1
          %s132 = sand.u32 %s40, 1
          %s133 = smul.addr %s132, 224
          %s134 = scalar_lea.vmem [#allocation2], %s133
          %s135 = smul.u32 4, %s9
          %s136 = smul.addr %s135, 4
          %s137 = scalar_lea.vmem %s1, %s136
          // Predicated region
          $region29: #{video_autoencoder_forward.9} parent=27 // pred_check
            _
          $region30: #{video_autoencoder_forward.9} parent=27 // pred_check_branch
            %139 = sbr.rel (0) target = $region32
          $region31: #{video_autoencoder_forward.9} parent=27 // pred_region
            // Predicated region
            $region33: #{video_autoencoder_forward.9} parent=31 // pred_check
              _
            $region34: #{video_autoencoder_forward.9} parent=31 // pred_check_branch
              %141 = sbr.rel (0) target = $region36
            $region35: #{video_autoencoder_forward.9} parent=31 // pred_region
              loop: start=0, step=1, limit=1
              $region37: #{video_autoencoder_forward.9} parent=35 // loop_pre_header
                _
              $region38: #{video_autoencoder_forward.9} parent=35 // loop_header
                %s143 = sphi 0, %s147
                %p144 = scmp.ge.s32.totalorder %s143, 1
                %s148 = sphi %s137, %s137
                %s149 = sphi %s134, %s134
              $region39: #{video_autoencoder_forward.9} parent=35 // loop_header_branch
                %146 = sbr.rel (%p144) target = $region43
              $region40: #{video_autoencoder_forward.9} parent=35 // loop_body
                %v150 = vld [vmem:[%s148] sm:$0xff]
                %151 = vst [vmem:[%s149] sm:$0xff] %v150
                %v152 = vld [vmem:[%s148 + $0x8] sm:$0xff]
                %153 = vst [vmem:[%s149 + $0x8] sm:$0xff] %v152
                %v154 = vld [vmem:[%s148 + $0x20] sm:$0xff]
                %155 = vst [vmem:[%s149 + $0x10] sm:$0xff] %v154
                %v156 = vld [vmem:[%s148 + $0x28] sm:$0xff]
                %157 = vst [vmem:[%s149 + $0x18] sm:$0xff] %v156
                %v158 = vld [vmem:[%s148 + $0x40] sm:$0xff]
                %159 = vst [vmem:[%s149 + $0x20] sm:$0xff] %v158
                %v160 = vld [vmem:[%s148 + $0x48] sm:$0xff]
                %161 = vst [vmem:[%s149 + $0x28] sm:$0xff] %v160
                %v162 = vld [vmem:[%s148 + $0x60] sm:$0xff]
                %163 = vst [vmem:[%s149 + $0x30] sm:$0xff] %v162
                %v164 = vld [vmem:[%s148 + $0x68] sm:$0xff]
                %165 = vst [vmem:[%s149 + $0x38] sm:$0xff] %v164
                %v166 = vld [vmem:[%s148 + $0x80] sm:$0xff]
                %167 = vst [vmem:[%s149 + $0x40] sm:$0xff] %v166
                %v168 = vld [vmem:[%s148 + $0x88] sm:$0xff]
                %169 = vst [vmem:[%s149 + $0x48] sm:$0xff] %v168
                %v170 = vld [vmem:[%s148 + $0xa0] sm:$0xff]
                %171 = vst [vmem:[%s149 + $0x50] sm:$0xff] %v170
                %v172 = vld [vmem:[%s148 + $0xa8] sm:$0xff]
                %173 = vst [vmem:[%s149 + $0x58] sm:$0xff] %v172
                %v174 = vld [vmem:[%s148 + $0xc0] sm:$0xff]
                %175 = vst [vmem:[%s149 + $0x60] sm:$0xff] %v174
                %v176 = vld [vmem:[%s148 + $0xc8] sm:$0xff]
                %177 = vst [vmem:[%s149 + $0x68] sm:$0xff] %v176
                %v178 = vld [vmem:[%s148 + $0xe0] sm:$0xff]
                %179 = vst [vmem:[%s149 + $0x70] sm:$0xff] %v178
                %v180 = vld [vmem:[%s148 + $0xe8] sm:$0xff]
                %181 = vst [vmem:[%s149 + $0x78] sm:$0xff] %v180
                %v182 = vld [vmem:[%s148 + $0x100] sm:$0xff]
                %183 = vst [vmem:[%s149 + $0x80] sm:$0xff] %v182
                %v184 = vld [vmem:[%s148 + $0x108] sm:$0xff]
                %185 = vst [vmem:[%s149 + $0x88] sm:$0xff] %v184
                %v186 = vld [vmem:[%s148 + $0x120] sm:$0xff]
                %187 = vst [vmem:[%s149 + $0x90] sm:$0xff] %v186
                %v188 = vld [vmem:[%s148 + $0x128] sm:$0xff]
                %189 = vst [vmem:[%s149 + $0x98] sm:$0xff] %v188
                %v190 = vld [vmem:[%s148 + $0x140] sm:$0xff]
                %191 = vst [vmem:[%s149 + $0xa0] sm:$0xff] %v190
                %v192 = vld [vmem:[%s148 + $0x148] sm:$0xff]
                %193 = vst [vmem:[%s149 + $0xa8] sm:$0xff] %v192
                %v194 = vld [vmem:[%s148 + $0x160] sm:$0xff]
                %195 = vst [vmem:[%s149 + $0xb0] sm:$0xff] %v194
                %v196 = vld [vmem:[%s148 + $0x168] sm:$0xff]
                %197 = vst [vmem:[%s149 + $0xb8] sm:$0xff] %v196
                %v198 = vld [vmem:[%s148 + $0x180] sm:$0xff]
                %199 = vst [vmem:[%s149 + $0xc0] sm:$0xff] %v198
                %v200 = vld [vmem:[%s148 + $0x188] sm:$0xff]
                %201 = vst [vmem:[%s149 + $0xc8] sm:$0xff] %v200
                %v202 = vld [vmem:[%s148 + $0x1a0] sm:$0xff]
                %203 = vst [vmem:[%s149 + $0xd0] sm:$0xff] %v202
                %v204 = vld [vmem:[%s148 + $0x1a8] sm:$0xff]
                %205 = vst [vmem:[%s149 + $0xd8] sm:$0xff] %v204
              $region41: #{video_autoencoder_forward.9} parent=35 // loop_footer
                %s147 = sadd.s32 1, %s143
              $region42: #{video_autoencoder_forward.9} parent=35 // loop_footer_branch
                %142 = sbr.rel target = $region38
              $region43: #{video_autoencoder_forward.9} parent=35 // loop_exit
                _
            $region36: #{video_autoencoder_forward.9} parent=31 // pred_fallthru
              _
            // Predicated region
            $region44: #{video_autoencoder_forward.9} parent=31 // pred_check
              _
            $region45: #{video_autoencoder_forward.9} parent=31 // pred_check_branch
              %207 = sbr.rel target = $region47
            $region46: #{video_autoencoder_forward.9} parent=31 // pred_region
              _
            $region47: #{video_autoencoder_forward.9} parent=31 // pred_fallthru
              _
          $region32: #{video_autoencoder_forward.9} parent=27 // pred_fallthru
            _
          %208 = vnop
        $region28: #{video_autoencoder_forward.9} parent=23 // pred_fallthru
          _
      $region24: #{video_autoencoder_forward.9} parent=5 // pred_fallthru
        _
      %p209 = scmp.le.s32.totalorder 1, %s9
      %p210 = scmp.lt.s32.totalorder %s9, 3
      %p211 = pnand %p209, %p210
      %p212 = pneg %p211
      // Predicated region
      $region48: #{video_autoencoder_forward.9} parent=5 // pred_check
        _
      $region49: #{video_autoencoder_forward.9} parent=5 // pred_check_branch
        %214 = sbr.rel (%p211) target = $region51
      $region50: #{video_autoencoder_forward.9} parent=5 // pred_region
        %s215 = ssub.s32 %s9, 1
        %s216 = sand.u32 %s43, 1
        %s217 = sand.u32 %s43, 1
        %s218 = smul.addr %s217, 224
        %s219 = scalar_lea.vmem [#allocation2], %s218
        // Predicated region
        $region52: #{video_autoencoder_forward.9} parent=50 // pred_check
          %p220 = pneg %p56
        $region53: #{video_autoencoder_forward.9} parent=50 // pred_check_branch
          %222 = sbr.rel (%p220) target = $region55
        $region54: #{video_autoencoder_forward.9} parent=50 // pred_region
          _
        $region55: #{video_autoencoder_forward.9} parent=50 // pred_fallthru
          _
        %p223 = pneg %p30
        %p224 = pneg %p27
        %s225 = sand.u32 %s43, 1
        %s226 = sand.u32 %s43, 1
        %s227 = smul.addr %s226, 224
        %s228 = scalar_lea.vmem [#allocation2], %s227
        %p229 = pneg %p56
        %p230 = pneg %p53
        %p231 = pneg %p77
        %p232 = pneg %p74
        %p233 = pneg %p103
        %p234 = pneg %p100
        %s235 = sand.u32 %s90, 1
        %s236 = sand.u32 %s90, 1
        %s237 = smul.addr %s236, 96
        %s238 = scalar_lea.vmem [#allocation3], %s237
        %s239 = smul.u32 4, %s14
        %s240 = smul.u32 4, %s14
        %v242 = vld [vmem:[%s0] sm:$0xf]
        %v243 = vld [vmem:[%s0 + $0x4] sm:$0xf]
        %v244 = vld [vmem:[%s0 + $0x8] sm:$0xf]
        %v245 = vld [vmem:[%s219] sm:$0xff]
        %v246 = vld [vmem:[%s219 + $0x8] sm:$0xff]
        %v247 = vld [vmem:[%s219 + $0x10] sm:$0xff]
        %v248 = vld [vmem:[%s219 + $0x18] sm:$0xff]
        %v249 = vld [vmem:[%s219 + $0x20] sm:$0xff]
        %v250 = vld [vmem:[%s219 + $0x28] sm:$0xff]
        %v251 = vld [vmem:[%s219 + $0x30] sm:$0xff]
        %v252 = vld [vmem:[%s219 + $0x38] sm:$0xff]
        %v253 = vld [vmem:[%s219 + $0x40] sm:$0xff]
        %v254 = vld [vmem:[%s219 + $0x48] sm:$0xff]
        %v255 = vld [vmem:[%s219 + $0x50] sm:$0xff]
        %v256 = vld [vmem:[%s219 + $0x58] sm:$0xff]
        %v257 = vld [vmem:[%s219 + $0x60] sm:$0xff]
        %v258 = vld [vmem:[%s219 + $0x68] sm:$0xff]
        %v259 = vld [vmem:[%s219 + $0x70] sm:$0xff]
        %v260 = vld [vmem:[%s219 + $0x78] sm:$0xff]
        %v261 = vld [vmem:[%s219 + $0x80] sm:$0xff]
        %v262 = vld [vmem:[%s219 + $0x88] sm:$0xff]
        %v263 = vld [vmem:[%s219 + $0x90] sm:$0xff]
        %v264 = vld [vmem:[%s219 + $0x98] sm:$0xff]
        %v265 = vld [vmem:[%s219 + $0xa0] sm:$0xff]
        %v266 = vld [vmem:[%s219 + $0xa8] sm:$0xff]
        %v267 = vld [vmem:[%s219 + $0xb0] sm:$0xff]
        %v268 = vld [vmem:[%s219 + $0xb8] sm:$0xff]
        %v269 = vld [vmem:[%s219 + $0xc0] sm:$0xff]
        %v270 = vld [vmem:[%s219 + $0xc8] sm:$0xff]
        %v271 = vld [vmem:[%s219 + $0xd0] sm:$0x33]
        %v272 = vld [vmem:[%s219 + $0xd8] sm:$0x33]
        %v273 = vld [vmem:[%s2] sm:$0xff]
        %v274 = vld [vmem:[%s2 + $0x8] sm:$0xff]
        %v275 = vld [vmem:[%s2 + $0x10] sm:$0xff]
        %277 = vset.pattern.permute.xlu0 0
        %278 = vperm.xlu0 %277, %v273
        %v279 = vpop.permute.xlu0 %278
        %282 = vset.pattern.permute.xlu0 0
        %283 = vperm.xlu0 %282, %v274
        %v284 = vpop.permute.xlu0 %283
        %287 = vset.pattern.permute.xlu0 0
        %288 = vperm.xlu0 %287, %v275
        %v289 = vpop.permute.xlu0 %288
        %v294 = vunpack.c.l.b16 %v242
        %v295 = vunpack.c.l.b16 %v243
        %v296 = vunpack.c.l.b16 %v244
        %v297 = vpack.c.b16 %v295, %v294
        %v298 = vpack.c.b16 %v296, %v296
        %v327 = vunpack.c.l.b16 %v245
        %v328 = vunpack.c.h.b16 %v245
        %v329 = vunpack.c.l.b16 %v246
        %v330 = vunpack.c.h.b16 %v246
        %v331 = vunpack.c.l.b16 %v247
        %v332 = vunpack.c.h.b16 %v247
        %v333 = vunpack.c.l.b16 %v248
        %v334 = vunpack.c.h.b16 %v248
        %v335 = vunpack.c.l.b16 %v249
        %v336 = vunpack.c.h.b16 %v249
        %v337 = vunpack.c.l.b16 %v250
        %v338 = vunpack.c.h.b16 %v250
        %v339 = vunpack.c.l.b16 %v251
        %v340 = vunpack.c.h.b16 %v251
        %v341 = vunpack.c.l.b16 %v252
        %v342 = vunpack.c.h.b16 %v252
        %v343 = vunpack.c.l.b16 %v253
        %v344 = vunpack.c.h.b16 %v253
        %v345 = vunpack.c.l.b16 %v254
        %v346 = vunpack.c.h.b16 %v254
        %v347 = vunpack.c.l.b16 %v255
        %v348 = vunpack.c.h.b16 %v255
        %v349 = vunpack.c.l.b16 %v256
        %v350 = vunpack.c.h.b16 %v256
        %v351 = vunpack.c.l.b16 %v257
        %v352 = vunpack.c.h.b16 %v257
        %v353 = vunpack.c.l.b16 %v258
        %v354 = vunpack.c.h.b16 %v258
        %v355 = vunpack.c.l.b16 %v259
        %v356 = vunpack.c.h.b16 %v259
        %v357 = vunpack.c.l.b16 %v260
        %v358 = vunpack.c.h.b16 %v260
        %v359 = vunpack.c.l.b16 %v261
        %v360 = vunpack.c.h.b16 %v261
        %v361 = vunpack.c.l.b16 %v262
        %v362 = vunpack.c.h.b16 %v262
        %v363 = vunpack.c.l.b16 %v263
        %v364 = vunpack.c.h.b16 %v263
        %v365 = vunpack.c.l.b16 %v264
        %v366 = vunpack.c.h.b16 %v264
        %v367 = vunpack.c.l.b16 %v265
        %v368 = vunpack.c.h.b16 %v265
        %v369 = vunpack.c.l.b16 %v266
        %v370 = vunpack.c.h.b16 %v266
        %v371 = vunpack.c.l.b16 %v267
        %v372 = vunpack.c.h.b16 %v267
        %v373 = vunpack.c.l.b16 %v268
        %v374 = vunpack.c.h.b16 %v268
        %v375 = vunpack.c.l.b16 %v269
        %v376 = vunpack.c.h.b16 %v269
        %v377 = vunpack.c.l.b16 %v270
        %v378 = vunpack.c.h.b16 %v270
        %v379 = vunpack.c.l.b16 %v271
        %v380 = vunpack.c.h.b16 %v271
        %v381 = vunpack.c.l.b16 %v272
        %v382 = vunpack.c.h.b16 %v272
        %v383 = vpack.c.b16 %v331, %v327
        %v384 = vpack.c.b16 %v332, %v328
        %v385 = vpack.c.b16 %v333, %v329
        %v386 = vpack.c.b16 %v334, %v330
        %v387 = vpack.c.b16 %v339, %v335
        %v388 = vpack.c.b16 %v340, %v336
        %v389 = vpack.c.b16 %v341, %v337
        %v390 = vpack.c.b16 %v342, %v338
        %v391 = vpack.c.b16 %v347, %v343
        %v392 = vpack.c.b16 %v348, %v344
        %v393 = vpack.c.b16 %v349, %v345
        %v394 = vpack.c.b16 %v350, %v346
        %v395 = vpack.c.b16 %v355, %v351
        %v396 = vpack.c.b16 %v356, %v352
        %v397 = vpack.c.b16 %v357, %v353
        %v398 = vpack.c.b16 %v358, %v354
        %v399 = vpack.c.b16 %v363, %v359
        %v400 = vpack.c.b16 %v364, %v360
        %v401 = vpack.c.b16 %v365, %v361
        %v402 = vpack.c.b16 %v366, %v362
        %v403 = vpack.c.b16 %v371, %v367
        %v404 = vpack.c.b16 %v372, %v368
        %v405 = vpack.c.b16 %v373, %v369
        %v406 = vpack.c.b16 %v374, %v370
        %v407 = vpack.c.b16 %v379, %v375
        %v408 = vpack.c.b16 %v380, %v376
        %v409 = vpack.c.b16 %v381, %v377
        %v410 = vpack.c.b16 %v382, %v378
        %vm435 = vcmask 883712
        %v437 = vsel %vm435, %v297, 0
        %v440 = vsel %vm435, %v298, 0
        %vm442 = vcmask 1045504
        %v444 = vsel %vm442, %v407, 0
        %v447 = vsel %vm442, %v408, 0
        %v450 = vsel %vm442, %v409, 0
        %v453 = vsel %vm442, %v410, 0
        %455 = vmatprep.subr.bf16.mxu0 %v384
        %456 = vmatpush1.bf16.msra.mxu0 %v383
        %457 = vmatprep.subr.bf16.mxu0 %v388
        %458 = vmatpush1.bf16.msra.mxu0 %v387
        %459 = vmatprep.subr.bf16.mxu0 %v392
        %460 = vmatpush1.bf16.msra.mxu0 %v391
        %461 = vmatprep.subr.bf16.mxu0 %v396
        %462 = vmatpush1.bf16.msra.mxu0 %v395
        %463 = vmatprep.subr.bf16.mxu0 %v400
        %464 = vmatpush1.bf16.msra.mxu0 %v399
        %465 = vmatprep.subr.bf16.mxu0 %v404
        %466 = vmatpush1.bf16.msra.mxu0 %v403
        %467 = vmatprep.subr.bf16.mxu0 %v447
        %468 = vmatpush1.bf16.msra.mxu0 %v444
        %469 = vmatprep.subr.bf16.mxu0 0
        %470 = vmatpush1.bf16.msra.mxu0 0
        %471 = vmatprep.subr.bf16.mxu0 0
        %472 = vmatpush1.bf16.msra.mxu0 0
        %473 = vmatprep.subr.bf16.mxu0 0
        %474 = vmatpush1.bf16.msra.mxu0 0
        %475 = vmatprep.subr.bf16.mxu0 0
        %476 = vmatpush1.bf16.msra.mxu0 0
        %477 = vmatprep.subr.bf16.mxu0 0
        %478 = vmatpush1.bf16.msra.mxu0 0
        %479 = vmatprep.subr.bf16.mxu0 0
        %480 = vmatpush1.bf16.msra.mxu0 0
        %481 = vmatprep.subr.bf16.mxu0 0
        %482 = vmatpush1.bf16.msra.mxu0 0
        %483 = vmatprep.subr.bf16.mxu0 0
        %484 = vmatpush1.bf16.msra.mxu0 0
        %485 = vmatprep.subr.bf16.mxu0 0
        %486 = vmatpush1.bf16.msra.mxu0 0
        %487 = vmatprep.mubr.bf16.mxu0 0
        %488 = vmatmul.mubr.bf16.gmra.mrb[0].mxu0 %v437
        %v489 = vpop.f32.mrb[0].mxu0
        %v490 = vadd.f32 %v279, %v489
        %v491 = vpop.f32.mrb[0].mxu0
        %v492 = vadd.f32 %v279, %v491
        %v493 = vpop.f32.mrb[0].mxu0
        %v494 = vadd.f32 %v284, %v493
        %v495 = vpop.f32.mrb[0].mxu0
        %v496 = vadd.f32 %v284, %v495
        %497 = vmatprep.mubr.bf16.mxu0 0
        %498 = vmatmul.mubr.bf16.gmra.mrb[0].mxu0 %v440
        %v499 = vpop.f32.mrb[0].mxu0
        %v500 = vadd.f32 %v289, %v499
        %v501 = vpop.f32.mrb[0].mxu0
        %v502 = vadd.f32 %v289, %v501
        %v503 = vpop.f32.mrb[0].mxu0
        %v504 = vpop.f32.mrb[0].mxu0
        %505 = vdwg.mxu0
        %506 = vmatprep.subr.bf16.mxu0 %v386
        %507 = vmatpush1.bf16.msra.mxu0 %v385
        %508 = vmatprep.subr.bf16.mxu0 %v390
        %509 = vmatpush1.bf16.msra.mxu0 %v389
        %510 = vmatprep.subr.bf16.mxu0 %v394
        %511 = vmatpush1.bf16.msra.mxu0 %v393
        %512 = vmatprep.subr.bf16.mxu0 %v398
        %513 = vmatpush1.bf16.msra.mxu0 %v397
        %514 = vmatprep.subr.bf16.mxu0 %v402
        %515 = vmatpush1.bf16.msra.mxu0 %v401
        %516 = vmatprep.subr.bf16.mxu0 %v406
        %517 = vmatpush1.bf16.msra.mxu0 %v405
        %518 = vmatprep.subr.bf16.mxu0 %v453
        %519 = vmatpush1.bf16.msra.mxu0 %v450
        %520 = vmatprep.subr.bf16.mxu0 0
        %521 = vmatpush1.bf16.msra.mxu0 0
        %522 = vmatprep.subr.bf16.mxu0 0
        %523 = vmatpush1.bf16.msra.mxu0 0
        %524 = vmatprep.subr.bf16.mxu0 0
        %525 = vmatpush1.bf16.msra.mxu0 0
        %526 = vmatprep.subr.bf16.mxu0 0
        %527 = vmatpush1.bf16.msra.mxu0 0
        %528 = vmatprep.subr.bf16.mxu0 0
        %529 = vmatpush1.bf16.msra.mxu0 0
        %530 = vmatprep.subr.bf16.mxu0 0
        %531 = vmatpush1.bf16.msra.mxu0 0
        %532 = vmatprep.subr.bf16.mxu0 0
        %533 = vmatpush1.bf16.msra.mxu0 0
        %534 = vmatprep.subr.bf16.mxu0 0
        %535 = vmatpush1.bf16.msra.mxu0 0
        %536 = vmatprep.subr.bf16.mxu0 0
        %537 = vmatpush1.bf16.msra.mxu0 0
        %538 = vmatprep.mubr.bf16.mxu0 0
        %539 = vmatmul.mubr.bf16.gmra.mrb[0].mxu0 %v437
        %v540 = vpop.f32.mrb[0].mxu0
        %v541 = vadd.f32 %v279, %v540
        %v542 = vpop.f32.mrb[0].mxu0
        %v543 = vadd.f32 %v279, %v542
        %v544 = vpop.f32.mrb[0].mxu0
        %v545 = vadd.f32 %v284, %v544
        %v546 = vpop.f32.mrb[0].mxu0
        %v547 = vadd.f32 %v284, %v546
        %548 = vmatprep.mubr.bf16.mxu0 0
        %549 = vmatmul.mubr.bf16.gmra.mrb[0].mxu0 %v440
        %v550 = vpop.f32.mrb[0].mxu0
        %v551 = vadd.f32 %v289, %v550
        %v552 = vpop.f32.mrb[0].mxu0
        %v553 = vadd.f32 %v289, %v552
        %v554 = vpop.f32.mrb[0].mxu0
        %v555 = vpop.f32.mrb[0].mxu0
        %556 = vdwg.mxu0
        %v557 = vand.u32 2147483647, %v490
        %v558 = vand.u32 2147483647, %v492
        %v559 = vand.u32 2147483647, %v541
        %v560 = vand.u32 2147483647, %v543
        %v561 = vand.u32 2147483647, %v494
        %v562 = vand.u32 2147483647, %v496
        %v563 = vand.u32 2147483647, %v545
        %v564 = vand.u32 2147483647, %v547
        %v565 = vand.u32 2147483647, %v500
        %v566 = vand.u32 2147483647, %v502
        %v567 = vand.u32 2147483647, %v551
        %v568 = vand.u32 2147483647, %v553
        %v569 = vsub.f32 0.0, %v557
        %v570 = vsub.f32 0.0, %v558
        %v571 = vsub.f32 0.0, %v559
        %v572 = vsub.f32 0.0, %v560
        %v573 = vsub.f32 0.0, %v561
        %v574 = vsub.f32 0.0, %v562
        %v575 = vsub.f32 0.0, %v563
        %v576 = vsub.f32 0.0, %v564
        %v577 = vsub.f32 0.0, %v565
        %v578 = vsub.f32 0.0, %v566
        %v579 = vsub.f32 0.0, %v567
        %v580 = vsub.f32 0.0, %v568
        %v581 = vmul.f32 %v569, 1.442695
        %v582 = vpow.pop %v581
        %v583 = vmul.f32 %v570, 1.442695
        %v584 = vpow.pop %v583
        %v585 = vmul.f32 %v571, 1.442695
        %v586 = vpow.pop %v585
        %v587 = vmul.f32 %v572, 1.442695
        %v588 = vpow.pop %v587
        %v589 = vmul.f32 %v573, 1.442695
        %v590 = vpow.pop %v589
        %v591 = vmul.f32 %v574, 1.442695
        %v592 = vpow.pop %v591
        %v593 = vmul.f32 %v575, 1.442695
        %v594 = vpow.pop %v593
        %v595 = vmul.f32 %v576, 1.442695
        %v596 = vpow.pop %v595
        %v597 = vmul.f32 %v577, 1.442695
        %v598 = vpow.pop %v597
        %v599 = vmul.f32 %v578, 1.442695
        %v600 = vpow.pop %v599
        %v601 = vmul.f32 %v579, 1.442695
        %v602 = vpow.pop %v601
        %v603 = vmul.f32 %v580, 1.442695
        %v604 = vpow.pop %v603
        %vm605 = vcmp.ge.f32.partialorder %v490, 0.0
        %vm606 = vcmp.ge.f32.partialorder %v492, 0.0
        %vm607 = vcmp.ge.f32.partialorder %v541, 0.0
        %vm608 = vcmp.ge.f32.partialorder %v543, 0.0
        %vm609 = vcmp.ge.f32.partialorder %v494, 0.0
        %vm610 = vcmp.ge.f32.partialorder %v496, 0.0
        %vm611 = vcmp.ge.f32.partialorder %v545, 0.0
        %vm612 = vcmp.ge.f32.partialorder %v547, 0.0
        %vm613 = vcmp.ge.f32.partialorder %v500, 0.0
        %vm614 = vcmp.ge.f32.partialorder %v502, 0.0
        %vm615 = vcmp.ge.f32.partialorder %v551, 0.0
        %vm616 = vcmp.ge.f32.partialorder %v553, 0.0
        %v617 = vadd.f32 %v582, 1.0
        %v618 = vadd.f32 %v584, 1.0
        %v619 = vadd.f32 %v586, 1.0
        %v620 = vadd.f32 %v588, 1.0
        %v621 = vadd.f32 %v590, 1.0
        %v622 = vadd.f32 %v592, 1.0
        %v623 = vadd.f32 %v594, 1.0
        %v624 = vadd.f32 %v596, 1.0
        %v625 = vadd.f32 %v598, 1.0
        %v626 = vadd.f32 %v600, 1.0
        %v627 = vadd.f32 %v602, 1.0
        %v628 = vadd.f32 %v604, 1.0
        %v629 = vrcp.pop %v617
        %v630 = vmul.f32 1.0, %v629
        %v631 = vrcp.pop %v618
        %v632 = vmul.f32 1.0, %v631
        %v633 = vrcp.pop %v619
        %v634 = vmul.f32 1.0, %v633
        %v635 = vrcp.pop %v620
        %v636 = vmul.f32 1.0, %v635
        %v637 = vrcp.pop %v621
        %v638 = vmul.f32 1.0, %v637
        %v639 = vrcp.pop %v622
        %v640 = vmul.f32 1.0, %v639
        %v641 = vrcp.pop %v623
        %v642 = vmul.f32 1.0, %v641
        %v643 = vrcp.pop %v624
        %v644 = vmul.f32 1.0, %v643
        %v645 = vrcp.pop %v625
        %v646 = vmul.f32 1.0, %v645
        %v647 = vrcp.pop %v626
        %v648 = vmul.f32 1.0, %v647
        %v649 = vrcp.pop %v627
        %v650 = vmul.f32 1.0, %v649
        %v651 = vrcp.pop %v628
        %v652 = vmul.f32 1.0, %v651
        %v653 = vmul.f32 %v582, %v629
        %v654 = vmul.f32 %v584, %v631
        %v655 = vmul.f32 %v586, %v633
        %v656 = vmul.f32 %v588, %v635
        %v657 = vmul.f32 %v590, %v637
        %v658 = vmul.f32 %v592, %v639
        %v659 = vmul.f32 %v594, %v641
        %v660 = vmul.f32 %v596, %v643
        %v661 = vmul.f32 %v598, %v645
        %v662 = vmul.f32 %v600, %v647
        %v663 = vmul.f32 %v602, %v649
        %v664 = vmul.f32 %v604, %v651
        %v665 = vsel %vm605, %v630, %v653
        %v666 = vsel %vm606, %v632, %v654
        %v667 = vsel %vm607, %v634, %v655
        %v668 = vsel %vm608, %v636, %v656
        %v669 = vsel %vm609, %v638, %v657
        %v670 = vsel %vm610, %v640, %v658
        %v671 = vsel %vm611, %v642, %v659
        %v672 = vsel %vm612, %v644, %v660
        %v673 = vsel %vm613, %v646, %v661
        %v674 = vsel %vm614, %v648, %v662
        %v675 = vsel %vm615, %v650, %v663
        %v676 = vsel %vm616, %v652, %v664
        %677 = vst [vmem:[%s238] sm:$0xff] %v665
        %678 = vst [vmem:[%s238 + $0x8] sm:$0xff] %v666
        %679 = vst [vmem:[%s238 + $0x10] sm:$0xff] %v667
        %680 = vst [vmem:[%s238 + $0x18] sm:$0xff] %v668
        %681 = vst [vmem:[%s238 + $0x20] sm:$0xff] %v669
        %682 = vst [vmem:[%s238 + $0x28] sm:$0xff] %v670
        %683 = vst [vmem:[%s238 + $0x30] sm:$0xff] %v671
        %684 = vst [vmem:[%s238 + $0x38] sm:$0xff] %v672
        %685 = vst [vmem:[%s238 + $0x40] sm:$0xff] %v673
        %686 = vst [vmem:[%s238 + $0x48] sm:$0xff] %v674
        %687 = vst [vmem:[%s238 + $0x50] sm:$0xff] %v675
        %688 = vst [vmem:[%s238 + $0x58] sm:$0xff] %v676
        %s689 = sand.u32 %s90, 1
        %s690 = sand.u32 %s90, 1
        %s691 = smul.addr %s690, 96
        %s692 = scalar_lea.vmem [#allocation3], %s691
        // Predicated region
        $region56: #{video_autoencoder_forward.9} parent=50 // pred_check
          %p693 = pneg %p100
        $region57: #{video_autoencoder_forward.9} parent=50 // pred_check_branch
          %695 = sbr.rel (%p693) target = $region59
        $region58: #{video_autoencoder_forward.9} parent=50 // pred_region
          %s696 = smul.u32 4, %s14
          %s697 = smul.addr %s696, 8
          %s698 = scalar_lea.vmem %s3, %s697
          // Predicated region
          $region60: #{video_autoencoder_forward.9} parent=58 // pred_check
            _
          $region61: #{video_autoencoder_forward.9} parent=58 // pred_check_branch
            %700 = sbr.rel (0) target = $region63
          $region62: #{video_autoencoder_forward.9} parent=58 // pred_region
            // Predicated region
            $region64: #{video_autoencoder_forward.9} parent=62 // pred_check
              _
            $region65: #{video_autoencoder_forward.9} parent=62 // pred_check_branch
              %702 = sbr.rel (0) target = $region67
            $region66: #{video_autoencoder_forward.9} parent=62 // pred_region
              loop: start=0, step=1, limit=1
              $region68: #{video_autoencoder_forward.9} parent=66 // loop_pre_header
                _
              $region69: #{video_autoencoder_forward.9} parent=66 // loop_header
                %s704 = sphi 0, %s708
                %p705 = scmp.ge.s32.totalorder %s704, 1
                %s709 = sphi %s692, %s692
                %s710 = sphi %s698, %s698
              $region70: #{video_autoencoder_forward.9} parent=66 // loop_header_branch
                %707 = sbr.rel (%p705) target = $region74
              $region71: #{video_autoencoder_forward.9} parent=66 // loop_body
                %v711 = vld [vmem:[%s709] sm:$0xff]
                %712 = vst [vmem:[%s710] sm:$0xff] %v711
                %v713 = vld [vmem:[%s709 + $0x8] sm:$0xff]
                %714 = vst [vmem:[%s710 + $0x8] sm:$0xff] %v713
                %v715 = vld [vmem:[%s709 + $0x10] sm:$0xff]
                %716 = vst [vmem:[%s710 + $0x10] sm:$0xff] %v715
                %v717 = vld [vmem:[%s709 + $0x18] sm:$0xff]
                %718 = vst [vmem:[%s710 + $0x18] sm:$0xff] %v717
                %v719 = vld [vmem:[%s709 + $0x20] sm:$0xff]
                %720 = vst [vmem:[%s710 + $0x40] sm:$0xff] %v719
                %v721 = vld [vmem:[%s709 + $0x28] sm:$0xff]
                %722 = vst [vmem:[%s710 + $0x48] sm:$0xff] %v721
                %v723 = vld [vmem:[%s709 + $0x30] sm:$0xff]
                %724 = vst [vmem:[%s710 + $0x50] sm:$0xff] %v723
                %v725 = vld [vmem:[%s709 + $0x38] sm:$0xff]
                %726 = vst [vmem:[%s710 + $0x58] sm:$0xff] %v725
                %v727 = vld [vmem:[%s709 + $0x40] sm:$0xff]
                %728 = vst [vmem:[%s710 + $0x80] sm:$0xff] %v727
                %v729 = vld [vmem:[%s709 + $0x48] sm:$0xff]
                %730 = vst [vmem:[%s710 + $0x88] sm:$0xff] %v729
                %v731 = vld [vmem:[%s709 + $0x50] sm:$0xff]
                %732 = vst [vmem:[%s710 + $0x90] sm:$0xff] %v731
                %v733 = vld [vmem:[%s709 + $0x58] sm:$0xff]
                %734 = vst [vmem:[%s710 + $0x98] sm:$0xff] %v733
              $region72: #{video_autoencoder_forward.9} parent=66 // loop_footer
                %s708 = sadd.s32 1, %s704
              $region73: #{video_autoencoder_forward.9} parent=66 // loop_footer_branch
                %703 = sbr.rel target = $region69
              $region74: #{video_autoencoder_forward.9} parent=66 // loop_exit
                _
            $region67: #{video_autoencoder_forward.9} parent=62 // pred_fallthru
              _
            // Predicated region
            $region75: #{video_autoencoder_forward.9} parent=62 // pred_check
              _
            $region76: #{video_autoencoder_forward.9} parent=62 // pred_check_branch
              %736 = sbr.rel target = $region78
            $region77: #{video_autoencoder_forward.9} parent=62 // pred_region
              _
            $region78: #{video_autoencoder_forward.9} parent=62 // pred_fallthru
              _
          $region63: #{video_autoencoder_forward.9} parent=58 // pred_fallthru
            _
          %737 = vnop
        $region59: #{video_autoencoder_forward.9} parent=50 // pred_fallthru
          _
      $region51: #{video_autoencoder_forward.9} parent=5 // pred_fallthru
        _
      %p738 = scmp.le.s32.totalorder 2, %s9
      // Predicated region
      $region79: #{video_autoencoder_forward.9} parent=5 // pred_check
        %p739 = pneg %p738
      $region80: #{video_autoencoder_forward.9} parent=5 // pred_check_branch
        %741 = sbr.rel (%p739) target = $region82
      $region81: #{video_autoencoder_forward.9} parent=5 // pred_region
        %s742 = ssub.s32 %s9, 2
        // Predicated region
        $region83: #{video_autoencoder_forward.9} parent=81 // pred_check
          %p743 = pneg %p106
        $region84: #{video_autoencoder_forward.9} parent=81 // pred_check_branch
          %745 = sbr.rel (%p743) target = $region86
        $region85: #{video_autoencoder_forward.9} parent=81 // pred_region
          %s746 = sand.u32 %s91, 1
          %s747 = sand.u32 %s91, 1
          %s748 = smul.addr %s747, 96
          %s749 = scalar_lea.vmem [#allocation3], %s748
        $region86: #{video_autoencoder_forward.9} parent=81 // pred_fallthru
          _
      $region82: #{video_autoencoder_forward.9} parent=5 // pred_fallthru
        _
    $region6: #{video_autoencoder_forward.9} parent=1 // loop_footer
      %s13 = sadd.s32 1, %s9
    $region7: #{video_autoencoder_forward.9} parent=1 // loop_footer_branch
      %8 = sbr.rel target = $region3
    $region8: #{video_autoencoder_forward.9} parent=1 // loop_exit
      _

</llo_original>
